<compile_context>
chip_gen: v5e
topology: v5e:2x2
jax: 0.10.0
libtpu: 0.0.40
codegen_flags: <defaults>
</compile_context>

<pallas_src>
import functools

import jax
import jax.numpy as jnp
import numpy as np
from jax import lax
from jax.experimental import pallas as pl
from jax.experimental.pallas import tpu as pltpu

D = 768            # hidden size fixed by the module (nn.Linear(768*3, 768))
INPUT_D = D * 3


def _round_up(x, m):
    return (x + m - 1) // m * m


def _tpu_generation():
    """Best-effort TPU generation sniff (5 / 6 / 7, else 0 = conservative)."""
    try:
        kind = jax.devices()[0].device_kind.lower()
    except Exception:
        return 0
    if "7" in kind:
        return 7
    if "v6" in kind:
        return 6
    if "v5" in kind:
        return 5
    return 0


def _pick_row_tile(n, gen):
    """Row tile (multiple of 8; f32 inputs -> 8-row sublane packing)."""
    if n <= 8:
        return n
    tn_max = 256 if gen in (6, 7) else 128      # v6e/v7x MXU is 2x256; v5e is 4x128
    if n >= 2 * tn_max:
        return tn_max
    if gen == 7:
        # Guarantee >=2 grid steps along the "parallel" N axis so both v7x
        # TensorCores get rows even for modest N.
        return min(_round_up(pl.cdiv(n, 2), 8), tn_max)
    return _round_up(min(n, tn_max), 8)


def _pick_seq_tile(s, tn, gen):
    """Seq tile sized so the double-buffered f32 enc tile fits a per-gen budget.
    Prefers a tile that divides S exactly (avoids the ragged-tail mask)."""
    budget = {5: 40 << 20, 6: 56 << 20, 7: 28 << 20}.get(gen, 16 << 20)
    per_s = 2 * tn * D * 4                      # 2 buffers x tn x D x 4B per unit of ts
    cap = max(8, (budget // per_s) // 8 * 8)
    if s <= cap:
        return s
    for ts in range(cap, 7, -8):                # largest multiple of 8 that divides S
        if s % ts == 0:
            return ts
    return cap


def _vmem_limit(gen):
    # v5e/v6e: 128 MiB physical; v7x: 64 MiB physical -> keep headroom.
    return {5: 64 << 20, 6: 96 << 20, 7: 48 << 20}.get(gen, 40 << 20)


def _coherence_kernel(enc_ref, ans_ref, w1a_ref, w1b_ref, w1c_ref,
                      b1_ref, w2_ref, b2_ref, out_ref, acc_ref,
                      *, seq_len, seq_tile):
    # enc_ref: [tn, ts, D] (input dtype, typically f32)   ans_ref: [tn, D]
    # w1{a,b,c}_ref: [D, D] bf16 (VMEM-resident: constant block index)
    # b1_ref: [1, D] f32   w2_ref: [1, D] f32   b2_ref: [1, 1] f32
    # acc_ref: [tn, D] f32 scratch (sum over the sequence axis)
    s_idx = pl.program_id(1)

    @pl.when(s_idx == 0)
    def _():
        acc_ref[...] = jnp.zeros_like(acc_ref)

    enc = enc_ref[...]                                             # [tn, ts, D]
    if seq_len % seq_tile:
        # Ragged last seq tile: zero the out-of-range positions so they do not
        # pollute the mean of valid rows (only traced when S % ts != 0).
        pos = s_idx * seq_tile + lax.broadcasted_iota(jnp.int32, (1, seq_tile, D), 1)
        enc = jnp.where(pos < seq_len, enc, 0.0)
    # Partial sum over the seq tile, accumulated in f32 (no f32 full-tile temp).
    acc_ref[...] += jnp.sum(enc, axis=1, dtype=jnp.float32)

    @pl.when(s_idx == pl.num_programs(1) - 1)
    def _():
        subj = acc_ref[...] * (1.0 / seq_len)                      # mean over seq, f32
        ans = ans_ref[...].astype(jnp.float32)                     # [tn, D]
        subj_bf = subj.astype(jnp.bfloat16)
        ans_bf = ans.astype(jnp.bfloat16)
        # Product in f32 then cast (better fidelity; also keeps v5e on its
        # native f32 VALU path). Matmuls are bf16 operands, f32 MXU accumulate.
        prod_bf = (subj * ans).astype(jnp.bfloat16)
        h = (jnp.dot(subj_bf, w1a_ref[...], preferred_element_type=jnp.float32)
             + jnp.dot(ans_bf, w1b_ref[...], preferred_element_type=jnp.float32)
             + jnp.dot(prod_bf, w1c_ref[...], preferred_element_type=jnp.float32)
             + b1_ref[...])                                        # [tn, D]
        h = jnp.maximum(h, 0.0)                                    # ReLU
        # TODO(synk): nn.Dropout() is identity in eval mode; training-mode dropout omitted.
        # D -> 1 head on the VPU/XLU (elementwise mul + lane reduce).
        out_ref[...] = jnp.sum(h * w2_ref[...], axis=-1, keepdims=True) + b2_ref[0, 0]


@functools.partial(jax.jit, static_argnames=("row_tile", "seq_tile"))
def coherence_scores(encoder_outputs, answer_state, w1, b1, w2, b2,
                     *, row_tile=None, seq_tile=None):
    """encoder_outputs: [N, S, D], answer_state: [N, D],
    w1: [3D, D], b1: [D], w2: [D, 1], b2: [1]  ->  scores [N, 1] f32."""
    n, s, d = encoder_outputs.shape
    assert d == D and answer_state.shape == (n, d)

    gen = _tpu_generation()
    tn = row_tile if row_tile is not None else _pick_row_tile(n, gen)
    ts = seq_tile if seq_tile is not None else _pick_seq_tile(s, tn, gen)
    grid_n = pl.cdiv(n, tn)
    grid_s = pl.cdiv(s, ts)
    n_pad = grid_n * tn      # only the tiny output is padded; inputs are NOT copied

    # Weights: bf16 (halves VMEM residency + one-time DMA); biases/head in f32.
    w1_bf = w1.astype(jnp.bfloat16)
    w1a, w1b, w1c = w1_bf[:D], w1_bf[D:2 * D], w1_bf[2 * D:]
    b1_2d = b1.reshape(1, D).astype(jnp.float32)
    w2_row = w2.reshape(1, D).astype(jnp.float32)
    b2_2d = b2.reshape(1, 1).astype(jnp.float32)

    kernel = functools.partial(_coherence_kernel, seq_len=s, seq_tile=ts)
    const = lambda i, si: (0, 0)     # weights/biases resident across the whole grid

    out = pl.pallas_call(
        kernel,
        out_shape=jax.ShapeDtypeStruct((n_pad, 1), jnp.float32),
        grid_spec=pltpu.PrefetchScalarGridSpec(
            num_scalar_prefetch=0,
            grid=(grid_n, grid_s),                       # rows (parallel), seq (reduction)
            in_specs=[
                pl.BlockSpec((tn, ts, D), lambda i, si: (i, si, 0)),   # enc tile (pipelined)
                pl.BlockSpec((tn, D), lambda i, si: (i, 0)),           # ans tile
                pl.BlockSpec((D, D), const),                           # W1 chunk a
                pl.BlockSpec((D, D), const),                           # W1 chunk b
                pl.BlockSpec((D, D), const),                           # W1 chunk c
                pl.BlockSpec((1, D), const),                           # b1
                pl.BlockSpec((1, D), const),                           # w2 row
                pl.BlockSpec((1, 1), const),                           # b2
            ],
            out_specs=pl.BlockSpec((tn, 1), lambda i, si: (i, 0)),
            scratch_shapes=[pltpu.VMEM((tn, D), jnp.float32)],         # seq-sum accumulator
        ),
        compiler_params=pltpu.CompilerParams(
            dimension_semantics=("parallel", "arbitrary"),
            vmem_limit_bytes=_vmem_limit(gen),
        ),
    )(encoder_outputs, answer_state, w1a, w1b, w1c, b1_2d, w2_row, b2_2d)
    return out[:n]


def compute_loss(match_scores, em_flags):
    """Mirrors CoherenceModel.compute_loss: for each positive prediction,
    CrossEntropy over [pos, neg...] with label 0, vectorized into one gather +
    log_softmax.
    TODO(synk): index construction uses host-side numpy (data-dependent), so
    this helper is eager glue and not jit-traceable."""
    scores = match_scores.reshape(-1)
    em = np.asarray(em_flags)
    pos = np.nonzero(em > 0)[0]
    neg = np.nonzero(em <= 0)[0]
    idx = np.concatenate(
        [pos[:, None], np.broadcast_to(neg[None, :], (len(pos), len(neg)))], axis=1)
    batch = scores[jnp.asarray(idx, dtype=jnp.int32)]          # [P, 1+len(neg)]
    logp = jax.nn.log_softmax(batch, axis=-1)
    return -logp[:, 0].mean()                                  # labels are all zeros


def _reference_scores(enc, ans, w1, b1, w2, b2):
    """Two references: bf16-matched (tight tol) and pure f32 (loose tol)."""
    subj = enc.astype(jnp.float32).mean(axis=1)
    feat = jnp.concatenate([subj, ans, subj * ans], axis=1)
    h_q = jnp.maximum(
        jnp.dot(feat.astype(jnp.bfloat16), w1.astype(jnp.bfloat16),
                preferred_element_type=jnp.float32) + b1, 0.0)
    ref_q = jnp.sum(h_q * w2.reshape(1, D), axis=-1, keepdims=True) + b2
    ref_f = jnp.maximum(feat @ w1 + b1, 0.0) @ w2 + b2
    return ref_q, ref_f


if __name__ == "__main__":
    key = jax.random.PRNGKey(0)
    (k_enc, k_ans, k_w1, k_b1, k_w2, k_b2, k_enc2, k_ans2) = jax.random.split(key, 8)

    # Deterministic synthetic parameters for sub_match_f ([in, out] layout).
    w1 = jax.random.normal(k_w1, (INPUT_D, D), dtype=jnp.float32) * 0.02
    b1 = jax.random.normal(k_b1, (D,), dtype=jnp.float32) * 0.02
    w2 = jax.random.normal(k_w2, (D, 1), dtype=jnp.float32) * 0.02
    b2 = jax.random.normal(k_b2, (1,), dtype=jnp.float32) * 0.02

    # --- Small demo shapes (predictions per example, encoder seq len) ---
    N, S = 8, 12
    encoder_outputs = jax.random.normal(k_enc, (N, S, D), dtype=jnp.float32)
    answer_state = jax.random.normal(k_ans, (N, D), dtype=jnp.float32)

    scores = jax.block_until_ready(
        coherence_scores(encoder_outputs, answer_state, w1, b1, w2, b2))
    assert scores.shape == (N, 1)
    ref_q, ref_f = _reference_scores(encoder_outputs, answer_state, w1, b1, w2, b2)
    assert jnp.allclose(scores, ref_q, atol=3e-3, rtol=3e-3)
    assert jnp.allclose(scores, ref_f, atol=5e-2, rtol=5e-2)

    # --- Exercise the tiled paths: multiple seq tiles with a ragged tail and a
    #     partial last row tile (N % tn != 0), all without wrapper-side padding.
    N2, S2 = 20, 20
    enc2 = jax.random.normal(k_enc2, (N2, S2, D), dtype=jnp.float32)
    ans2 = jax.random.normal(k_ans2, (N2, D), dtype=jnp.float32)
    scores2 = jax.block_until_ready(
        coherence_scores(enc2, ans2, w1, b1, w2, b2, row_tile=16, seq_tile=8))
    assert scores2.shape == (N2, 1)
    ref_q2, ref_f2 = _reference_scores(enc2, ans2, w1, b1, w2, b2)
    assert jnp.allclose(scores2, ref_q2, atol=3e-3, rtol=3e-3)
    assert jnp.allclose(scores2, ref_f2, atol=5e-2, rtol=5e-2)

    # Ranking loss over synthetic em flags (mix of correct / incorrect preds).
    em_flags = [1, 0, 0, 1, 0, 0, 0, 0]
    loss = jax.block_until_ready(compute_loss(scores, em_flags))
    assert loss.shape == ()
    assert bool(jnp.isfinite(loss))

    print("KERNEL_OK")
</pallas_src>

<mosaic_0001>
module attributes {stable_mosaic.version = 11 : i64} {
  func.func @_coherence_kernel(%arg0: i32, %arg1: i32, %arg2: memref<8x12x768xf32, #tpu.memory_space<vmem>>, %arg3: memref<8x768xf32, #tpu.memory_space<vmem>>, %arg4: memref<768x768xbf16, #tpu.memory_space<vmem>>, %arg5: memref<768x768xbf16, #tpu.memory_space<vmem>>, %arg6: memref<768x768xbf16, #tpu.memory_space<vmem>>, %arg7: memref<1x768xf32, #tpu.memory_space<vmem>>, %arg8: memref<1x768xf32, #tpu.memory_space<vmem>>, %arg9: memref<1x1xf32, #tpu.memory_space<vmem>>, %arg10: memref<8x1xf32, #tpu.memory_space<vmem>>, %arg11: memref<8x768xf32, #tpu.memory_space<vmem>>) attributes {dimension_semantics = [#tpu.dimension_semantics<parallel>, #tpu.dimension_semantics<arbitrary>], iteration_bounds = array<i64: 1, 1>, scalar_prefetch = 0 : i64, scratch_operands = 1 : i64, tpu.core_type = #tpu.core_type<tc>, window_params = [{transform_indices = @transform_0, window_bounds = array<i64: 8, 12, 768>}, {transform_indices = @transform_1, window_bounds = array<i64: 8, 768>}, {pipeline_mode = #tpu.pipeline_mode<synchronous>, transform_indices = @transform_2, window_bounds = array<i64: 768, 768>}, {pipeline_mode = #tpu.pipeline_mode<synchronous>, transform_indices = @transform_3, window_bounds = array<i64: 768, 768>}, {pipeline_mode = #tpu.pipeline_mode<synchronous>, transform_indices = @transform_4, window_bounds = array<i64: 768, 768>}, {pipeline_mode = #tpu.pipeline_mode<synchronous>, transform_indices = @transform_5, window_bounds = array<i64: 1, 768>}, {pipeline_mode = #tpu.pipeline_mode<synchronous>, transform_indices = @transform_6, window_bounds = array<i64: 1, 768>}, {pipeline_mode = #tpu.pipeline_mode<synchronous>, transform_indices = @transform_7, window_bounds = array<i64: 1, 1>}, {transform_indices = @transform_8, window_bounds = array<i64: 8, 1>}]} {
    %c0_i32 = arith.constant 0 : i32
    %0 = arith.cmpi eq, %arg1, %c0_i32 : i32
    %1 = arith.extui %0 : i1 to i32
    %c0_i32_0 = arith.constant 0 : i32
    %2 = arith.cmpi ne, %1, %c0_i32_0 : i32
    scf.if %2 {
      %cst_9 = arith.constant 0.000000e+00 : f32
      %11 = vector.broadcast %cst_9 : f32 to vector<8x768xf32>
      %c0_10 = arith.constant 0 : index
      %c0_11 = arith.constant 0 : index
      %12 = vector.load %arg11[%c0_10, %c0_11] : memref<8x768xf32, #tpu.memory_space<vmem>>, vector<8x768xf32>
      tpu.vector_store %arg11[%c0_10, %c0_11], %11 {strides = array<i32>} : memref<8x768xf32, #tpu.memory_space<vmem>>, vector<8x768xf32>,
    } else {
    }
    %c0 = arith.constant 0 : index
    %c0_1 = arith.constant 0 : index
    %c0_2 = arith.constant 0 : index
    %3 = vector.load %arg2[%c0, %c0_1, %c0_2] : memref<8x12x768xf32, #tpu.memory_space<vmem>>, vector<8x12x768xf32>
    %c0_3 = arith.constant 0 : index
    %c0_4 = arith.constant 0 : index
    %4 = vector.load %arg11[%c0_3, %c0_4] : memref<8x768xf32, #tpu.memory_space<vmem>>, vector<8x768xf32>
    %cst = arith.constant dense<0.000000e+00> : vector<8x768xf32>
    %5 = vector.multi_reduction <add>, %3, %cst [1] : vector<8x12x768xf32> to vector<8x768xf32>
    %6 = arith.addf %4, %5 : vector<8x768xf32>
    %c0_5 = arith.constant 0 : index
    %c0_6 = arith.constant 0 : index
    %7 = vector.load %arg11[%c0_5, %c0_6] : memref<8x768xf32, #tpu.memory_space<vmem>>, vector<8x768xf32>
    tpu.vector_store %arg11[%c0_5, %c0_6], %6 {strides = array<i32>} : memref<8x768xf32, #tpu.memory_space<vmem>>, vector<8x768xf32>,
    %c0_i32_7 = arith.constant 0 : i32
    %8 = arith.cmpi eq, %arg1, %c0_i32_7 : i32
    %9 = arith.extui %8 : i1 to i32
    %c0_i32_8 = arith.constant 0 : i32
    %10 = arith.cmpi ne, %9, %c0_i32_8 : i32
    scf.if %10 {
      %c0_9 = arith.constant 0 : index
      %c0_10 = arith.constant 0 : index
      %11 = vector.load %arg11[%c0_9, %c0_10] : memref<8x768xf32, #tpu.memory_space<vmem>>, vector<8x768xf32>
      %cst_11 = arith.constant 0.0833333358 : f32
      %12 = vector.broadcast %cst_11 : f32 to vector<8x768xf32>
      %13 = arith.mulf %11, %12 : vector<8x768xf32>
      %c0_12 = arith.constant 0 : index
      %c0_13 = arith.constant 0 : index
      %14 = vector.load %arg3[%c0_12, %c0_13] : memref<8x768xf32, #tpu.memory_space<vmem>>, vector<8x768xf32>
      %15 = arith.truncf %13 : vector<8x768xf32> to vector<8x768xbf16>
      %16 = arith.truncf %14 : vector<8x768xf32> to vector<8x768xbf16>
      %17 = arith.mulf %13, %14 : vector<8x768xf32>
      %18 = arith.truncf %17 : vector<8x768xf32> to vector<8x768xbf16>
      %c0_14 = arith.constant 0 : index
      %c0_15 = arith.constant 0 : index
      %19 = vector.load %arg4[%c0_14, %c0_15] : memref<768x768xbf16, #tpu.memory_space<vmem>>, vector<768x768xbf16>
      %cst_16 = arith.constant dense<0.000000e+00> : vector<8x768xf32>
      %20 = tpu.matmul %15, %19, %cst_16 {dimension_numbers = #tpu.dot_dimension_numbers<[1], [0], [0], [1], [0, 0, 1, 1], [], []>} : vector<8x768xbf16>, vector<768x768xbf16>, vector<8x768xf32> -> vector<8x768xf32>
      %c0_17 = arith.constant 0 : index
      %c0_18 = arith.constant 0 : index
      %21 = vector.load %arg5[%c0_17, %c0_18] : memref<768x768xbf16, #tpu.memory_space<vmem>>, vector<768x768xbf16>
      %cst_19 = arith.constant dense<0.000000e+00> : vector<8x768xf32>
      %22 = tpu.matmul %16, %21, %cst_19 {dimension_numbers = #tpu.dot_dimension_numbers<[1], [0], [0], [1], [0, 0, 1, 1], [], []>} : vector<8x768xbf16>, vector<768x768xbf16>, vector<8x768xf32> -> vector<8x768xf32>
      %23 = arith.addf %20, %22 : vector<8x768xf32>
      %c0_20 = arith.constant 0 : index
      %c0_21 = arith.constant 0 : index
      %24 = vector.load %arg6[%c0_20, %c0_21] : memref<768x768xbf16, #tpu.memory_space<vmem>>, vector<768x768xbf16>
      %cst_22 = arith.constant dense<0.000000e+00> : vector<8x768xf32>
      %25 = tpu.matmul %18, %24, %cst_22 {dimension_numbers = #tpu.dot_dimension_numbers<[1], [0], [0], [1], [0, 0, 1, 1], [], []>} : vector<8x768xbf16>, vector<768x768xbf16>, vector<8x768xf32> -> vector<8x768xf32>
      %26 = arith.addf %23, %25 : vector<8x768xf32>
      %c0_23 = arith.constant 0 : index
      %c0_24 = arith.constant 0 : index
      %27 = vector.load %arg7[%c0_23, %c0_24] : memref<1x768xf32, #tpu.memory_space<vmem>>, vector<1x768xf32>
      %28 = vector.broadcast %27 : vector<1x768xf32> to vector<8x768xf32>
      %29 = arith.addf %26, %28 : vector<8x768xf32>
      %cst_25 = arith.constant 0.000000e+00 : f32
      %30 = vector.broadcast %cst_25 : f32 to vector<8x768xf32>
      %31 = arith.maximumf %29, %30 : vector<8x768xf32>
      %c0_26 = arith.constant 0 : index
      %c0_27 = arith.constant 0 : index
      %32 = vector.load %arg8[%c0_26, %c0_27] : memref<1x768xf32, #tpu.memory_space<vmem>>, vector<1x768xf32>
      %33 = vector.broadcast %32 : vector<1x768xf32> to vector<8x768xf32>
      %34 = arith.mulf %31, %33 : vector<8x768xf32>
      %cst_28 = arith.constant dense<0.000000e+00> : vector<8xf32>
      %35 = vector.multi_reduction <add>, %34, %cst_28 [1] : vector<8x768xf32> to vector<8xf32>
      %36 = vector.shape_cast %35 : vector<8xf32> to vector<8x1xf32>
      %c0_29 = arith.constant 0 : index
      %c0_30 = arith.constant 0 : index
      %37 = vector.load %arg9[%c0_29, %c0_30] : memref<1x1xf32, #tpu.memory_space<vmem>>, vector<1x1xf32>
      %38 = vector.extract %37[0, 0] : f32 from vector<1x1xf32>
      %39 = vector.broadcast %38 : f32 to vector<8x1xf32>
      %40 = arith.addf %36, %39 : vector<8x1xf32>
      %c0_31 = arith.constant 0 : index
      %c0_32 = arith.constant 0 : index
      %41 = vector.load %arg10[%c0_31, %c0_32] : memref<8x1xf32, #tpu.memory_space<vmem>>, vector<8x1xf32>
      tpu.vector_store %arg10[%c0_31, %c0_32], %40 {strides = array<i32>} : memref<8x1xf32, #tpu.memory_space<vmem>>, vector<8x1xf32>,
    } else {
    }
    return
  }
  func.func @transform_0(%arg0: i32, %arg1: i32) -> (i32, i32, i32) {
    %c0_i32 = arith.constant 0 : i32
    %c0_i32_0 = arith.constant 0 : i32
    return %arg0, %arg1, %c0_i32 : i32, i32, i32
  }
  func.func @transform_1(%arg0: i32, %arg1: i32) -> (i32, i32) {
    %c0_i32 = arith.constant 0 : i32
    %c0_i32_0 = arith.constant 0 : i32
    return %arg0, %c0_i32 : i32, i32
  }
  func.func @transform_2(%arg0: i32, %arg1: i32) -> (i32, i32) {
    %c0_i32 = arith.constant 0 : i32
    %c0_i32_0 = arith.constant 0 : i32
    %c0_i32_1 = arith.constant 0 : i32
    return %c0_i32, %c0_i32_0 : i32, i32
  }
  func.func @transform_3(%arg0: i32, %arg1: i32) -> (i32, i32) {
    %c0_i32 = arith.constant 0 : i32
    %c0_i32_0 = arith.constant 0 : i32
    %c0_i32_1 = arith.constant 0 : i32
    return %c0_i32, %c0_i32_0 : i32, i32
  }
  func.func @transform_4(%arg0: i32, %arg1: i32) -> (i32, i32) {
    %c0_i32 = arith.constant 0 : i32
    %c0_i32_0 = arith.constant 0 : i32
    %c0_i32_1 = arith.constant 0 : i32
    return %c0_i32, %c0_i32_0 : i32, i32
  }
  func.func @transform_5(%arg0: i32, %arg1: i32) -> (i32, i32) {
    %c0_i32 = arith.constant 0 : i32
    %c0_i32_0 = arith.constant 0 : i32
    %c0_i32_1 = arith.constant 0 : i32
    return %c0_i32, %c0_i32_0 : i32, i32
  }
  func.func @transform_6(%arg0: i32, %arg1: i32) -> (i32, i32) {
    %c0_i32 = arith.constant 0 : i32
    %c0_i32_0 = arith.constant 0 : i32
    %c0_i32_1 = arith.constant 0 : i32
    return %c0_i32, %c0_i32_0 : i32, i32
  }
  func.func @transform_7(%arg0: i32, %arg1: i32) -> (i32, i32) {
    %c0_i32 = arith.constant 0 : i32
    %c0_i32_0 = arith.constant 0 : i32
    %c0_i32_1 = arith.constant 0 : i32
    return %c0_i32, %c0_i32_0 : i32, i32
  }
  func.func @transform_8(%arg0: i32, %arg1: i32) -> (i32, i32) {
    %c0_i32 = arith.constant 0 : i32
    %c0_i32_0 = arith.constant 0 : i32
    return %arg0, %c0_i32 : i32, i32
  }
}

</mosaic_0001>

<llo_original>
// kernel: coherence_scores.1
$region0: #{coherence_scores.1}
  #allocation0 [shape = 'u32[]', space=smem, size = 0x4, offset = 0x4, fixed_abs, tag = 'smem constant byte address 0x4 - core index']
  #allocation1 [shape = 'u32[72,128]{1,0:T(1,128)}', space=vmem, size = 0x9000, scoped, tag = 'internal scratch']
  #allocation2 [shape = 'f32[8,768]{1,0:T(8,128)}', space=vmem, size = 0x6000, scoped, tag = 'scratch operand']
  #allocation3 [shape = 'f32[1,1]{1,0:T(1,128)S(1)}', space=vmem, size = 0x200, scoped, tag = 'scoped memory for coherence_scores.1']
  %s0 = inlined_call_operand.vmem [shape: f32[8,12,768], index: 0, kind: input, shape index: {}]
  %s1 = inlined_call_operand.vmem [shape: f32[8,768], index: 1, kind: input, shape index: {}]
  %s2 = inlined_call_operand.vmem [shape: bf16[768,768], index: 2, kind: input, shape index: {}]
  %s3 = inlined_call_operand.vmem [shape: bf16[768,768], index: 3, kind: input, shape index: {}]
  %s4 = inlined_call_operand.vmem [shape: bf16[768,768], index: 4, kind: input, shape index: {}]
  %s5 = inlined_call_operand.vmem [shape: f32[1,768], index: 5, kind: input, shape index: {}]
  %s6 = inlined_call_operand.vmem [shape: f32[1,768], index: 6, kind: input, shape index: {}]
  %s7 = inlined_call_operand.<no memory space> [shape: f32[1,1], index: 7, kind: input, shape index: {}]
  %s8 = inlined_call_operand.vmem [shape: f32[8,1], index: 8, kind: output, shape index: {}]
  %s9 = sld [smem:[#allocation0]]
  $region50: #{coherence_scores.1} parent=0
    _
  %s11 = ssub.s32 1, %s9
  %s12 = scalar_select 0, %s11, %s9
  %v13 = vstv %s7
  %14 = vst [vmem:[#allocation3] sm:$0x1] %v13
  // Predicated region
  $region2: #{coherence_scores.1} parent=0 // pred_check
    _
  $region3: #{coherence_scores.1} parent=0 // pred_check_branch
    %16 = sbr.rel (0) target = $region5
  $region4: #{coherence_scores.1} parent=0 // pred_region
    _
  $region5: #{coherence_scores.1} parent=0 // pred_fallthru
    _
  // Predicated region
  $region6: #{coherence_scores.1} parent=0 // pred_check
    _
  $region7: #{coherence_scores.1} parent=0 // pred_check_branch
    %18 = sbr.rel (0) target = $region9
  $region8: #{coherence_scores.1} parent=0 // pred_region
    _
  $region9: #{coherence_scores.1} parent=0 // pred_fallthru
    _
  // Predicated region
  $region10: #{coherence_scores.1} parent=0 // pred_check
    _
  $region11: #{coherence_scores.1} parent=0 // pred_check_branch
    %20 = sbr.rel (0) target = $region13
  $region12: #{coherence_scores.1} parent=0 // pred_region
    _
  $region13: #{coherence_scores.1} parent=0 // pred_fallthru
    _
  // Predicated region
  $region14: #{coherence_scores.1} parent=0 // pred_check
    _
  $region15: #{coherence_scores.1} parent=0 // pred_check_branch
    %22 = sbr.rel (0) target = $region17
  $region16: #{coherence_scores.1} parent=0 // pred_region
    _
  $region17: #{coherence_scores.1} parent=0 // pred_fallthru
    _
  // Predicated region
  $region18: #{coherence_scores.1} parent=0 // pred_check
    _
  $region19: #{coherence_scores.1} parent=0 // pred_check_branch
    %24 = sbr.rel (0) target = $region21
  $region20: #{coherence_scores.1} parent=0 // pred_region
    _
  $region21: #{coherence_scores.1} parent=0 // pred_fallthru
    _
  // Predicated region
  $region22: #{coherence_scores.1} parent=0 // pred_check
    _
  $region23: #{coherence_scores.1} parent=0 // pred_check_branch
    %26 = sbr.rel (0) target = $region25
  $region24: #{coherence_scores.1} parent=0 // pred_region
    _
  $region25: #{coherence_scores.1} parent=0 // pred_fallthru
    _
  // Predicated region
  $region26: #{coherence_scores.1} parent=0 // pred_check
    _
  $region27: #{coherence_scores.1} parent=0 // pred_check_branch
    %28 = sbr.rel (0) target = $region29
  $region28: #{coherence_scores.1} parent=0 // pred_region
    _
  $region29: #{coherence_scores.1} parent=0 // pred_fallthru
    _
  // Predicated region
  $region30: #{coherence_scores.1} parent=0 // pred_check
    _
  $region31: #{coherence_scores.1} parent=0 // pred_check_branch
    %30 = sbr.rel (0) target = $region33
  $region32: #{coherence_scores.1} parent=0 // pred_region
    _
  $region33: #{coherence_scores.1} parent=0 // pred_fallthru
    _
  %p31 = scmp.eq.s32.totalorder 0, 0
  // Predicated region
  $region34: #{coherence_scores.1} parent=0 // pred_check
    %p32 = pneg %p31
  $region35: #{coherence_scores.1} parent=0 // pred_check_branch
    %34 = sbr.rel (%p32) target = $region37
  $region36: #{coherence_scores.1} parent=0 // pred_region
    %35 = vst [vmem:[#allocation2] sm:$0xff] 0.0
    %36 = vst [vmem:[#allocation2 + $0x8] sm:$0xff] 0.0
    %37 = vst [vmem:[#allocation2 + $0x10] sm:$0xff] 0.0
    %38 = vst [vmem:[#allocation2 + $0x18] sm:$0xff] 0.0
    %39 = vst [vmem:[#allocation2 + $0x20] sm:$0xff] 0.0
    %40 = vst [vmem:[#allocation2 + $0x28] sm:$0xff] 0.0
  $region37: #{coherence_scores.1} parent=0 // pred_fallthru
    _
  %v41 = vld [vmem:[%s0] sm:$0xff]
  %v42 = vld [vmem:[%s0 + $0x8] sm:$0xff]
  %v43 = vld [vmem:[%s0 + $0x10] sm:$0xff]
  %v44 = vld [vmem:[%s0 + $0x18] sm:$0xff]
  %v45 = vld [vmem:[%s0 + $0x20] sm:$0xff]
  %v46 = vld [vmem:[%s0 + $0x28] sm:$0xff]
  %v47 = vld [vmem:[%s0 + $0x30] sm:$0xf]
  %v48 = vld [vmem:[%s0 + $0x38] sm:$0xf]
  %v49 = vld [vmem:[%s0 + $0x40] sm:$0xf]
  %v50 = vld [vmem:[%s0 + $0x48] sm:$0xf]
  %v51 = vld [vmem:[%s0 + $0x50] sm:$0xf]
  %v52 = vld [vmem:[%s0 + $0x58] sm:$0xf]
  %v53 = vld [vmem:[%s0 + $0x60] sm:$0xff]
  %v54 = vld [vmem:[%s0 + $0x68] sm:$0xff]
  %v55 = vld [vmem:[%s0 + $0x70] sm:$0xff]
  %v56 = vld [vmem:[%s0 + $0x78] sm:$0xff]
  %v57 = vld [vmem:[%s0 + $0x80] sm:$0xff]
  %v58 = vld [vmem:[%s0 + $0x88] sm:$0xff]
  %v59 = vld [vmem:[%s0 + $0x90] sm:$0xf]
  %v60 = vld [vmem:[%s0 + $0x98] sm:$0xf]
  %v61 = vld [vmem:[%s0 + $0xa0] sm:$0xf]
  %v62 = vld [vmem:[%s0 + $0xa8] sm:$0xf]
  %v63 = vld [vmem:[%s0 + $0xb0] sm:$0xf]
  %v64 = vld [vmem:[%s0 + $0xb8] sm:$0xf]
  %v65 = vld [vmem:[%s0 + $0xc0] sm:$0xff]
  %v66 = vld [vmem:[%s0 + $0xc8] sm:$0xff]
  %v67 = vld [vmem:[%s0 + $0xd0] sm:$0xff]
  %v68 = vld [vmem:[%s0 + $0xd8] sm:$0xff]
  %v69 = vld [vmem:[%s0 + $0xe0] sm:$0xff]
  %v70 = vld [vmem:[%s0 + $0xe8] sm:$0xff]
  %v71 = vld [vmem:[%s0 + $0xf0] sm:$0xf]
  %v72 = vld [vmem:[%s0 + $0xf8] sm:$0xf]
  %v73 = vld [vmem:[%s0 + $0x100] sm:$0xf]
  %v74 = vld [vmem:[%s0 + $0x108] sm:$0xf]
  %v75 = vld [vmem:[%s0 + $0x110] sm:$0xf]
  %v76 = vld [vmem:[%s0 + $0x118] sm:$0xf]
  %v77 = vld [vmem:[%s0 + $0x120] sm:$0xff]
  %v78 = vld [vmem:[%s0 + $0x128] sm:$0xff]
  %v79 = vld [vmem:[%s0 + $0x130] sm:$0xff]
  %v80 = vld [vmem:[%s0 + $0x138] sm:$0xff]
  %v81 = vld [vmem:[%s0 + $0x140] sm:$0xff]
  %v82 = vld [vmem:[%s0 + $0x148] sm:$0xff]
  %v83 = vld [vmem:[%s0 + $0x150] sm:$0xf]
  %v84 = vld [vmem:[%s0 + $0x158] sm:$0xf]
  %v85 = vld [vmem:[%s0 + $0x160] sm:$0xf]
  %v86 = vld [vmem:[%s0 + $0x168] sm:$0xf]
  %v87 = vld [vmem:[%s0 + $0x170] sm:$0xf]
  %v88 = vld [vmem:[%s0 + $0x178] sm:$0xf]
  %v89 = vld [vmem:[%s0 + $0x180] sm:$0xff]
  %v90 = vld [vmem:[%s0 + $0x188] sm:$0xff]
  %v91 = vld [vmem:[%s0 + $0x190] sm:$0xff]
  %v92 = vld [vmem:[%s0 + $0x198] sm:$0xff]
  %v93 = vld [vmem:[%s0 + $0x1a0] sm:$0xff]
  %v94 = vld [vmem:[%s0 + $0x1a8] sm:$0xff]
  %v95 = vld [vmem:[%s0 + $0x1b0] sm:$0xf]
  %v96 = vld [vmem:[%s0 + $0x1b8] sm:$0xf]
  %v97 = vld [vmem:[%s0 + $0x1c0] sm:$0xf]
  %v98 = vld [vmem:[%s0 + $0x1c8] sm:$0xf]
  %v99 = vld [vmem:[%s0 + $0x1d0] sm:$0xf]
  %v100 = vld [vmem:[%s0 + $0x1d8] sm:$0xf]
  %v101 = vld [vmem:[%s0 + $0x1e0] sm:$0xff]
  %v102 = vld [vmem:[%s0 + $0x1e8] sm:$0xff]
  %v103 = vld [vmem:[%s0 + $0x1f0] sm:$0xff]
  %v104 = vld [vmem:[%s0 + $0x1f8] sm:$0xff]
  %v105 = vld [vmem:[%s0 + $0x200] sm:$0xff]
  %v106 = vld [vmem:[%s0 + $0x208] sm:$0xff]
  %v107 = vld [vmem:[%s0 + $0x210] sm:$0xf]
  %v108 = vld [vmem:[%s0 + $0x218] sm:$0xf]
  %v109 = vld [vmem:[%s0 + $0x220] sm:$0xf]
  %v110 = vld [vmem:[%s0 + $0x228] sm:$0xf]
  %v111 = vld [vmem:[%s0 + $0x230] sm:$0xf]
  %v112 = vld [vmem:[%s0 + $0x238] sm:$0xf]
  %v113 = vld [vmem:[%s0 + $0x240] sm:$0xff]
  %v114 = vld [vmem:[%s0 + $0x248] sm:$0xff]
  %v115 = vld [vmem:[%s0 + $0x250] sm:$0xff]
  %v116 = vld [vmem:[%s0 + $0x258] sm:$0xff]
  %v117 = vld [vmem:[%s0 + $0x260] sm:$0xff]
  %v118 = vld [vmem:[%s0 + $0x268] sm:$0xff]
  %v119 = vld [vmem:[%s0 + $0x270] sm:$0xf]
  %v120 = vld [vmem:[%s0 + $0x278] sm:$0xf]
  %v121 = vld [vmem:[%s0 + $0x280] sm:$0xf]
  %v122 = vld [vmem:[%s0 + $0x288] sm:$0xf]
  %v123 = vld [vmem:[%s0 + $0x290] sm:$0xf]
  %v124 = vld [vmem:[%s0 + $0x298] sm:$0xf]
  %v125 = vld [vmem:[%s0 + $0x2a0] sm:$0xff]
  %v126 = vld [vmem:[%s0 + $0x2a8] sm:$0xff]
  %v127 = vld [vmem:[%s0 + $0x2b0] sm:$0xff]
  %v128 = vld [vmem:[%s0 + $0x2b8] sm:$0xff]
  %v129 = vld [vmem:[%s0 + $0x2c0] sm:$0xff]
  %v130 = vld [vmem:[%s0 + $0x2c8] sm:$0xff]
  %v131 = vld [vmem:[%s0 + $0x2d0] sm:$0xf]
  %v132 = vld [vmem:[%s0 + $0x2d8] sm:$0xf]
  %v133 = vld [vmem:[%s0 + $0x2e0] sm:$0xf]
  %v134 = vld [vmem:[%s0 + $0x2e8] sm:$0xf]
  %v135 = vld [vmem:[%s0 + $0x2f0] sm:$0xf]
  %v136 = vld [vmem:[%s0 + $0x2f8] sm:$0xf]
  %v137 = vld [vmem:[#allocation2] sm:$0xff]
  %v138 = vld [vmem:[#allocation2 + $0x8] sm:$0xff]
  %v139 = vld [vmem:[#allocation2 + $0x10] sm:$0xff]
  %v140 = vld [vmem:[#allocation2 + $0x18] sm:$0xff]
  %v141 = vld [vmem:[#allocation2 + $0x20] sm:$0xff]
  %v142 = vld [vmem:[#allocation2 + $0x28] sm:$0xff]
  %vm143 = vcmask 1043456
  %v144 = vsel %vm143, %v47, 0.0
  %v145 = vadd.f32 %v41, %v144
  %v146 = vrot.slane %v145, 4
  %v147 = vadd.f32 %v145, %v146
  %v148 = vrot.slane %v147, 2
  %v149 = vadd.f32 %v147, %v148
  %v150 = vrot.slane %v149, 1
  %v151 = vadd.f32 %v149, %v150
  %v152 = vsel %vm143, %v48, 0.0
  %v153 = vadd.f32 %v42, %v152
  %v154 = vrot.slane %v153, 4
  %v155 = vadd.f32 %v153, %v154
  %v156 = vrot.slane %v155, 2
  %v157 = vadd.f32 %v155, %v156
  %v158 = vrot.slane %v157, 1
  %v159 = vadd.f32 %v157, %v158
  %v160 = vsel %vm143, %v49, 0.0
  %v161 = vadd.f32 %v43, %v160
  %v162 = vrot.slane %v161, 4
  %v163 = vadd.f32 %v161, %v162
  %v164 = vrot.slane %v163, 2
  %v165 = vadd.f32 %v163, %v164
  %v166 = vrot.slane %v165, 1
  %v167 = vadd.f32 %v165, %v166
  %v168 = vsel %vm143, %v50, 0.0
  %v169 = vadd.f32 %v44, %v168
  %v170 = vrot.slane %v169, 4
  %v171 = vadd.f32 %v169, %v170
  %v172 = vrot.slane %v171, 2
  %v173 = vadd.f32 %v171, %v172
  %v174 = vrot.slane %v173, 1
  %v175 = vadd.f32 %v173, %v174
  %v176 = vsel %vm143, %v51, 0.0
  %v177 = vadd.f32 %v45, %v176
  %v178 = vrot.slane %v177, 4
  %v179 = vadd.f32 %v177, %v178
  %v180 = vrot.slane %v179, 2
  %v181 = vadd.f32 %v179, %v180
  %v182 = vrot.slane %v181, 1
  %v183 = vadd.f32 %v181, %v182
  %v184 = vsel %vm143, %v52, 0.0
  %v185 = vadd.f32 %v46, %v184
  %v186 = vrot.slane %v185, 4
  %v187 = vadd.f32 %v185, %v186
  %v188 = vrot.slane %v187, 2
  %v189 = vadd.f32 %v187, %v188
  %v190 = vrot.slane %v189, 1
  %v191 = vadd.f32 %v189, %v190
  %v192 = vsel %vm143, %v59, 0.0
  %v193 = vadd.f32 %v53, %v192
  %v194 = vrot.slane %v193, 4
  %v195 = vadd.f32 %v193, %v194
  %v196 = vrot.slane %v195, 2
  %v197 = vadd.f32 %v195, %v196
  %v198 = vrot.slane %v197, 1
  %v199 = vadd.f32 %v197, %v198
  %v200 = vsel %vm143, %v60, 0.0
  %v201 = vadd.f32 %v54, %v200
  %v202 = vrot.slane %v201, 4
  %v203 = vadd.f32 %v201, %v202
  %v204 = vrot.slane %v203, 2
  %v205 = vadd.f32 %v203, %v204
  %v206 = vrot.slane %v205, 1
  %v207 = vadd.f32 %v205, %v206
  %v208 = vsel %vm143, %v61, 0.0
  %v209 = vadd.f32 %v55, %v208
  %v210 = vrot.slane %v209, 4
  %v211 = vadd.f32 %v209, %v210
  %v212 = vrot.slane %v211, 2
  %v213 = vadd.f32 %v211, %v212
  %v214 = vrot.slane %v213, 1
  %v215 = vadd.f32 %v213, %v214
  %v216 = vsel %vm143, %v62, 0.0
  %v217 = vadd.f32 %v56, %v216
  %v218 = vrot.slane %v217, 4
  %v219 = vadd.f32 %v217, %v218
  %v220 = vrot.slane %v219, 2
  %v221 = vadd.f32 %v219, %v220
  %v222 = vrot.slane %v221, 1
  %v223 = vadd.f32 %v221, %v222
  %v224 = vsel %vm143, %v63, 0.0
  %v225 = vadd.f32 %v57, %v224
  %v226 = vrot.slane %v225, 4
  %v227 = vadd.f32 %v225, %v226
  %v228 = vrot.slane %v227, 2
  %v229 = vadd.f32 %v227, %v228
  %v230 = vrot.slane %v229, 1
  %v231 = vadd.f32 %v229, %v230
  %v232 = vsel %vm143, %v64, 0.0
  %v233 = vadd.f32 %v58, %v232
  %v234 = vrot.slane %v233, 4
  %v235 = vadd.f32 %v233, %v234
  %v236 = vrot.slane %v235, 2
  %v237 = vadd.f32 %v235, %v236
  %v238 = vrot.slane %v237, 1
  %v239 = vadd.f32 %v237, %v238
  %v240 = vsel %vm143, %v71, 0.0
  %v241 = vadd.f32 %v65, %v240
  %v242 = vrot.slane %v241, 4
  %v243 = vadd.f32 %v241, %v242
  %v244 = vrot.slane %v243, 2
  %v245 = vadd.f32 %v243, %v244
  %v246 = vrot.slane %v245, 1
  %v247 = vadd.f32 %v245, %v246
  %v248 = vsel %vm143, %v72, 0.0
  %v249 = vadd.f32 %v66, %v248
  %v250 = vrot.slane %v249, 4
  %v251 = vadd.f32 %v249, %v250
  %v252 = vrot.slane %v251, 2
  %v253 = vadd.f32 %v251, %v252
  %v254 = vrot.slane %v253, 1
  %v255 = vadd.f32 %v253, %v254
  %v256 = vsel %vm143, %v73, 0.0
  %v257 = vadd.f32 %v67, %v256
  %v258 = vrot.slane %v257, 4
  %v259 = vadd.f32 %v257, %v258
  %v260 = vrot.slane %v259, 2
  %v261 = vadd.f32 %v259, %v260
  %v262 = vrot.slane %v261, 1
  %v263 = vadd.f32 %v261, %v262
  %v264 = vsel %vm143, %v74, 0.0
  %v265 = vadd.f32 %v68, %v264
  %v266 = vrot.slane %v265, 4
  %v267 = vadd.f32 %v265, %v266
  %v268 = vrot.slane %v267, 2
  %v269 = vadd.f32 %v267, %v268
  %v270 = vrot.slane %v269, 1
  %v271 = vadd.f32 %v269, %v270
  %v272 = vsel %vm143, %v75, 0.0
  %v273 = vadd.f32 %v69, %v272
  %v274 = vrot.slane %v273, 4
  %v275 = vadd.f32 %v273, %v274
  %v276 = vrot.slane %v275, 2
  %v277 = vadd.f32 %v275, %v276
  %v278 = vrot.slane %v277, 1
  %v279 = vadd.f32 %v277, %v278
  %v280 = vsel %vm143, %v76, 0.0
  %v281 = vadd.f32 %v70, %v280
  %v282 = vrot.slane %v281, 4
  %v283 = vadd.f32 %v281, %v282
  %v284 = vrot.slane %v283, 2
  %v285 = vadd.f32 %v283, %v284
  %v286 = vrot.slane %v285, 1
  %v287 = vadd.f32 %v285, %v286
  %v288 = vsel %vm143, %v83, 0.0
  %v289 = vadd.f32 %v77, %v288
  %v290 = vrot.slane %v289, 4
  %v291 = vadd.f32 %v289, %v290
  %v292 = vrot.slane %v291, 2
  %v293 = vadd.f32 %v291, %v292
  %v294 = vrot.slane %v293, 1
  %v295 = vadd.f32 %v293, %v294
  %v296 = vsel %vm143, %v84, 0.0
  %v297 = vadd.f32 %v78, %v296
  %v298 = vrot.slane %v297, 4
  %v299 = vadd.f32 %v297, %v298
  %v300 = vrot.slane %v299, 2
  %v301 = vadd.f32 %v299, %v300
  %v302 = vrot.slane %v301, 1
  %v303 = vadd.f32 %v301, %v302
  %v304 = vsel %vm143, %v85, 0.0
  %v305 = vadd.f32 %v79, %v304
  %v306 = vrot.slane %v305, 4
  %v307 = vadd.f32 %v305, %v306
  %v308 = vrot.slane %v307, 2
  %v309 = vadd.f32 %v307, %v308
  %v310 = vrot.slane %v309, 1
  %v311 = vadd.f32 %v309, %v310
  %v312 = vsel %vm143, %v86, 0.0
  %v313 = vadd.f32 %v80, %v312
  %v314 = vrot.slane %v313, 4
  %v315 = vadd.f32 %v313, %v314
  %v316 = vrot.slane %v315, 2
  %v317 = vadd.f32 %v315, %v316
  %v318 = vrot.slane %v317, 1
  %v319 = vadd.f32 %v317, %v318
  %v320 = vsel %vm143, %v87, 0.0
  %v321 = vadd.f32 %v81, %v320
  %v322 = vrot.slane %v321, 4
  %v323 = vadd.f32 %v321, %v322
  %v324 = vrot.slane %v323, 2
  %v325 = vadd.f32 %v323, %v324
  %v326 = vrot.slane %v325, 1
  %v327 = vadd.f32 %v325, %v326
  %v328 = vsel %vm143, %v88, 0.0
  %v329 = vadd.f32 %v82, %v328
  %v330 = vrot.slane %v329, 4
  %v331 = vadd.f32 %v329, %v330
  %v332 = vrot.slane %v331, 2
  %v333 = vadd.f32 %v331, %v332
  %v334 = vrot.slane %v333, 1
  %v335 = vadd.f32 %v333, %v334
  %v336 = vsel %vm143, %v95, 0.0
  %v337 = vadd.f32 %v89, %v336
  %v338 = vrot.slane %v337, 4
  %v339 = vadd.f32 %v337, %v338
  %v340 = vrot.slane %v339, 2
  %v341 = vadd.f32 %v339, %v340
  %v342 = vrot.slane %v341, 1
  %v343 = vadd.f32 %v341, %v342
  %v344 = vsel %vm143, %v96, 0.0
  %v345 = vadd.f32 %v90, %v344
  %v346 = vrot.slane %v345, 4
  %v347 = vadd.f32 %v345, %v346
  %v348 = vrot.slane %v347, 2
  %v349 = vadd.f32 %v347, %v348
  %v350 = vrot.slane %v349, 1
  %v351 = vadd.f32 %v349, %v350
  %v352 = vsel %vm143, %v97, 0.0
  %v353 = vadd.f32 %v91, %v352
  %v354 = vrot.slane %v353, 4
  %v355 = vadd.f32 %v353, %v354
  %v356 = vrot.slane %v355, 2
  %v357 = vadd.f32 %v355, %v356
  %v358 = vrot.slane %v357, 1
  %v359 = vadd.f32 %v357, %v358
  %v360 = vsel %vm143, %v98, 0.0
  %v361 = vadd.f32 %v92, %v360
  %v362 = vrot.slane %v361, 4
  %v363 = vadd.f32 %v361, %v362
  %v364 = vrot.slane %v363, 2
  %v365 = vadd.f32 %v363, %v364
  %v366 = vrot.slane %v365, 1
  %v367 = vadd.f32 %v365, %v366
  %v368 = vsel %vm143, %v99, 0.0
  %v369 = vadd.f32 %v93, %v368
  %v370 = vrot.slane %v369, 4
  %v371 = vadd.f32 %v369, %v370
  %v372 = vrot.slane %v371, 2
  %v373 = vadd.f32 %v371, %v372
  %v374 = vrot.slane %v373, 1
  %v375 = vadd.f32 %v373, %v374
  %v376 = vsel %vm143, %v100, 0.0
  %v377 = vadd.f32 %v94, %v376
  %v378 = vrot.slane %v377, 4
  %v379 = vadd.f32 %v377, %v378
  %v380 = vrot.slane %v379, 2
  %v381 = vadd.f32 %v379, %v380
  %v382 = vrot.slane %v381, 1
  %v383 = vadd.f32 %v381, %v382
  %v384 = vsel %vm143, %v107, 0.0
  %v385 = vadd.f32 %v101, %v384
  %v386 = vrot.slane %v385, 4
  %v387 = vadd.f32 %v385, %v386
  %v388 = vrot.slane %v387, 2
  %v389 = vadd.f32 %v387, %v388
  %v390 = vrot.slane %v389, 1
  %v391 = vadd.f32 %v389, %v390
  %v392 = vsel %vm143, %v108, 0.0
  %v393 = vadd.f32 %v102, %v392
  %v394 = vrot.slane %v393, 4
  %v395 = vadd.f32 %v393, %v394
  %v396 = vrot.slane %v395, 2
  %v397 = vadd.f32 %v395, %v396
  %v398 = vrot.slane %v397, 1
  %v399 = vadd.f32 %v397, %v398
  %v400 = vsel %vm143, %v109, 0.0
  %v401 = vadd.f32 %v103, %v400
  %v402 = vrot.slane %v401, 4
  %v403 = vadd.f32 %v401, %v402
  %v404 = vrot.slane %v403, 2
  %v405 = vadd.f32 %v403, %v404
  %v406 = vrot.slane %v405, 1
  %v407 = vadd.f32 %v405, %v406
  %v408 = vsel %vm143, %v110, 0.0
  %v409 = vadd.f32 %v104, %v408
  %v410 = vrot.slane %v409, 4
  %v411 = vadd.f32 %v409, %v410
  %v412 = vrot.slane %v411, 2
  %v413 = vadd.f32 %v411, %v412
  %v414 = vrot.slane %v413, 1
  %v415 = vadd.f32 %v413, %v414
  %v416 = vsel %vm143, %v111, 0.0
  %v417 = vadd.f32 %v105, %v416
  %v418 = vrot.slane %v417, 4
  %v419 = vadd.f32 %v417, %v418
  %v420 = vrot.slane %v419, 2
  %v421 = vadd.f32 %v419, %v420
  %v422 = vrot.slane %v421, 1
  %v423 = vadd.f32 %v421, %v422
  %v424 = vsel %vm143, %v112, 0.0
  %v425 = vadd.f32 %v106, %v424
  %v426 = vrot.slane %v425, 4
  %v427 = vadd.f32 %v425, %v426
  %v428 = vrot.slane %v427, 2
  %v429 = vadd.f32 %v427, %v428
  %v430 = vrot.slane %v429, 1
  %v431 = vadd.f32 %v429, %v430
  %v432 = vsel %vm143, %v119, 0.0
  %v433 = vadd.f32 %v113, %v432
  %v434 = vrot.slane %v433, 4
  %v435 = vadd.f32 %v433, %v434
  %v436 = vrot.slane %v435, 2
  %v437 = vadd.f32 %v435, %v436
  %v438 = vrot.slane %v437, 1
  %v439 = vadd.f32 %v437, %v438
  %v440 = vsel %vm143, %v120, 0.0
  %v441 = vadd.f32 %v114, %v440
  %v442 = vrot.slane %v441, 4
  %v443 = vadd.f32 %v441, %v442
  %v444 = vrot.slane %v443, 2
  %v445 = vadd.f32 %v443, %v444
  %v446 = vrot.slane %v445, 1
  %v447 = vadd.f32 %v445, %v446
  %v448 = vsel %vm143, %v121, 0.0
  %v449 = vadd.f32 %v115, %v448
  %v450 = vrot.slane %v449, 4
  %v451 = vadd.f32 %v449, %v450
  %v452 = vrot.slane %v451, 2
  %v453 = vadd.f32 %v451, %v452
  %v454 = vrot.slane %v453, 1
  %v455 = vadd.f32 %v453, %v454
  %v456 = vsel %vm143, %v122, 0.0
  %v457 = vadd.f32 %v116, %v456
  %v458 = vrot.slane %v457, 4
  %v459 = vadd.f32 %v457, %v458
  %v460 = vrot.slane %v459, 2
  %v461 = vadd.f32 %v459, %v460
  %v462 = vrot.slane %v461, 1
  %v463 = vadd.f32 %v461, %v462
  %v464 = vsel %vm143, %v123, 0.0
  %v465 = vadd.f32 %v117, %v464
  %v466 = vrot.slane %v465, 4
  %v467 = vadd.f32 %v465, %v466
  %v468 = vrot.slane %v467, 2
  %v469 = vadd.f32 %v467, %v468
  %v470 = vrot.slane %v469, 1
  %v471 = vadd.f32 %v469, %v470
  %v472 = vsel %vm143, %v124, 0.0
  %v473 = vadd.f32 %v118, %v472
  %v474 = vrot.slane %v473, 4
  %v475 = vadd.f32 %v473, %v474
  %v476 = vrot.slane %v475, 2
  %v477 = vadd.f32 %v475, %v476
  %v478 = vrot.slane %v477, 1
  %v479 = vadd.f32 %v477, %v478
  %v480 = vsel %vm143, %v131, 0.0
  %v481 = vadd.f32 %v125, %v480
  %v482 = vrot.slane %v481, 4
  %v483 = vadd.f32 %v481, %v482
  %v484 = vrot.slane %v483, 2
  %v485 = vadd.f32 %v483, %v484
  %v486 = vrot.slane %v485, 1
  %v487 = vadd.f32 %v485, %v486
  %v488 = vsel %vm143, %v132, 0.0
  %v489 = vadd.f32 %v126, %v488
  %v490 = vrot.slane %v489, 4
  %v491 = vadd.f32 %v489, %v490
  %v492 = vrot.slane %v491, 2
  %v493 = vadd.f32 %v491, %v492
  %v494 = vrot.slane %v493, 1
  %v495 = vadd.f32 %v493, %v494
  %v496 = vsel %vm143, %v133, 0.0
  %v497 = vadd.f32 %v127, %v496
  %v498 = vrot.slane %v497, 4
  %v499 = vadd.f32 %v497, %v498
  %v500 = vrot.slane %v499, 2
  %v501 = vadd.f32 %v499, %v500
  %v502 = vrot.slane %v501, 1
  %v503 = vadd.f32 %v501, %v502
  %v504 = vsel %vm143, %v134, 0.0
  %v505 = vadd.f32 %v128, %v504
  %v506 = vrot.slane %v505, 4
  %v507 = vadd.f32 %v505, %v506
  %v508 = vrot.slane %v507, 2
  %v509 = vadd.f32 %v507, %v508
  %v510 = vrot.slane %v509, 1
  %v511 = vadd.f32 %v509, %v510
  %v512 = vsel %vm143, %v135, 0.0
  %v513 = vadd.f32 %v129, %v512
  %v514 = vrot.slane %v513, 4
  %v515 = vadd.f32 %v513, %v514
  %v516 = vrot.slane %v515, 2
  %v517 = vadd.f32 %v515, %v516
  %v518 = vrot.slane %v517, 1
  %v519 = vadd.f32 %v517, %v518
  %v520 = vsel %vm143, %v136, 0.0
  %v521 = vadd.f32 %v130, %v520
  %v522 = vrot.slane %v521, 4
  %v523 = vadd.f32 %v521, %v522
  %v524 = vrot.slane %v523, 2
  %v525 = vadd.f32 %v523, %v524
  %v526 = vrot.slane %v525, 1
  %v527 = vadd.f32 %v525, %v526
  %vm576 = vcmask 1041409
  %v577 = vsel %vm576, %v199, %v151
  %vm578 = vcmask 1042434
  %v579 = vsel %vm578, %v247, %v577
  %vm580 = vcmask 1043459
  %v581 = vsel %vm580, %v295, %v579
  %vm582 = vcmask 1044484
  %v583 = vsel %vm582, %v343, %v581
  %vm584 = vcmask 1045509
  %v585 = vsel %vm584, %v391, %v583
  %vm586 = vcmask 1046534
  %v587 = vsel %vm586, %v439, %v585
  %vm588 = vcmask 1047559
  %v589 = vsel %vm588, %v487, %v587
  %v590 = vsel %vm576, %v207, %v159
  %v591 = vsel %vm578, %v255, %v590
  %v592 = vsel %vm580, %v303, %v591
  %v593 = vsel %vm582, %v351, %v592
  %v594 = vsel %vm584, %v399, %v593
  %v595 = vsel %vm586, %v447, %v594
  %v596 = vsel %vm588, %v495, %v595
  %v597 = vsel %vm576, %v215, %v167
  %v598 = vsel %vm578, %v263, %v597
  %v599 = vsel %vm580, %v311, %v598
  %v600 = vsel %vm582, %v359, %v599
  %v601 = vsel %vm584, %v407, %v600
  %v602 = vsel %vm586, %v455, %v601
  %v603 = vsel %vm588, %v503, %v602
  %v604 = vsel %vm576, %v223, %v175
  %v605 = vsel %vm578, %v271, %v604
  %v606 = vsel %vm580, %v319, %v605
  %v607 = vsel %vm582, %v367, %v606
  %v608 = vsel %vm584, %v415, %v607
  %v609 = vsel %vm586, %v463, %v608
  %v610 = vsel %vm588, %v511, %v609
  %v611 = vsel %vm576, %v231, %v183
  %v612 = vsel %vm578, %v279, %v611
  %v613 = vsel %vm580, %v327, %v612
  %v614 = vsel %vm582, %v375, %v613
  %v615 = vsel %vm584, %v423, %v614
  %v616 = vsel %vm586, %v471, %v615
  %v617 = vsel %vm588, %v519, %v616
  %v618 = vsel %vm576, %v239, %v191
  %v619 = vsel %vm578, %v287, %v618
  %v620 = vsel %vm580, %v335, %v619
  %v621 = vsel %vm582, %v383, %v620
  %v622 = vsel %vm584, %v431, %v621
  %v623 = vsel %vm586, %v479, %v622
  %v624 = vsel %vm588, %v527, %v623
  %v631 = vadd.f32 %v137, %v589
  %v632 = vadd.f32 %v138, %v596
  %v633 = vadd.f32 %v139, %v603
  %v634 = vadd.f32 %v140, %v610
  %v635 = vadd.f32 %v141, %v617
  %v636 = vadd.f32 %v142, %v624
  %637 = vst [vmem:[#allocation2] sm:$0xff] %v631
  %638 = vst [vmem:[#allocation2 + $0x8] sm:$0xff] %v632
  %639 = vst [vmem:[#allocation2 + $0x10] sm:$0xff] %v633
  %640 = vst [vmem:[#allocation2 + $0x18] sm:$0xff] %v634
  %641 = vst [vmem:[#allocation2 + $0x20] sm:$0xff] %v635
  %642 = vst [vmem:[#allocation2 + $0x28] sm:$0xff] %v636
  // Predicated region
  $region38: #{coherence_scores.1} parent=0 // pred_check
    %p643 = pneg %p31
  $region39: #{coherence_scores.1} parent=0 // pred_check_branch
    %645 = sbr.rel (%p643) target = $region41
  $region40: #{coherence_scores.1} parent=0 // pred_region
    %v646 = vld [vmem:[#allocation2] sm:$0xff]
    %v647 = vld [vmem:[#allocation2 + $0x8] sm:$0xff]
    %v648 = vld [vmem:[#allocation2 + $0x10] sm:$0xff]
    %v649 = vld [vmem:[#allocation2 + $0x18] sm:$0xff]
    %v650 = vld [vmem:[#allocation2 + $0x20] sm:$0xff]
    %v651 = vld [vmem:[#allocation2 + $0x28] sm:$0xff]
    %v652 = vmul.f32 %v646, 0.083333336
    %v653 = vmul.f32 %v647, 0.083333336
    %v654 = vmul.f32 %v648, 0.083333336
    %v655 = vmul.f32 %v649, 0.083333336
    %v656 = vmul.f32 %v650, 0.083333336
    %v657 = vmul.f32 %v651, 0.083333336
    %v658 = vld [vmem:[%s1] sm:$0xff]
    %v659 = vld [vmem:[%s1 + $0x8] sm:$0xff]
    %v660 = vld [vmem:[%s1 + $0x10] sm:$0xff]
    %v661 = vld [vmem:[%s1 + $0x18] sm:$0xff]
    %v662 = vld [vmem:[%s1 + $0x20] sm:$0xff]
    %v663 = vld [vmem:[%s1 + $0x28] sm:$0xff]
    %v664 = vpack.c.bf16 %v652, %v652
    %v665 = vpack.c.bf16 %v653, %v653
    %v666 = vpack.c.bf16 %v654, %v654
    %v667 = vpack.c.bf16 %v655, %v655
    %v668 = vpack.c.bf16 %v656, %v656
    %v669 = vpack.c.bf16 %v657, %v657
    %v670 = vpack.c.bf16 %v658, %v658
    %v671 = vpack.c.bf16 %v659, %v659
    %v672 = vpack.c.bf16 %v660, %v660
    %v673 = vpack.c.bf16 %v661, %v661
    %v674 = vpack.c.bf16 %v662, %v662
    %v675 = vpack.c.bf16 %v663, %v663
    %v676 = vmul.f32 %v652, %v658
    %v677 = vmul.f32 %v653, %v659
    %v678 = vmul.f32 %v654, %v660
    %v679 = vmul.f32 %v655, %v661
    %v680 = vmul.f32 %v656, %v662
    %v681 = vmul.f32 %v657, %v663
    %v682 = vpack.c.bf16 %v676, %v676
    %v683 = vpack.c.bf16 %v677, %v677
    %v684 = vpack.c.bf16 %v678, %v678
    %v685 = vpack.c.bf16 %v679, %v679
    %v686 = vpack.c.bf16 %v680, %v680
    %v687 = vpack.c.bf16 %v681, %v681
    %v688 = vld [vmem:[%s2] sm:$0xff]
    %v689 = vld [vmem:[%s2 + $0x8] sm:$0xff]
    %v690 = vld [vmem:[%s2 + $0x10] sm:$0xff]
    %v691 = vld [vmem:[%s2 + $0x18] sm:$0xff]
    %v692 = vld [vmem:[%s2 + $0x20] sm:$0xff]
    %v693 = vld [vmem:[%s2 + $0x28] sm:$0xff]
    %v694 = vld [vmem:[%s2 + $0x30] sm:$0xff]
    %v695 = vld [vmem:[%s2 + $0x38] sm:$0xff]
    %v696 = vld [vmem:[%s2 + $0x40] sm:$0xff]
    %v697 = vld [vmem:[%s2 + $0x48] sm:$0xff]
    %v698 = vld [vmem:[%s2 + $0x50] sm:$0xff]
    %v699 = vld [vmem:[%s2 + $0x58] sm:$0xff]
    %v700 = vld [vmem:[%s2 + $0x60] sm:$0xff]
    %v701 = vld [vmem:[%s2 + $0x68] sm:$0xff]
    %v702 = vld [vmem:[%s2 + $0x70] sm:$0xff]
    %v703 = vld [vmem:[%s2 + $0x78] sm:$0xff]
    %v704 = vld [vmem:[%s2 + $0x80] sm:$0xff]
    %v705 = vld [vmem:[%s2 + $0x88] sm:$0xff]
    %v706 = vld [vmem:[%s2 + $0x90] sm:$0xff]
    %v707 = vld [vmem:[%s2 + $0x98] sm:$0xff]
    %v708 = vld [vmem:[%s2 + $0xa0] sm:$0xff]
    %v709 = vld [vmem:[%s2 + $0xa8] sm:$0xff]
    %v710 = vld [vmem:[%s2 + $0xb0] sm:$0xff]
    %v711 = vld [vmem:[%s2 + $0xb8] sm:$0xff]
    %v712 = vld [vmem:[%s2 + $0xc0] sm:$0xff]
    %v713 = vld [vmem:[%s2 + $0xc8] sm:$0xff]
    %v714 = vld [vmem:[%s2 + $0xd0] sm:$0xff]
    %v715 = vld [vmem:[%s2 + $0xd8] sm:$0xff]
    %v716 = vld [vmem:[%s2 + $0xe0] sm:$0xff]
    %v717 = vld [vmem:[%s2 + $0xe8] sm:$0xff]
    %v718 = vld [vmem:[%s2 + $0xf0] sm:$0xff]
    %v719 = vld [vmem:[%s2 + $0xf8] sm:$0xff]
    %v720 = vld [vmem:[%s2 + $0x100] sm:$0xff]
    %v721 = vld [vmem:[%s2 + $0x108] sm:$0xff]
    %v722 = vld [vmem:[%s2 + $0x110] sm:$0xff]
    %v723 = vld [vmem:[%s2 + $0x118] sm:$0xff]
    %v724 = vld [vmem:[%s2 + $0x120] sm:$0xff]
    %v725 = vld [vmem:[%s2 + $0x128] sm:$0xff]
    %v726 = vld [vmem:[%s2 + $0x130] sm:$0xff]
    %v727 = vld [vmem:[%s2 + $0x138] sm:$0xff]
    %v728 = vld [vmem:[%s2 + $0x140] sm:$0xff]
    %v729 = vld [vmem:[%s2 + $0x148] sm:$0xff]
    %v730 = vld [vmem:[%s2 + $0x150] sm:$0xff]
    %v731 = vld [vmem:[%s2 + $0x158] sm:$0xff]
    %v732 = vld [vmem:[%s2 + $0x160] sm:$0xff]
    %v733 = vld [vmem:[%s2 + $0x168] sm:$0xff]
    %v734 = vld [vmem:[%s2 + $0x170] sm:$0xff]
    %v735 = vld [vmem:[%s2 + $0x178] sm:$0xff]
    %v736 = vld [vmem:[%s2 + $0x180] sm:$0xff]
    %v737 = vld [vmem:[%s2 + $0x188] sm:$0xff]
    %v738 = vld [vmem:[%s2 + $0x190] sm:$0xff]
    %v739 = vld [vmem:[%s2 + $0x198] sm:$0xff]
    %v740 = vld [vmem:[%s2 + $0x1a0] sm:$0xff]
    %v741 = vld [vmem:[%s2 + $0x1a8] sm:$0xff]
    %v742 = vld [vmem:[%s2 + $0x1b0] sm:$0xff]
    %v743 = vld [vmem:[%s2 + $0x1b8] sm:$0xff]
    %v744 = vld [vmem:[%s2 + $0x1c0] sm:$0xff]
    %v745 = vld [vmem:[%s2 + $0x1c8] sm:$0xff]
    %v746 = vld [vmem:[%s2 + $0x1d0] sm:$0xff]
    %v747 = vld [vmem:[%s2 + $0x1d8] sm:$0xff]
    %v748 = vld [vmem:[%s2 + $0x1e0] sm:$0xff]
    %v749 = vld [vmem:[%s2 + $0x1e8] sm:$0xff]
    %v750 = vld [vmem:[%s2 + $0x1f0] sm:$0xff]
    %v751 = vld [vmem:[%s2 + $0x1f8] sm:$0xff]
    %v752 = vld [vmem:[%s2 + $0x200] sm:$0xff]
    %v753 = vld [vmem:[%s2 + $0x208] sm:$0xff]
    %v754 = vld [vmem:[%s2 + $0x210] sm:$0xff]
    %v755 = vld [vmem:[%s2 + $0x218] sm:$0xff]
    %v756 = vld [vmem:[%s2 + $0x220] sm:$0xff]
    %v757 = vld [vmem:[%s2 + $0x228] sm:$0xff]
    %v758 = vld [vmem:[%s2 + $0x230] sm:$0xff]
    %v759 = vld [vmem:[%s2 + $0x238] sm:$0xff]
    %v760 = vld [vmem:[%s2 + $0x240] sm:$0xff]
    %v761 = vld [vmem:[%s2 + $0x248] sm:$0xff]
    %v762 = vld [vmem:[%s2 + $0x250] sm:$0xff]
    %v763 = vld [vmem:[%s2 + $0x258] sm:$0xff]
    %v764 = vld [vmem:[%s2 + $0x260] sm:$0xff]
    %v765 = vld [vmem:[%s2 + $0x268] sm:$0xff]
    %v766 = vld [vmem:[%s2 + $0x270] sm:$0xff]
    %v767 = vld [vmem:[%s2 + $0x278] sm:$0xff]
    %v768 = vld [vmem:[%s2 + $0x280] sm:$0xff]
    %v769 = vld [vmem:[%s2 + $0x288] sm:$0xff]
    %v770 = vld [vmem:[%s2 + $0x290] sm:$0xff]
    %v771 = vld [vmem:[%s2 + $0x298] sm:$0xff]
    %v772 = vld [vmem:[%s2 + $0x2a0] sm:$0xff]
    %v773 = vld [vmem:[%s2 + $0x2a8] sm:$0xff]
    %v774 = vld [vmem:[%s2 + $0x2b0] sm:$0xff]
    %v775 = vld [vmem:[%s2 + $0x2b8] sm:$0xff]
    %v776 = vld [vmem:[%s2 + $0x2c0] sm:$0xff]
    %v777 = vld [vmem:[%s2 + $0x2c8] sm:$0xff]
    %v778 = vld [vmem:[%s2 + $0x2d0] sm:$0xff]
    %v779 = vld [vmem:[%s2 + $0x2d8] sm:$0xff]
    %v780 = vld [vmem:[%s2 + $0x2e0] sm:$0xff]
    %v781 = vld [vmem:[%s2 + $0x2e8] sm:$0xff]
    %v782 = vld [vmem:[%s2 + $0x2f0] sm:$0xff]
    %v783 = vld [vmem:[%s2 + $0x2f8] sm:$0xff]
    %v784 = vld [vmem:[%s2 + $0x300] sm:$0xff]
    %v785 = vld [vmem:[%s2 + $0x308] sm:$0xff]
    %v786 = vld [vmem:[%s2 + $0x310] sm:$0xff]
    %v787 = vld [vmem:[%s2 + $0x318] sm:$0xff]
    %v788 = vld [vmem:[%s2 + $0x320] sm:$0xff]
    %v789 = vld [vmem:[%s2 + $0x328] sm:$0xff]
    %v790 = vld [vmem:[%s2 + $0x330] sm:$0xff]
    %v791 = vld [vmem:[%s2 + $0x338] sm:$0xff]
    %v792 = vld [vmem:[%s2 + $0x340] sm:$0xff]
    %v793 = vld [vmem:[%s2 + $0x348] sm:$0xff]
    %v794 = vld [vmem:[%s2 + $0x350] sm:$0xff]
    %v795 = vld [vmem:[%s2 + $0x358] sm:$0xff]
    %v796 = vld [vmem:[%s2 + $0x360] sm:$0xff]
    %v797 = vld [vmem:[%s2 + $0x368] sm:$0xff]
    %v798 = vld [vmem:[%s2 + $0x370] sm:$0xff]
    %v799 = vld [vmem:[%s2 + $0x378] sm:$0xff]
    %v800 = vld [vmem:[%s2 + $0x380] sm:$0xff]
    %v801 = vld [vmem:[%s2 + $0x388] sm:$0xff]
    %v802 = vld [vmem:[%s2 + $0x390] sm:$0xff]
    %v803 = vld [vmem:[%s2 + $0x398] sm:$0xff]
    %v804 = vld [vmem:[%s2 + $0x3a0] sm:$0xff]
    %v805 = vld [vmem:[%s2 + $0x3a8] sm:$0xff]
    %v806 = vld [vmem:[%s2 + $0x3b0] sm:$0xff]
    %v807 = vld [vmem:[%s2 + $0x3b8] sm:$0xff]
    %v808 = vld [vmem:[%s2 + $0x3c0] sm:$0xff]
    %v809 = vld [vmem:[%s2 + $0x3c8] sm:$0xff]
    %v810 = vld [vmem:[%s2 + $0x3d0] sm:$0xff]
    %v811 = vld [vmem:[%s2 + $0x3d8] sm:$0xff]
    %v812 = vld [vmem:[%s2 + $0x3e0] sm:$0xff]
    %v813 = vld [vmem:[%s2 + $0x3e8] sm:$0xff]
    %v814 = vld [vmem:[%s2 + $0x3f0] sm:$0xff]
    %v815 = vld [vmem:[%s2 + $0x3f8] sm:$0xff]
    %v816 = vld [vmem:[%s2 + $0x400] sm:$0xff]
    %v817 = vld [vmem:[%s2 + $0x408] sm:$0xff]
    %v818 = vld [vmem:[%s2 + $0x410] sm:$0xff]
    %v819 = vld [vmem:[%s2 + $0x418] sm:$0xff]
    %v820 = vld [vmem:[%s2 + $0x420] sm:$0xff]
    %v821 = vld [vmem:[%s2 + $0x428] sm:$0xff]
    %v822 = vld [vmem:[%s2 + $0x430] sm:$0xff]
    %v823 = vld [vmem:[%s2 + $0x438] sm:$0xff]
    %v824 = vld [vmem:[%s2 + $0x440] sm:$0xff]
    %v825 = vld [vmem:[%s2 + $0x448] sm:$0xff]
    %v826 = vld [vmem:[%s2 + $0x450] sm:$0xff]
    %v827 = vld [vmem:[%s2 + $0x458] sm:$0xff]
    %v828 = vld [vmem:[%s2 + $0x460] sm:$0xff]
    %v829 = vld [vmem:[%s2 + $0x468] sm:$0xff]
    %v830 = vld [vmem:[%s2 + $0x470] sm:$0xff]
    %v831 = vld [vmem:[%s2 + $0x478] sm:$0xff]
    %v832 = vld [vmem:[%s2 + $0x480] sm:$0xff]
    %v833 = vld [vmem:[%s2 + $0x488] sm:$0xff]
    %v834 = vld [vmem:[%s2 + $0x490] sm:$0xff]
    %v835 = vld [vmem:[%s2 + $0x498] sm:$0xff]
    %v836 = vld [vmem:[%s2 + $0x4a0] sm:$0xff]
    %v837 = vld [vmem:[%s2 + $0x4a8] sm:$0xff]
    %v838 = vld [vmem:[%s2 + $0x4b0] sm:$0xff]
    %v839 = vld [vmem:[%s2 + $0x4b8] sm:$0xff]
    %v840 = vld [vmem:[%s2 + $0x4c0] sm:$0xff]
    %v841 = vld [vmem:[%s2 + $0x4c8] sm:$0xff]
    %v842 = vld [vmem:[%s2 + $0x4d0] sm:$0xff]
    %v843 = vld [vmem:[%s2 + $0x4d8] sm:$0xff]
    %v844 = vld [vmem:[%s2 + $0x4e0] sm:$0xff]
    %v845 = vld [vmem:[%s2 + $0x4e8] sm:$0xff]
    %v846 = vld [vmem:[%s2 + $0x4f0] sm:$0xff]
    %v847 = vld [vmem:[%s2 + $0x4f8] sm:$0xff]
    %v848 = vld [vmem:[%s2 + $0x500] sm:$0xff]
    %v849 = vld [vmem:[%s2 + $0x508] sm:$0xff]
    %v850 = vld [vmem:[%s2 + $0x510] sm:$0xff]
    %v851 = vld [vmem:[%s2 + $0x518] sm:$0xff]
    %v852 = vld [vmem:[%s2 + $0x520] sm:$0xff]
    %v853 = vld [vmem:[%s2 + $0x528] sm:$0xff]
    %v854 = vld [vmem:[%s2 + $0x530] sm:$0xff]
    %v855 = vld [vmem:[%s2 + $0x538] sm:$0xff]
    %v856 = vld [vmem:[%s2 + $0x540] sm:$0xff]
    %v857 = vld [vmem:[%s2 + $0x548] sm:$0xff]
    %v858 = vld [vmem:[%s2 + $0x550] sm:$0xff]
    %v859 = vld [vmem:[%s2 + $0x558] sm:$0xff]
    %v860 = vld [vmem:[%s2 + $0x560] sm:$0xff]
    %v861 = vld [vmem:[%s2 + $0x568] sm:$0xff]
    %v862 = vld [vmem:[%s2 + $0x570] sm:$0xff]
    %v863 = vld [vmem:[%s2 + $0x578] sm:$0xff]
    %v864 = vld [vmem:[%s2 + $0x580] sm:$0xff]
    %v865 = vld [vmem:[%s2 + $0x588] sm:$0xff]
    %v866 = vld [vmem:[%s2 + $0x590] sm:$0xff]
    %v867 = vld [vmem:[%s2 + $0x598] sm:$0xff]
    %v868 = vld [vmem:[%s2 + $0x5a0] sm:$0xff]
    %v869 = vld [vmem:[%s2 + $0x5a8] sm:$0xff]
    %v870 = vld [vmem:[%s2 + $0x5b0] sm:$0xff]
    %v871 = vld [vmem:[%s2 + $0x5b8] sm:$0xff]
    %v872 = vld [vmem:[%s2 + $0x5c0] sm:$0xff]
    %v873 = vld [vmem:[%s2 + $0x5c8] sm:$0xff]
    %v874 = vld [vmem:[%s2 + $0x5d0] sm:$0xff]
    %v875 = vld [vmem:[%s2 + $0x5d8] sm:$0xff]
    %v876 = vld [vmem:[%s2 + $0x5e0] sm:$0xff]
    %v877 = vld [vmem:[%s2 + $0x5e8] sm:$0xff]
    %v878 = vld [vmem:[%s2 + $0x5f0] sm:$0xff]
    %v879 = vld [vmem:[%s2 + $0x5f8] sm:$0xff]
    %v880 = vld [vmem:[%s2 + $0x600] sm:$0xff]
    %v881 = vld [vmem:[%s2 + $0x608] sm:$0xff]
    %v882 = vld [vmem:[%s2 + $0x610] sm:$0xff]
    %v883 = vld [vmem:[%s2 + $0x618] sm:$0xff]
    %v884 = vld [vmem:[%s2 + $0x620] sm:$0xff]
    %v885 = vld [vmem:[%s2 + $0x628] sm:$0xff]
    %v886 = vld [vmem:[%s2 + $0x630] sm:$0xff]
    %v887 = vld [vmem:[%s2 + $0x638] sm:$0xff]
    %v888 = vld [vmem:[%s2 + $0x640] sm:$0xff]
    %v889 = vld [vmem:[%s2 + $0x648] sm:$0xff]
    %v890 = vld [vmem:[%s2 + $0x650] sm:$0xff]
    %v891 = vld [vmem:[%s2 + $0x658] sm:$0xff]
    %v892 = vld [vmem:[%s2 + $0x660] sm:$0xff]
    %v893 = vld [vmem:[%s2 + $0x668] sm:$0xff]
    %v894 = vld [vmem:[%s2 + $0x670] sm:$0xff]
    %v895 = vld [vmem:[%s2 + $0x678] sm:$0xff]
    %v896 = vld [vmem:[%s2 + $0x680] sm:$0xff]
    %v897 = vld [vmem:[%s2 + $0x688] sm:$0xff]
    %v898 = vld [vmem:[%s2 + $0x690] sm:$0xff]
    %v899 = vld [vmem:[%s2 + $0x698] sm:$0xff]
    %v900 = vld [vmem:[%s2 + $0x6a0] sm:$0xff]
    %v901 = vld [vmem:[%s2 + $0x6a8] sm:$0xff]
    %v902 = vld [vmem:[%s2 + $0x6b0] sm:$0xff]
    %v903 = vld [vmem:[%s2 + $0x6b8] sm:$0xff]
    %v904 = vld [vmem:[%s2 + $0x6c0] sm:$0xff]
    %v905 = vld [vmem:[%s2 + $0x6c8] sm:$0xff]
    %v906 = vld [vmem:[%s2 + $0x6d0] sm:$0xff]
    %v907 = vld [vmem:[%s2 + $0x6d8] sm:$0xff]
    %v908 = vld [vmem:[%s2 + $0x6e0] sm:$0xff]
    %v909 = vld [vmem:[%s2 + $0x6e8] sm:$0xff]
    %v910 = vld [vmem:[%s2 + $0x6f0] sm:$0xff]
    %v911 = vld [vmem:[%s2 + $0x6f8] sm:$0xff]
    %v912 = vld [vmem:[%s2 + $0x700] sm:$0xff]
    %v913 = vld [vmem:[%s2 + $0x708] sm:$0xff]
    %v914 = vld [vmem:[%s2 + $0x710] sm:$0xff]
    %v915 = vld [vmem:[%s2 + $0x718] sm:$0xff]
    %v916 = vld [vmem:[%s2 + $0x720] sm:$0xff]
    %v917 = vld [vmem:[%s2 + $0x728] sm:$0xff]
    %v918 = vld [vmem:[%s2 + $0x730] sm:$0xff]
    %v919 = vld [vmem:[%s2 + $0x738] sm:$0xff]
    %v920 = vld [vmem:[%s2 + $0x740] sm:$0xff]
    %v921 = vld [vmem:[%s2 + $0x748] sm:$0xff]
    %v922 = vld [vmem:[%s2 + $0x750] sm:$0xff]
    %v923 = vld [vmem:[%s2 + $0x758] sm:$0xff]
    %v924 = vld [vmem:[%s2 + $0x760] sm:$0xff]
    %v925 = vld [vmem:[%s2 + $0x768] sm:$0xff]
    %v926 = vld [vmem:[%s2 + $0x770] sm:$0xff]
    %v927 = vld [vmem:[%s2 + $0x778] sm:$0xff]
    %v928 = vld [vmem:[%s2 + $0x780] sm:$0xff]
    %v929 = vld [vmem:[%s2 + $0x788] sm:$0xff]
    %v930 = vld [vmem:[%s2 + $0x790] sm:$0xff]
    %v931 = vld [vmem:[%s2 + $0x798] sm:$0xff]
    %v932 = vld [vmem:[%s2 + $0x7a0] sm:$0xff]
    %v933 = vld [vmem:[%s2 + $0x7a8] sm:$0xff]
    %v934 = vld [vmem:[%s2 + $0x7b0] sm:$0xff]
    %v935 = vld [vmem:[%s2 + $0x7b8] sm:$0xff]
    %v936 = vld [vmem:[%s2 + $0x7c0] sm:$0xff]
    %v937 = vld [vmem:[%s2 + $0x7c8] sm:$0xff]
    %v938 = vld [vmem:[%s2 + $0x7d0] sm:$0xff]
    %v939 = vld [vmem:[%s2 + $0x7d8] sm:$0xff]
    %v940 = vld [vmem:[%s2 + $0x7e0] sm:$0xff]
    %v941 = vld [vmem:[%s2 + $0x7e8] sm:$0xff]
    %v942 = vld [vmem:[%s2 + $0x7f0] sm:$0xff]
    %v943 = vld [vmem:[%s2 + $0x7f8] sm:$0xff]
    %v944 = vld [vmem:[%s2 + $0x800] sm:$0xff]
    %v945 = vld [vmem:[%s2 + $0x808] sm:$0xff]
    %v946 = vld [vmem:[%s2 + $0x810] sm:$0xff]
    %v947 = vld [vmem:[%s2 + $0x818] sm:$0xff]
    %v948 = vld [vmem:[%s2 + $0x820] sm:$0xff]
    %v949 = vld [vmem:[%s2 + $0x828] sm:$0xff]
    %v950 = vld [vmem:[%s2 + $0x830] sm:$0xff]
    %v951 = vld [vmem:[%s2 + $0x838] sm:$0xff]
    %v952 = vld [vmem:[%s2 + $0x840] sm:$0xff]
    %v953 = vld [vmem:[%s2 + $0x848] sm:$0xff]
    %v954 = vld [vmem:[%s2 + $0x850] sm:$0xff]
    %v955 = vld [vmem:[%s2 + $0x858] sm:$0xff]
    %v956 = vld [vmem:[%s2 + $0x860] sm:$0xff]
    %v957 = vld [vmem:[%s2 + $0x868] sm:$0xff]
    %v958 = vld [vmem:[%s2 + $0x870] sm:$0xff]
    %v959 = vld [vmem:[%s2 + $0x878] sm:$0xff]
    %v960 = vld [vmem:[%s2 + $0x880] sm:$0xff]
    %v961 = vld [vmem:[%s2 + $0x888] sm:$0xff]
    %v962 = vld [vmem:[%s2 + $0x890] sm:$0xff]
    %v963 = vld [vmem:[%s2 + $0x898] sm:$0xff]
    %v964 = vld [vmem:[%s2 + $0x8a0] sm:$0xff]
    %v965 = vld [vmem:[%s2 + $0x8a8] sm:$0xff]
    %v966 = vld [vmem:[%s2 + $0x8b0] sm:$0xff]
    %v967 = vld [vmem:[%s2 + $0x8b8] sm:$0xff]
    %v968 = vld [vmem:[%s2 + $0x8c0] sm:$0xff]
    %v969 = vld [vmem:[%s2 + $0x8c8] sm:$0xff]
    %v970 = vld [vmem:[%s2 + $0x8d0] sm:$0xff]
    %v971 = vld [vmem:[%s2 + $0x8d8] sm:$0xff]
    %v972 = vld [vmem:[%s2 + $0x8e0] sm:$0xff]
    %v973 = vld [vmem:[%s2 + $0x8e8] sm:$0xff]
    %v974 = vld [vmem:[%s2 + $0x8f0] sm:$0xff]
    %v975 = vld [vmem:[%s2 + $0x8f8] sm:$0xff]
    %v976 = vld [vmem:[%s3] sm:$0xff]
    %v977 = vld [vmem:[%s3 + $0x8] sm:$0xff]
    %v978 = vld [vmem:[%s3 + $0x10] sm:$0xff]
    %v979 = vld [vmem:[%s3 + $0x18] sm:$0xff]
    %v980 = vld [vmem:[%s3 + $0x20] sm:$0xff]
    %v981 = vld [vmem:[%s3 + $0x28] sm:$0xff]
    %v982 = vld [vmem:[%s3 + $0x30] sm:$0xff]
    %v983 = vld [vmem:[%s3 + $0x38] sm:$0xff]
    %v984 = vld [vmem:[%s3 + $0x40] sm:$0xff]
    %v985 = vld [vmem:[%s3 + $0x48] sm:$0xff]
    %v986 = vld [vmem:[%s3 + $0x50] sm:$0xff]
    %v987 = vld [vmem:[%s3 + $0x58] sm:$0xff]
    %v988 = vld [vmem:[%s3 + $0x60] sm:$0xff]
    %v989 = vld [vmem:[%s3 + $0x68] sm:$0xff]
    %v990 = vld [vmem:[%s3 + $0x70] sm:$0xff]
    %v991 = vld [vmem:[%s3 + $0x78] sm:$0xff]
    %v992 = vld [vmem:[%s3 + $0x80] sm:$0xff]
    %v993 = vld [vmem:[%s3 + $0x88] sm:$0xff]
    %v994 = vld [vmem:[%s3 + $0x90] sm:$0xff]
    %v995 = vld [vmem:[%s3 + $0x98] sm:$0xff]
    %v996 = vld [vmem:[%s3 + $0xa0] sm:$0xff]
    %v997 = vld [vmem:[%s3 + $0xa8] sm:$0xff]
    %v998 = vld [vmem:[%s3 + $0xb0] sm:$0xff]
    %v999 = vld [vmem:[%s3 + $0xb8] sm:$0xff]
    %v1000 = vld [vmem:[%s3 + $0xc0] sm:$0xff]
    %v1001 = vld [vmem:[%s3 + $0xc8] sm:$0xff]
    %v1002 = vld [vmem:[%s3 + $0xd0] sm:$0xff]
    %v1003 = vld [vmem:[%s3 + $0xd8] sm:$0xff]
    %v1004 = vld [vmem:[%s3 + $0xe0] sm:$0xff]
    %v1005 = vld [vmem:[%s3 + $0xe8] sm:$0xff]
    %v1006 = vld [vmem:[%s3 + $0xf0] sm:$0xff]
    %v1007 = vld [vmem:[%s3 + $0xf8] sm:$0xff]
    %v1008 = vld [vmem:[%s3 + $0x100] sm:$0xff]
    %v1009 = vld [vmem:[%s3 + $0x108] sm:$0xff]
    %v1010 = vld [vmem:[%s3 + $0x110] sm:$0xff]
    %v1011 = vld [vmem:[%s3 + $0x118] sm:$0xff]
    %v1012 = vld [vmem:[%s3 + $0x120] sm:$0xff]
    %v1013 = vld [vmem:[%s3 + $0x128] sm:$0xff]
    %v1014 = vld [vmem:[%s3 + $0x130] sm:$0xff]
    %v1015 = vld [vmem:[%s3 + $0x138] sm:$0xff]
    %v1016 = vld [vmem:[%s3 + $0x140] sm:$0xff]
    %v1017 = vld [vmem:[%s3 + $0x148] sm:$0xff]
    %v1018 = vld [vmem:[%s3 + $0x150] sm:$0xff]
    %v1019 = vld [vmem:[%s3 + $0x158] sm:$0xff]
    %v1020 = vld [vmem:[%s3 + $0x160] sm:$0xff]
    %v1021 = vld [vmem:[%s3 + $0x168] sm:$0xff]
    %v1022 = vld [vmem:[%s3 + $0x170] sm:$0xff]
    %v1023 = vld [vmem:[%s3 + $0x178] sm:$0xff]
    %v1024 = vld [vmem:[%s3 + $0x180] sm:$0xff]
    %v1025 = vld [vmem:[%s3 + $0x188] sm:$0xff]
    %v1026 = vld [vmem:[%s3 + $0x190] sm:$0xff]
    %v1027 = vld [vmem:[%s3 + $0x198] sm:$0xff]
    %v1028 = vld [vmem:[%s3 + $0x1a0] sm:$0xff]
    %v1029 = vld [vmem:[%s3 + $0x1a8] sm:$0xff]
    %v1030 = vld [vmem:[%s3 + $0x1b0] sm:$0xff]
    %v1031 = vld [vmem:[%s3 + $0x1b8] sm:$0xff]
    %v1032 = vld [vmem:[%s3 + $0x1c0] sm:$0xff]
    %v1033 = vld [vmem:[%s3 + $0x1c8] sm:$0xff]
    %v1034 = vld [vmem:[%s3 + $0x1d0] sm:$0xff]
    %v1035 = vld [vmem:[%s3 + $0x1d8] sm:$0xff]
    %v1036 = vld [vmem:[%s3 + $0x1e0] sm:$0xff]
    %v1037 = vld [vmem:[%s3 + $0x1e8] sm:$0xff]
    %v1038 = vld [vmem:[%s3 + $0x1f0] sm:$0xff]
    %v1039 = vld [vmem:[%s3 + $0x1f8] sm:$0xff]
    %v1040 = vld [vmem:[%s3 + $0x200] sm:$0xff]
    %v1041 = vld [vmem:[%s3 + $0x208] sm:$0xff]
    %v1042 = vld [vmem:[%s3 + $0x210] sm:$0xff]
    %v1043 = vld [vmem:[%s3 + $0x218] sm:$0xff]
    %v1044 = vld [vmem:[%s3 + $0x220] sm:$0xff]
    %v1045 = vld [vmem:[%s3 + $0x228] sm:$0xff]
    %v1046 = vld [vmem:[%s3 + $0x230] sm:$0xff]
    %v1047 = vld [vmem:[%s3 + $0x238] sm:$0xff]
    %v1048 = vld [vmem:[%s3 + $0x240] sm:$0xff]
    %v1049 = vld [vmem:[%s3 + $0x248] sm:$0xff]
    %v1050 = vld [vmem:[%s3 + $0x250] sm:$0xff]
    %v1051 = vld [vmem:[%s3 + $0x258] sm:$0xff]
    %v1052 = vld [vmem:[%s3 + $0x260] sm:$0xff]
    %v1053 = vld [vmem:[%s3 + $0x268] sm:$0xff]
    %v1054 = vld [vmem:[%s3 + $0x270] sm:$0xff]
    %v1055 = vld [vmem:[%s3 + $0x278] sm:$0xff]
    %v1056 = vld [vmem:[%s3 + $0x280] sm:$0xff]
    %v1057 = vld [vmem:[%s3 + $0x288] sm:$0xff]
    %v1058 = vld [vmem:[%s3 + $0x290] sm:$0xff]
    %v1059 = vld [vmem:[%s3 + $0x298] sm:$0xff]
    %v1060 = vld [vmem:[%s3 + $0x2a0] sm:$0xff]
    %v1061 = vld [vmem:[%s3 + $0x2a8] sm:$0xff]
    %v1062 = vld [vmem:[%s3 + $0x2b0] sm:$0xff]
    %v1063 = vld [vmem:[%s3 + $0x2b8] sm:$0xff]
    %v1064 = vld [vmem:[%s3 + $0x2c0] sm:$0xff]
    %v1065 = vld [vmem:[%s3 + $0x2c8] sm:$0xff]
    %v1066 = vld [vmem:[%s3 + $0x2d0] sm:$0xff]
    %v1067 = vld [vmem:[%s3 + $0x2d8] sm:$0xff]
    %v1068 = vld [vmem:[%s3 + $0x2e0] sm:$0xff]
    %v1069 = vld [vmem:[%s3 + $0x2e8] sm:$0xff]
    %v1070 = vld [vmem:[%s3 + $0x2f0] sm:$0xff]
    %v1071 = vld [vmem:[%s3 + $0x2f8] sm:$0xff]
    %v1072 = vld [vmem:[%s3 + $0x300] sm:$0xff]
    %v1073 = vld [vmem:[%s3 + $0x308] sm:$0xff]
    %v1074 = vld [vmem:[%s3 + $0x310] sm:$0xff]
    %v1075 = vld [vmem:[%s3 + $0x318] sm:$0xff]
    %v1076 = vld [vmem:[%s3 + $0x320] sm:$0xff]
    %v1077 = vld [vmem:[%s3 + $0x328] sm:$0xff]
    %v1078 = vld [vmem:[%s3 + $0x330] sm:$0xff]
    %v1079 = vld [vmem:[%s3 + $0x338] sm:$0xff]
    %v1080 = vld [vmem:[%s3 + $0x340] sm:$0xff]
    %v1081 = vld [vmem:[%s3 + $0x348] sm:$0xff]
    %v1082 = vld [vmem:[%s3 + $0x350] sm:$0xff]
    %v1083 = vld [vmem:[%s3 + $0x358] sm:$0xff]
    %v1084 = vld [vmem:[%s3 + $0x360] sm:$0xff]
    %v1085 = vld [vmem:[%s3 + $0x368] sm:$0xff]
    %v1086 = vld [vmem:[%s3 + $0x370] sm:$0xff]
    %v1087 = vld [vmem:[%s3 + $0x378] sm:$0xff]
    %v1088 = vld [vmem:[%s3 + $0x380] sm:$0xff]
    %v1089 = vld [vmem:[%s3 + $0x388] sm:$0xff]
    %v1090 = vld [vmem:[%s3 + $0x390] sm:$0xff]
    %v1091 = vld [vmem:[%s3 + $0x398] sm:$0xff]
    %v1092 = vld [vmem:[%s3 + $0x3a0] sm:$0xff]
    %v1093 = vld [vmem:[%s3 + $0x3a8] sm:$0xff]
    %v1094 = vld [vmem:[%s3 + $0x3b0] sm:$0xff]
    %v1095 = vld [vmem:[%s3 + $0x3b8] sm:$0xff]
    %v1096 = vld [vmem:[%s3 + $0x3c0] sm:$0xff]
    %v1097 = vld [vmem:[%s3 + $0x3c8] sm:$0xff]
    %v1098 = vld [vmem:[%s3 + $0x3d0] sm:$0xff]
    %v1099 = vld [vmem:[%s3 + $0x3d8] sm:$0xff]
    %v1100 = vld [vmem:[%s3 + $0x3e0] sm:$0xff]
    %v1101 = vld [vmem:[%s3 + $0x3e8] sm:$0xff]
    %v1102 = vld [vmem:[%s3 + $0x3f0] sm:$0xff]
    %v1103 = vld [vmem:[%s3 + $0x3f8] sm:$0xff]
    %v1104 = vld [vmem:[%s3 + $0x400] sm:$0xff]
    %v1105 = vld [vmem:[%s3 + $0x408] sm:$0xff]
    %v1106 = vld [vmem:[%s3 + $0x410] sm:$0xff]
    %v1107 = vld [vmem:[%s3 + $0x418] sm:$0xff]
    %v1108 = vld [vmem:[%s3 + $0x420] sm:$0xff]
    %v1109 = vld [vmem:[%s3 + $0x428] sm:$0xff]
    %v1110 = vld [vmem:[%s3 + $0x430] sm:$0xff]
    %v1111 = vld [vmem:[%s3 + $0x438] sm:$0xff]
    %v1112 = vld [vmem:[%s3 + $0x440] sm:$0xff]
    %v1113 = vld [vmem:[%s3 + $0x448] sm:$0xff]
    %v1114 = vld [vmem:[%s3 + $0x450] sm:$0xff]
    %v1115 = vld [vmem:[%s3 + $0x458] sm:$0xff]
    %v1116 = vld [vmem:[%s3 + $0x460] sm:$0xff]
    %v1117 = vld [vmem:[%s3 + $0x468] sm:$0xff]
    %v1118 = vld [vmem:[%s3 + $0x470] sm:$0xff]
    %v1119 = vld [vmem:[%s3 + $0x478] sm:$0xff]
    %v1120 = vld [vmem:[%s3 + $0x480] sm:$0xff]
    %v1121 = vld [vmem:[%s3 + $0x488] sm:$0xff]
    %v1122 = vld [vmem:[%s3 + $0x490] sm:$0xff]
    %v1123 = vld [vmem:[%s3 + $0x498] sm:$0xff]
    %v1124 = vld [vmem:[%s3 + $0x4a0] sm:$0xff]
    %v1125 = vld [vmem:[%s3 + $0x4a8] sm:$0xff]
    %v1126 = vld [vmem:[%s3 + $0x4b0] sm:$0xff]
    %v1127 = vld [vmem:[%s3 + $0x4b8] sm:$0xff]
    %v1128 = vld [vmem:[%s3 + $0x4c0] sm:$0xff]
    %v1129 = vld [vmem:[%s3 + $0x4c8] sm:$0xff]
    %v1130 = vld [vmem:[%s3 + $0x4d0] sm:$0xff]
    %v1131 = vld [vmem:[%s3 + $0x4d8] sm:$0xff]
    %v1132 = vld [vmem:[%s3 + $0x4e0] sm:$0xff]
    %v1133 = vld [vmem:[%s3 + $0x4e8] sm:$0xff]
    %v1134 = vld [vmem:[%s3 + $0x4f0] sm:$0xff]
    %v1135 = vld [vmem:[%s3 + $0x4f8] sm:$0xff]
    %v1136 = vld [vmem:[%s3 + $0x500] sm:$0xff]
    %v1137 = vld [vmem:[%s3 + $0x508] sm:$0xff]
    %v1138 = vld [vmem:[%s3 + $0x510] sm:$0xff]
    %v1139 = vld [vmem:[%s3 + $0x518] sm:$0xff]
    %v1140 = vld [vmem:[%s3 + $0x520] sm:$0xff]
    %v1141 = vld [vmem:[%s3 + $0x528] sm:$0xff]
    %v1142 = vld [vmem:[%s3 + $0x530] sm:$0xff]
    %v1143 = vld [vmem:[%s3 + $0x538] sm:$0xff]
    %v1144 = vld [vmem:[%s3 + $0x540] sm:$0xff]
    %v1145 = vld [vmem:[%s3 + $0x548] sm:$0xff]
    %v1146 = vld [vmem:[%s3 + $0x550] sm:$0xff]
    %v1147 = vld [vmem:[%s3 + $0x558] sm:$0xff]
    %v1148 = vld [vmem:[%s3 + $0x560] sm:$0xff]
    %v1149 = vld [vmem:[%s3 + $0x568] sm:$0xff]
    %v1150 = vld [vmem:[%s3 + $0x570] sm:$0xff]
    %v1151 = vld [vmem:[%s3 + $0x578] sm:$0xff]
    %v1152 = vld [vmem:[%s3 + $0x580] sm:$0xff]
    %v1153 = vld [vmem:[%s3 + $0x588] sm:$0xff]
    %v1154 = vld [vmem:[%s3 + $0x590] sm:$0xff]
    %v1155 = vld [vmem:[%s3 + $0x598] sm:$0xff]
    %v1156 = vld [vmem:[%s3 + $0x5a0] sm:$0xff]
    %v1157 = vld [vmem:[%s3 + $0x5a8] sm:$0xff]
    %v1158 = vld [vmem:[%s3 + $0x5b0] sm:$0xff]
    %v1159 = vld [vmem:[%s3 + $0x5b8] sm:$0xff]
    %v1160 = vld [vmem:[%s3 + $0x5c0] sm:$0xff]
    %v1161 = vld [vmem:[%s3 + $0x5c8] sm:$0xff]
    %v1162 = vld [vmem:[%s3 + $0x5d0] sm:$0xff]
    %v1163 = vld [vmem:[%s3 + $0x5d8] sm:$0xff]
    %v1164 = vld [vmem:[%s3 + $0x5e0] sm:$0xff]
    %v1165 = vld [vmem:[%s3 + $0x5e8] sm:$0xff]
    %v1166 = vld [vmem:[%s3 + $0x5f0] sm:$0xff]
    %v1167 = vld [vmem:[%s3 + $0x5f8] sm:$0xff]
    %v1168 = vld [vmem:[%s3 + $0x600] sm:$0xff]
    %v1169 = vld [vmem:[%s3 + $0x608] sm:$0xff]
    %v1170 = vld [vmem:[%s3 + $0x610] sm:$0xff]
    %v1171 = vld [vmem:[%s3 + $0x618] sm:$0xff]
    %v1172 = vld [vmem:[%s3 + $0x620] sm:$0xff]
    %v1173 = vld [vmem:[%s3 + $0x628] sm:$0xff]
    %v1174 = vld [vmem:[%s3 + $0x630] sm:$0xff]
    %v1175 = vld [vmem:[%s3 + $0x638] sm:$0xff]
    %v1176 = vld [vmem:[%s3 + $0x640] sm:$0xff]
    %v1177 = vld [vmem:[%s3 + $0x648] sm:$0xff]
    %v1178 = vld [vmem:[%s3 + $0x650] sm:$0xff]
    %v1179 = vld [vmem:[%s3 + $0x658] sm:$0xff]
    %v1180 = vld [vmem:[%s3 + $0x660] sm:$0xff]
    %v1181 = vld [vmem:[%s3 + $0x668] sm:$0xff]
    %v1182 = vld [vmem:[%s3 + $0x670] sm:$0xff]
    %v1183 = vld [vmem:[%s3 + $0x678] sm:$0xff]
    %v1184 = vld [vmem:[%s3 + $0x680] sm:$0xff]
    %v1185 = vld [vmem:[%s3 + $0x688] sm:$0xff]
    %v1186 = vld [vmem:[%s3 + $0x690] sm:$0xff]
    %v1187 = vld [vmem:[%s3 + $0x698] sm:$0xff]
    %v1188 = vld [vmem:[%s3 + $0x6a0] sm:$0xff]
    %v1189 = vld [vmem:[%s3 + $0x6a8] sm:$0xff]
    %v1190 = vld [vmem:[%s3 + $0x6b0] sm:$0xff]
    %v1191 = vld [vmem:[%s3 + $0x6b8] sm:$0xff]
    %v1192 = vld [vmem:[%s3 + $0x6c0] sm:$0xff]
    %v1193 = vld [vmem:[%s3 + $0x6c8] sm:$0xff]
    %v1194 = vld [vmem:[%s3 + $0x6d0] sm:$0xff]
    %v1195 = vld [vmem:[%s3 + $0x6d8] sm:$0xff]
    %v1196 = vld [vmem:[%s3 + $0x6e0] sm:$0xff]
    %v1197 = vld [vmem:[%s3 + $0x6e8] sm:$0xff]
    %v1198 = vld [vmem:[%s3 + $0x6f0] sm:$0xff]
    %v1199 = vld [vmem:[%s3 + $0x6f8] sm:$0xff]
    %v1200 = vld [vmem:[%s3 + $0x700] sm:$0xff]
    %v1201 = vld [vmem:[%s3 + $0x708] sm:$0xff]
    %v1202 = vld [vmem:[%s3 + $0x710] sm:$0xff]
    %v1203 = vld [vmem:[%s3 + $0x718] sm:$0xff]
    %v1204 = vld [vmem:[%s3 + $0x720] sm:$0xff]
    %v1205 = vld [vmem:[%s3 + $0x728] sm:$0xff]
    %v1206 = vld [vmem:[%s3 + $0x730] sm:$0xff]
    %v1207 = vld [vmem:[%s3 + $0x738] sm:$0xff]
    %v1208 = vld [vmem:[%s3 + $0x740] sm:$0xff]
    %v1209 = vld [vmem:[%s3 + $0x748] sm:$0xff]
    %v1210 = vld [vmem:[%s3 + $0x750] sm:$0xff]
    %v1211 = vld [vmem:[%s3 + $0x758] sm:$0xff]
    %v1212 = vld [vmem:[%s3 + $0x760] sm:$0xff]
    %v1213 = vld [vmem:[%s3 + $0x768] sm:$0xff]
    %v1214 = vld [vmem:[%s3 + $0x770] sm:$0xff]
    %v1215 = vld [vmem:[%s3 + $0x778] sm:$0xff]
    %v1216 = vld [vmem:[%s3 + $0x780] sm:$0xff]
    %v1217 = vld [vmem:[%s3 + $0x788] sm:$0xff]
    %v1218 = vld [vmem:[%s3 + $0x790] sm:$0xff]
    %v1219 = vld [vmem:[%s3 + $0x798] sm:$0xff]
    %v1220 = vld [vmem:[%s3 + $0x7a0] sm:$0xff]
    %v1221 = vld [vmem:[%s3 + $0x7a8] sm:$0xff]
    %v1222 = vld [vmem:[%s3 + $0x7b0] sm:$0xff]
    %v1223 = vld [vmem:[%s3 + $0x7b8] sm:$0xff]
    %v1224 = vld [vmem:[%s3 + $0x7c0] sm:$0xff]
    %v1225 = vld [vmem:[%s3 + $0x7c8] sm:$0xff]
    %v1226 = vld [vmem:[%s3 + $0x7d0] sm:$0xff]
    %v1227 = vld [vmem:[%s3 + $0x7d8] sm:$0xff]
    %v1228 = vld [vmem:[%s3 + $0x7e0] sm:$0xff]
    %v1229 = vld [vmem:[%s3 + $0x7e8] sm:$0xff]
    %v1230 = vld [vmem:[%s3 + $0x7f0] sm:$0xff]
    %v1231 = vld [vmem:[%s3 + $0x7f8] sm:$0xff]
    %v1232 = vld [vmem:[%s3 + $0x800] sm:$0xff]
    %v1233 = vld [vmem:[%s3 + $0x808] sm:$0xff]
    %v1234 = vld [vmem:[%s3 + $0x810] sm:$0xff]
    %v1235 = vld [vmem:[%s3 + $0x818] sm:$0xff]
    %v1236 = vld [vmem:[%s3 + $0x820] sm:$0xff]
    %v1237 = vld [vmem:[%s3 + $0x828] sm:$0xff]
    %v1238 = vld [vmem:[%s3 + $0x830] sm:$0xff]
    %v1239 = vld [vmem:[%s3 + $0x838] sm:$0xff]
    %v1240 = vld [vmem:[%s3 + $0x840] sm:$0xff]
    %v1241 = vld [vmem:[%s3 + $0x848] sm:$0xff]
    %v1242 = vld [vmem:[%s3 + $0x850] sm:$0xff]
    %v1243 = vld [vmem:[%s3 + $0x858] sm:$0xff]
    %v1244 = vld [vmem:[%s3 + $0x860] sm:$0xff]
    %v1245 = vld [vmem:[%s3 + $0x868] sm:$0xff]
    %v1246 = vld [vmem:[%s3 + $0x870] sm:$0xff]
    %v1247 = vld [vmem:[%s3 + $0x878] sm:$0xff]
    %v1248 = vld [vmem:[%s3 + $0x880] sm:$0xff]
    %v1249 = vld [vmem:[%s3 + $0x888] sm:$0xff]
    %v1250 = vld [vmem:[%s3 + $0x890] sm:$0xff]
    %v1251 = vld [vmem:[%s3 + $0x898] sm:$0xff]
    %v1252 = vld [vmem:[%s3 + $0x8a0] sm:$0xff]
    %v1253 = vld [vmem:[%s3 + $0x8a8] sm:$0xff]
    %v1254 = vld [vmem:[%s3 + $0x8b0] sm:$0xff]
    %v1255 = vld [vmem:[%s3 + $0x8b8] sm:$0xff]
    %v1256 = vld [vmem:[%s3 + $0x8c0] sm:$0xff]
    %v1257 = vld [vmem:[%s3 + $0x8c8] sm:$0xff]
    %v1258 = vld [vmem:[%s3 + $0x8d0] sm:$0xff]
    %v1259 = vld [vmem:[%s3 + $0x8d8] sm:$0xff]
    %v1260 = vld [vmem:[%s3 + $0x8e0] sm:$0xff]
    %v1261 = vld [vmem:[%s3 + $0x8e8] sm:$0xff]
    %v1262 = vld [vmem:[%s3 + $0x8f0] sm:$0xff]
    %v1263 = vld [vmem:[%s3 + $0x8f8] sm:$0xff]
    %v1552 = vunpack.c.l.b16 %v976
    %v1553 = vunpack.c.h.b16 %v976
    %v1554 = vunpack.c.l.b16 %v977
    %v1555 = vunpack.c.h.b16 %v977
    %v1556 = vunpack.c.l.b16 %v978
    %v1557 = vunpack.c.h.b16 %v978
    %v1558 = vunpack.c.l.b16 %v979
    %v1559 = vunpack.c.h.b16 %v979
    %v1560 = vunpack.c.l.b16 %v980
    %v1561 = vunpack.c.h.b16 %v980
    %v1562 = vunpack.c.l.b16 %v981
    %v1563 = vunpack.c.h.b16 %v981
    %v1564 = vunpack.c.l.b16 %v982
    %v1565 = vunpack.c.h.b16 %v982
    %v1566 = vunpack.c.l.b16 %v983
    %v1567 = vunpack.c.h.b16 %v983
    %v1568 = vunpack.c.l.b16 %v984
    %v1569 = vunpack.c.h.b16 %v984
    %v1570 = vunpack.c.l.b16 %v985
    %v1571 = vunpack.c.h.b16 %v985
    %v1572 = vunpack.c.l.b16 %v986
    %v1573 = vunpack.c.h.b16 %v986
    %v1574 = vunpack.c.l.b16 %v987
    %v1575 = vunpack.c.h.b16 %v987
    %v1576 = vunpack.c.l.b16 %v988
    %v1577 = vunpack.c.h.b16 %v988
    %v1578 = vunpack.c.l.b16 %v989
    %v1579 = vunpack.c.h.b16 %v989
    %v1580 = vunpack.c.l.b16 %v990
    %v1581 = vunpack.c.h.b16 %v990
    %v1582 = vunpack.c.l.b16 %v991
    %v1583 = vunpack.c.h.b16 %v991
    %v1584 = vunpack.c.l.b16 %v992
    %v1585 = vunpack.c.h.b16 %v992
    %v1586 = vunpack.c.l.b16 %v993
    %v1587 = vunpack.c.h.b16 %v993
    %v1588 = vunpack.c.l.b16 %v994
    %v1589 = vunpack.c.h.b16 %v994
    %v1590 = vunpack.c.l.b16 %v995
    %v1591 = vunpack.c.h.b16 %v995
    %v1592 = vunpack.c.l.b16 %v996
    %v1593 = vunpack.c.h.b16 %v996
    %v1594 = vunpack.c.l.b16 %v997
    %v1595 = vunpack.c.h.b16 %v997
    %v1596 = vunpack.c.l.b16 %v998
    %v1597 = vunpack.c.h.b16 %v998
    %v1598 = vunpack.c.l.b16 %v999
    %v1599 = vunpack.c.h.b16 %v999
    %v1600 = vunpack.c.l.b16 %v1000
    %v1601 = vunpack.c.h.b16 %v1000
    %v1602 = vunpack.c.l.b16 %v1001
    %v1603 = vunpack.c.h.b16 %v1001
    %v1604 = vunpack.c.l.b16 %v1002
    %v1605 = vunpack.c.h.b16 %v1002
    %v1606 = vunpack.c.l.b16 %v1003
    %v1607 = vunpack.c.h.b16 %v1003
    %v1608 = vunpack.c.l.b16 %v1004
    %v1609 = vunpack.c.h.b16 %v1004
    %v1610 = vunpack.c.l.b16 %v1005
    %v1611 = vunpack.c.h.b16 %v1005
    %v1612 = vunpack.c.l.b16 %v1006
    %v1613 = vunpack.c.h.b16 %v1006
    %v1614 = vunpack.c.l.b16 %v1007
    %v1615 = vunpack.c.h.b16 %v1007
    %v1616 = vunpack.c.l.b16 %v1008
    %v1617 = vunpack.c.h.b16 %v1008
    %v1618 = vunpack.c.l.b16 %v1009
    %v1619 = vunpack.c.h.b16 %v1009
    %v1620 = vunpack.c.l.b16 %v1010
    %v1621 = vunpack.c.h.b16 %v1010
    %v1622 = vunpack.c.l.b16 %v1011
    %v1623 = vunpack.c.h.b16 %v1011
    %v1624 = vunpack.c.l.b16 %v1012
    %v1625 = vunpack.c.h.b16 %v1012
    %v1626 = vunpack.c.l.b16 %v1013
    %v1627 = vunpack.c.h.b16 %v1013
    %v1628 = vunpack.c.l.b16 %v1014
    %v1629 = vunpack.c.h.b16 %v1014
    %v1630 = vunpack.c.l.b16 %v1015
    %v1631 = vunpack.c.h.b16 %v1015
    %v1632 = vunpack.c.l.b16 %v1016
    %v1633 = vunpack.c.h.b16 %v1016
    %v1634 = vunpack.c.l.b16 %v1017
    %v1635 = vunpack.c.h.b16 %v1017
    %v1636 = vunpack.c.l.b16 %v1018
    %v1637 = vunpack.c.h.b16 %v1018
    %v1638 = vunpack.c.l.b16 %v1019
    %v1639 = vunpack.c.h.b16 %v1019
    %v1640 = vunpack.c.l.b16 %v1020
    %v1641 = vunpack.c.h.b16 %v1020
    %v1642 = vunpack.c.l.b16 %v1021
    %v1643 = vunpack.c.h.b16 %v1021
    %v1644 = vunpack.c.l.b16 %v1022
    %v1645 = vunpack.c.h.b16 %v1022
    %v1646 = vunpack.c.l.b16 %v1023
    %v1647 = vunpack.c.h.b16 %v1023
    %v1648 = vunpack.c.l.b16 %v1024
    %v1649 = vunpack.c.h.b16 %v1024
    %v1650 = vunpack.c.l.b16 %v1025
    %v1651 = vunpack.c.h.b16 %v1025
    %v1652 = vunpack.c.l.b16 %v1026
    %v1653 = vunpack.c.h.b16 %v1026
    %v1654 = vunpack.c.l.b16 %v1027
    %v1655 = vunpack.c.h.b16 %v1027
    %v1656 = vunpack.c.l.b16 %v1028
    %v1657 = vunpack.c.h.b16 %v1028
    %v1658 = vunpack.c.l.b16 %v1029
    %v1659 = vunpack.c.h.b16 %v1029
    %v1660 = vunpack.c.l.b16 %v1030
    %v1661 = vunpack.c.h.b16 %v1030
    %v1662 = vunpack.c.l.b16 %v1031
    %v1663 = vunpack.c.h.b16 %v1031
    %v1664 = vunpack.c.l.b16 %v1032
    %v1665 = vunpack.c.h.b16 %v1032
    %v1666 = vunpack.c.l.b16 %v1033
    %v1667 = vunpack.c.h.b16 %v1033
    %v1668 = vunpack.c.l.b16 %v1034
    %v1669 = vunpack.c.h.b16 %v1034
    %v1670 = vunpack.c.l.b16 %v1035
    %v1671 = vunpack.c.h.b16 %v1035
    %v1672 = vunpack.c.l.b16 %v1036
    %v1673 = vunpack.c.h.b16 %v1036
    %v1674 = vunpack.c.l.b16 %v1037
    %v1675 = vunpack.c.h.b16 %v1037
    %v1676 = vunpack.c.l.b16 %v1038
    %v1677 = vunpack.c.h.b16 %v1038
    %v1678 = vunpack.c.l.b16 %v1039
    %v1679 = vunpack.c.h.b16 %v1039
    %v1680 = vunpack.c.l.b16 %v1040
    %v1681 = vunpack.c.h.b16 %v1040
    %v1682 = vunpack.c.l.b16 %v1041
    %v1683 = vunpack.c.h.b16 %v1041
    %v1684 = vunpack.c.l.b16 %v1042
    %v1685 = vunpack.c.h.b16 %v1042
    %v1686 = vunpack.c.l.b16 %v1043
    %v1687 = vunpack.c.h.b16 %v1043
    %v1688 = vunpack.c.l.b16 %v1044
    %v1689 = vunpack.c.h.b16 %v1044
    %v1690 = vunpack.c.l.b16 %v1045
    %v1691 = vunpack.c.h.b16 %v1045
    %v1692 = vunpack.c.l.b16 %v1046
    %v1693 = vunpack.c.h.b16 %v1046
    %v1694 = vunpack.c.l.b16 %v1047
    %v1695 = vunpack.c.h.b16 %v1047
    %v1696 = vunpack.c.l.b16 %v1048
    %v1697 = vunpack.c.h.b16 %v1048
    %v1698 = vunpack.c.l.b16 %v1049
    %v1699 = vunpack.c.h.b16 %v1049
    %v1700 = vunpack.c.l.b16 %v1050
    %v1701 = vunpack.c.h.b16 %v1050
    %v1702 = vunpack.c.l.b16 %v1051
    %v1703 = vunpack.c.h.b16 %v1051
    %v1704 = vunpack.c.l.b16 %v1052
    %v1705 = vunpack.c.h.b16 %v1052
    %v1706 = vunpack.c.l.b16 %v1053
    %v1707 = vunpack.c.h.b16 %v1053
    %v1708 = vunpack.c.l.b16 %v1054
    %v1709 = vunpack.c.h.b16 %v1054
    %v1710 = vunpack.c.l.b16 %v1055
    %v1711 = vunpack.c.h.b16 %v1055
    %v1712 = vunpack.c.l.b16 %v1056
    %v1713 = vunpack.c.h.b16 %v1056
    %v1714 = vunpack.c.l.b16 %v1057
    %v1715 = vunpack.c.h.b16 %v1057
    %v1716 = vunpack.c.l.b16 %v1058
    %v1717 = vunpack.c.h.b16 %v1058
    %v1718 = vunpack.c.l.b16 %v1059
    %v1719 = vunpack.c.h.b16 %v1059
    %v1720 = vunpack.c.l.b16 %v1060
    %v1721 = vunpack.c.h.b16 %v1060
    %v1722 = vunpack.c.l.b16 %v1061
    %v1723 = vunpack.c.h.b16 %v1061
    %v1724 = vunpack.c.l.b16 %v1062
    %v1725 = vunpack.c.h.b16 %v1062
    %v1726 = vunpack.c.l.b16 %v1063
    %v1727 = vunpack.c.h.b16 %v1063
    %v1728 = vunpack.c.l.b16 %v1064
    %v1729 = vunpack.c.h.b16 %v1064
    %v1730 = vunpack.c.l.b16 %v1065
    %v1731 = vunpack.c.h.b16 %v1065
    %v1732 = vunpack.c.l.b16 %v1066
    %v1733 = vunpack.c.h.b16 %v1066
    %v1734 = vunpack.c.l.b16 %v1067
    %v1735 = vunpack.c.h.b16 %v1067
    %v1736 = vunpack.c.l.b16 %v1068
    %v1737 = vunpack.c.h.b16 %v1068
    %v1738 = vunpack.c.l.b16 %v1069
    %v1739 = vunpack.c.h.b16 %v1069
    %v1740 = vunpack.c.l.b16 %v1070
    %v1741 = vunpack.c.h.b16 %v1070
    %v1742 = vunpack.c.l.b16 %v1071
    %v1743 = vunpack.c.h.b16 %v1071
    %v1744 = vunpack.c.l.b16 %v1072
    %v1745 = vunpack.c.h.b16 %v1072
    %v1746 = vunpack.c.l.b16 %v1073
    %v1747 = vunpack.c.h.b16 %v1073
    %v1748 = vunpack.c.l.b16 %v1074
    %v1749 = vunpack.c.h.b16 %v1074
    %v1750 = vunpack.c.l.b16 %v1075
    %v1751 = vunpack.c.h.b16 %v1075
    %v1752 = vunpack.c.l.b16 %v1076
    %v1753 = vunpack.c.h.b16 %v1076
    %v1754 = vunpack.c.l.b16 %v1077
    %v1755 = vunpack.c.h.b16 %v1077
    %v1756 = vunpack.c.l.b16 %v1078
    %v1757 = vunpack.c.h.b16 %v1078
    %v1758 = vunpack.c.l.b16 %v1079
    %v1759 = vunpack.c.h.b16 %v1079
    %v1760 = vunpack.c.l.b16 %v1080
    %v1761 = vunpack.c.h.b16 %v1080
    %v1762 = vunpack.c.l.b16 %v1081
    %v1763 = vunpack.c.h.b16 %v1081
    %v1764 = vunpack.c.l.b16 %v1082
    %v1765 = vunpack.c.h.b16 %v1082
    %v1766 = vunpack.c.l.b16 %v1083
    %v1767 = vunpack.c.h.b16 %v1083
    %v1768 = vunpack.c.l.b16 %v1084
    %v1769 = vunpack.c.h.b16 %v1084
    %v1770 = vunpack.c.l.b16 %v1085
    %v1771 = vunpack.c.h.b16 %v1085
    %v1772 = vunpack.c.l.b16 %v1086
    %v1773 = vunpack.c.h.b16 %v1086
    %v1774 = vunpack.c.l.b16 %v1087
    %v1775 = vunpack.c.h.b16 %v1087
    %v1776 = vunpack.c.l.b16 %v1088
    %v1777 = vunpack.c.h.b16 %v1088
    %v1778 = vunpack.c.l.b16 %v1089
    %v1779 = vunpack.c.h.b16 %v1089
    %v1780 = vunpack.c.l.b16 %v1090
    %v1781 = vunpack.c.h.b16 %v1090
    %v1782 = vunpack.c.l.b16 %v1091
    %v1783 = vunpack.c.h.b16 %v1091
    %v1784 = vunpack.c.l.b16 %v1092
    %v1785 = vunpack.c.h.b16 %v1092
    %v1786 = vunpack.c.l.b16 %v1093
    %v1787 = vunpack.c.h.b16 %v1093
    %v1788 = vunpack.c.l.b16 %v1094
    %v1789 = vunpack.c.h.b16 %v1094
    %v1790 = vunpack.c.l.b16 %v1095
    %v1791 = vunpack.c.h.b16 %v1095
    %v1792 = vunpack.c.l.b16 %v1096
    %v1793 = vunpack.c.h.b16 %v1096
    %v1794 = vunpack.c.l.b16 %v1097
    %v1795 = vunpack.c.h.b16 %v1097
    %v1796 = vunpack.c.l.b16 %v1098
    %v1797 = vunpack.c.h.b16 %v1098
    %v1798 = vunpack.c.l.b16 %v1099
    %v1799 = vunpack.c.h.b16 %v1099
    %v1800 = vunpack.c.l.b16 %v1100
    %v1801 = vunpack.c.h.b16 %v1100
    %v1802 = vunpack.c.l.b16 %v1101
    %v1803 = vunpack.c.h.b16 %v1101
    %v1804 = vunpack.c.l.b16 %v1102
    %v1805 = vunpack.c.h.b16 %v1102
    %v1806 = vunpack.c.l.b16 %v1103
    %v1807 = vunpack.c.h.b16 %v1103
    %v1808 = vunpack.c.l.b16 %v1104
    %v1809 = vunpack.c.h.b16 %v1104
    %v1810 = vunpack.c.l.b16 %v1105
    %v1811 = vunpack.c.h.b16 %v1105
    %v1812 = vunpack.c.l.b16 %v1106
    %v1813 = vunpack.c.h.b16 %v1106
    %v1814 = vunpack.c.l.b16 %v1107
    %v1815 = vunpack.c.h.b16 %v1107
    %v1816 = vunpack.c.l.b16 %v1108
    %v1817 = vunpack.c.h.b16 %v1108
    %v1818 = vunpack.c.l.b16 %v1109
    %v1819 = vunpack.c.h.b16 %v1109
    %v1820 = vunpack.c.l.b16 %v1110
    %v1821 = vunpack.c.h.b16 %v1110
    %v1822 = vunpack.c.l.b16 %v1111
    %v1823 = vunpack.c.h.b16 %v1111
    %v1824 = vunpack.c.l.b16 %v1112
    %v1825 = vunpack.c.h.b16 %v1112
    %v1826 = vunpack.c.l.b16 %v1113
    %v1827 = vunpack.c.h.b16 %v1113
    %v1828 = vunpack.c.l.b16 %v1114
    %v1829 = vunpack.c.h.b16 %v1114
    %v1830 = vunpack.c.l.b16 %v1115
    %v1831 = vunpack.c.h.b16 %v1115
    %v1832 = vunpack.c.l.b16 %v1116
    %v1833 = vunpack.c.h.b16 %v1116
    %v1834 = vunpack.c.l.b16 %v1117
    %v1835 = vunpack.c.h.b16 %v1117
    %v1836 = vunpack.c.l.b16 %v1118
    %v1837 = vunpack.c.h.b16 %v1118
    %v1838 = vunpack.c.l.b16 %v1119
    %v1839 = vunpack.c.h.b16 %v1119
    %v1840 = vunpack.c.l.b16 %v1120
    %v1841 = vunpack.c.h.b16 %v1120
    %v1842 = vunpack.c.l.b16 %v1121
    %v1843 = vunpack.c.h.b16 %v1121
    %v1844 = vunpack.c.l.b16 %v1122
    %v1845 = vunpack.c.h.b16 %v1122
    %v1846 = vunpack.c.l.b16 %v1123
    %v1847 = vunpack.c.h.b16 %v1123
    %v1848 = vunpack.c.l.b16 %v1124
    %v1849 = vunpack.c.h.b16 %v1124
    %v1850 = vunpack.c.l.b16 %v1125
    %v1851 = vunpack.c.h.b16 %v1125
    %v1852 = vunpack.c.l.b16 %v1126
    %v1853 = vunpack.c.h.b16 %v1126
    %v1854 = vunpack.c.l.b16 %v1127
    %v1855 = vunpack.c.h.b16 %v1127
    %v1856 = vunpack.c.l.b16 %v1128
    %v1857 = vunpack.c.h.b16 %v1128
    %v1858 = vunpack.c.l.b16 %v1129
    %v1859 = vunpack.c.h.b16 %v1129
    %v1860 = vunpack.c.l.b16 %v1130
    %v1861 = vunpack.c.h.b16 %v1130
    %v1862 = vunpack.c.l.b16 %v1131
    %v1863 = vunpack.c.h.b16 %v1131
    %v1864 = vunpack.c.l.b16 %v1132
    %v1865 = vunpack.c.h.b16 %v1132
    %v1866 = vunpack.c.l.b16 %v1133
    %v1867 = vunpack.c.h.b16 %v1133
    %v1868 = vunpack.c.l.b16 %v1134
    %v1869 = vunpack.c.h.b16 %v1134
    %v1870 = vunpack.c.l.b16 %v1135
    %v1871 = vunpack.c.h.b16 %v1135
    %v1872 = vunpack.c.l.b16 %v1136
    %v1873 = vunpack.c.h.b16 %v1136
    %v1874 = vunpack.c.l.b16 %v1137
    %v1875 = vunpack.c.h.b16 %v1137
    %v1876 = vunpack.c.l.b16 %v1138
    %v1877 = vunpack.c.h.b16 %v1138
    %v1878 = vunpack.c.l.b16 %v1139
    %v1879 = vunpack.c.h.b16 %v1139
    %v1880 = vunpack.c.l.b16 %v1140
    %v1881 = vunpack.c.h.b16 %v1140
    %v1882 = vunpack.c.l.b16 %v1141
    %v1883 = vunpack.c.h.b16 %v1141
    %v1884 = vunpack.c.l.b16 %v1142
    %v1885 = vunpack.c.h.b16 %v1142
    %v1886 = vunpack.c.l.b16 %v1143
    %v1887 = vunpack.c.h.b16 %v1143
    %v1888 = vunpack.c.l.b16 %v1144
    %v1889 = vunpack.c.h.b16 %v1144
    %v1890 = vunpack.c.l.b16 %v1145
    %v1891 = vunpack.c.h.b16 %v1145
    %v1892 = vunpack.c.l.b16 %v1146
    %v1893 = vunpack.c.h.b16 %v1146
    %v1894 = vunpack.c.l.b16 %v1147
    %v1895 = vunpack.c.h.b16 %v1147
    %v1896 = vunpack.c.l.b16 %v1148
    %v1897 = vunpack.c.h.b16 %v1148
    %v1898 = vunpack.c.l.b16 %v1149
    %v1899 = vunpack.c.h.b16 %v1149
    %v1900 = vunpack.c.l.b16 %v1150
    %v1901 = vunpack.c.h.b16 %v1150
    %v1902 = vunpack.c.l.b16 %v1151
    %v1903 = vunpack.c.h.b16 %v1151
    %v1904 = vunpack.c.l.b16 %v1152
    %v1905 = vunpack.c.h.b16 %v1152
    %v1906 = vunpack.c.l.b16 %v1153
    %v1907 = vunpack.c.h.b16 %v1153
    %v1908 = vunpack.c.l.b16 %v1154
    %v1909 = vunpack.c.h.b16 %v1154
    %v1910 = vunpack.c.l.b16 %v1155
    %v1911 = vunpack.c.h.b16 %v1155
    %v1912 = vunpack.c.l.b16 %v1156
    %v1913 = vunpack.c.h.b16 %v1156
    %v1914 = vunpack.c.l.b16 %v1157
    %v1915 = vunpack.c.h.b16 %v1157
    %v1916 = vunpack.c.l.b16 %v1158
    %v1917 = vunpack.c.h.b16 %v1158
    %v1918 = vunpack.c.l.b16 %v1159
    %v1919 = vunpack.c.h.b16 %v1159
    %v1920 = vunpack.c.l.b16 %v1160
    %v1921 = vunpack.c.h.b16 %v1160
    %v1922 = vunpack.c.l.b16 %v1161
    %v1923 = vunpack.c.h.b16 %v1161
    %v1924 = vunpack.c.l.b16 %v1162
    %v1925 = vunpack.c.h.b16 %v1162
    %v1926 = vunpack.c.l.b16 %v1163
    %v1927 = vunpack.c.h.b16 %v1163
    %v1928 = vunpack.c.l.b16 %v1164
    %v1929 = vunpack.c.h.b16 %v1164
    %v1930 = vunpack.c.l.b16 %v1165
    %v1931 = vunpack.c.h.b16 %v1165
    %v1932 = vunpack.c.l.b16 %v1166
    %v1933 = vunpack.c.h.b16 %v1166
    %v1934 = vunpack.c.l.b16 %v1167
    %v1935 = vunpack.c.h.b16 %v1167
    %v1936 = vunpack.c.l.b16 %v1168
    %v1937 = vunpack.c.h.b16 %v1168
    %v1938 = vunpack.c.l.b16 %v1169
    %v1939 = vunpack.c.h.b16 %v1169
    %v1940 = vunpack.c.l.b16 %v1170
    %v1941 = vunpack.c.h.b16 %v1170
    %v1942 = vunpack.c.l.b16 %v1171
    %v1943 = vunpack.c.h.b16 %v1171
    %v1944 = vunpack.c.l.b16 %v1172
    %v1945 = vunpack.c.h.b16 %v1172
    %v1946 = vunpack.c.l.b16 %v1173
    %v1947 = vunpack.c.h.b16 %v1173
    %v1948 = vunpack.c.l.b16 %v1174
    %v1949 = vunpack.c.h.b16 %v1174
    %v1950 = vunpack.c.l.b16 %v1175
    %v1951 = vunpack.c.h.b16 %v1175
    %v1952 = vunpack.c.l.b16 %v1176
    %v1953 = vunpack.c.h.b16 %v1176
    %v1954 = vunpack.c.l.b16 %v1177
    %v1955 = vunpack.c.h.b16 %v1177
    %v1956 = vunpack.c.l.b16 %v1178
    %v1957 = vunpack.c.h.b16 %v1178
    %v1958 = vunpack.c.l.b16 %v1179
    %v1959 = vunpack.c.h.b16 %v1179
    %v1960 = vunpack.c.l.b16 %v1180
    %v1961 = vunpack.c.h.b16 %v1180
    %v1962 = vunpack.c.l.b16 %v1181
    %v1963 = vunpack.c.h.b16 %v1181
    %v1964 = vunpack.c.l.b16 %v1182
    %v1965 = vunpack.c.h.b16 %v1182
    %v1966 = vunpack.c.l.b16 %v1183
    %v1967 = vunpack.c.h.b16 %v1183
    %v1968 = vunpack.c.l.b16 %v1184
    %v1969 = vunpack.c.h.b16 %v1184
    %v1970 = vunpack.c.l.b16 %v1185
    %v1971 = vunpack.c.h.b16 %v1185
    %v1972 = vunpack.c.l.b16 %v1186
    %v1973 = vunpack.c.h.b16 %v1186
    %v1974 = vunpack.c.l.b16 %v1187
    %v1975 = vunpack.c.h.b16 %v1187
    %v1976 = vunpack.c.l.b16 %v1188
    %v1977 = vunpack.c.h.b16 %v1188
    %v1978 = vunpack.c.l.b16 %v1189
    %v1979 = vunpack.c.h.b16 %v1189
    %v1980 = vunpack.c.l.b16 %v1190
    %v1981 = vunpack.c.h.b16 %v1190
    %v1982 = vunpack.c.l.b16 %v1191
    %v1983 = vunpack.c.h.b16 %v1191
    %v1984 = vunpack.c.l.b16 %v1192
    %v1985 = vunpack.c.h.b16 %v1192
    %v1986 = vunpack.c.l.b16 %v1193
    %v1987 = vunpack.c.h.b16 %v1193
    %v1988 = vunpack.c.l.b16 %v1194
    %v1989 = vunpack.c.h.b16 %v1194
    %v1990 = vunpack.c.l.b16 %v1195
    %v1991 = vunpack.c.h.b16 %v1195
    %v1992 = vunpack.c.l.b16 %v1196
    %v1993 = vunpack.c.h.b16 %v1196
    %v1994 = vunpack.c.l.b16 %v1197
    %v1995 = vunpack.c.h.b16 %v1197
    %v1996 = vunpack.c.l.b16 %v1198
    %v1997 = vunpack.c.h.b16 %v1198
    %v1998 = vunpack.c.l.b16 %v1199
    %v1999 = vunpack.c.h.b16 %v1199
    %v2000 = vunpack.c.l.b16 %v1200
    %v2001 = vunpack.c.h.b16 %v1200
    %v2002 = vunpack.c.l.b16 %v1201
    %v2003 = vunpack.c.h.b16 %v1201
    %v2004 = vunpack.c.l.b16 %v1202
    %v2005 = vunpack.c.h.b16 %v1202
    %v2006 = vunpack.c.l.b16 %v1203
    %v2007 = vunpack.c.h.b16 %v1203
    %v2008 = vunpack.c.l.b16 %v1204
    %v2009 = vunpack.c.h.b16 %v1204
    %v2010 = vunpack.c.l.b16 %v1205
    %v2011 = vunpack.c.h.b16 %v1205
    %v2012 = vunpack.c.l.b16 %v1206
    %v2013 = vunpack.c.h.b16 %v1206
    %v2014 = vunpack.c.l.b16 %v1207
    %v2015 = vunpack.c.h.b16 %v1207
    %v2016 = vunpack.c.l.b16 %v1208
    %v2017 = vunpack.c.h.b16 %v1208
    %v2018 = vunpack.c.l.b16 %v1209
    %v2019 = vunpack.c.h.b16 %v1209
    %v2020 = vunpack.c.l.b16 %v1210
    %v2021 = vunpack.c.h.b16 %v1210
    %v2022 = vunpack.c.l.b16 %v1211
    %v2023 = vunpack.c.h.b16 %v1211
    %v2024 = vunpack.c.l.b16 %v1212
    %v2025 = vunpack.c.h.b16 %v1212
    %v2026 = vunpack.c.l.b16 %v1213
    %v2027 = vunpack.c.h.b16 %v1213
    %v2028 = vunpack.c.l.b16 %v1214
    %v2029 = vunpack.c.h.b16 %v1214
    %v2030 = vunpack.c.l.b16 %v1215
    %v2031 = vunpack.c.h.b16 %v1215
    %v2032 = vunpack.c.l.b16 %v1216
    %v2033 = vunpack.c.h.b16 %v1216
    %v2034 = vunpack.c.l.b16 %v1217
    %v2035 = vunpack.c.h.b16 %v1217
    %v2036 = vunpack.c.l.b16 %v1218
    %v2037 = vunpack.c.h.b16 %v1218
    %v2038 = vunpack.c.l.b16 %v1219
    %v2039 = vunpack.c.h.b16 %v1219
    %v2040 = vunpack.c.l.b16 %v1220
    %v2041 = vunpack.c.h.b16 %v1220
    %v2042 = vunpack.c.l.b16 %v1221
    %v2043 = vunpack.c.h.b16 %v1221
    %v2044 = vunpack.c.l.b16 %v1222
    %v2045 = vunpack.c.h.b16 %v1222
    %v2046 = vunpack.c.l.b16 %v1223
    %v2047 = vunpack.c.h.b16 %v1223
    %v2048 = vunpack.c.l.b16 %v1224
    %v2049 = vunpack.c.h.b16 %v1224
    %v2050 = vunpack.c.l.b16 %v1225
    %v2051 = vunpack.c.h.b16 %v1225
    %v2052 = vunpack.c.l.b16 %v1226
    %v2053 = vunpack.c.h.b16 %v1226
    %v2054 = vunpack.c.l.b16 %v1227
    %v2055 = vunpack.c.h.b16 %v1227
    %v2056 = vunpack.c.l.b16 %v1228
    %v2057 = vunpack.c.h.b16 %v1228
    %v2058 = vunpack.c.l.b16 %v1229
    %v2059 = vunpack.c.h.b16 %v1229
    %v2060 = vunpack.c.l.b16 %v1230
    %v2061 = vunpack.c.h.b16 %v1230
    %v2062 = vunpack.c.l.b16 %v1231
    %v2063 = vunpack.c.h.b16 %v1231
    %v2064 = vunpack.c.l.b16 %v1232
    %v2065 = vunpack.c.h.b16 %v1232
    %v2066 = vunpack.c.l.b16 %v1233
    %v2067 = vunpack.c.h.b16 %v1233
    %v2068 = vunpack.c.l.b16 %v1234
    %v2069 = vunpack.c.h.b16 %v1234
    %v2070 = vunpack.c.l.b16 %v1235
    %v2071 = vunpack.c.h.b16 %v1235
    %v2072 = vunpack.c.l.b16 %v1236
    %v2073 = vunpack.c.h.b16 %v1236
    %v2074 = vunpack.c.l.b16 %v1237
    %v2075 = vunpack.c.h.b16 %v1237
    %v2076 = vunpack.c.l.b16 %v1238
    %v2077 = vunpack.c.h.b16 %v1238
    %v2078 = vunpack.c.l.b16 %v1239
    %v2079 = vunpack.c.h.b16 %v1239
    %v2080 = vunpack.c.l.b16 %v1240
    %v2081 = vunpack.c.h.b16 %v1240
    %v2082 = vunpack.c.l.b16 %v1241
    %v2083 = vunpack.c.h.b16 %v1241
    %v2084 = vunpack.c.l.b16 %v1242
    %v2085 = vunpack.c.h.b16 %v1242
    %v2086 = vunpack.c.l.b16 %v1243
    %v2087 = vunpack.c.h.b16 %v1243
    %v2088 = vunpack.c.l.b16 %v1244
    %v2089 = vunpack.c.h.b16 %v1244
    %v2090 = vunpack.c.l.b16 %v1245
    %v2091 = vunpack.c.h.b16 %v1245
    %v2092 = vunpack.c.l.b16 %v1246
    %v2093 = vunpack.c.h.b16 %v1246
    %v2094 = vunpack.c.l.b16 %v1247
    %v2095 = vunpack.c.h.b16 %v1247
    %v2096 = vunpack.c.l.b16 %v1248
    %v2097 = vunpack.c.h.b16 %v1248
    %v2098 = vunpack.c.l.b16 %v1249
    %v2099 = vunpack.c.h.b16 %v1249
    %v2100 = vunpack.c.l.b16 %v1250
    %v2101 = vunpack.c.h.b16 %v1250
    %v2102 = vunpack.c.l.b16 %v1251
    %v2103 = vunpack.c.h.b16 %v1251
    %v2104 = vunpack.c.l.b16 %v1252
    %v2105 = vunpack.c.h.b16 %v1252
    %v2106 = vunpack.c.l.b16 %v1253
    %v2107 = vunpack.c.h.b16 %v1253
    %v2108 = vunpack.c.l.b16 %v1254
    %v2109 = vunpack.c.h.b16 %v1254
    %v2110 = vunpack.c.l.b16 %v1255
    %v2111 = vunpack.c.h.b16 %v1255
    %v2112 = vunpack.c.l.b16 %v1256
    %v2113 = vunpack.c.h.b16 %v1256
    %v2114 = vunpack.c.l.b16 %v1257
    %v2115 = vunpack.c.h.b16 %v1257
    %v2116 = vunpack.c.l.b16 %v1258
    %v2117 = vunpack.c.h.b16 %v1258
    %v2118 = vunpack.c.l.b16 %v1259
    %v2119 = vunpack.c.h.b16 %v1259
    %v2120 = vunpack.c.l.b16 %v1260
    %v2121 = vunpack.c.h.b16 %v1260
    %v2122 = vunpack.c.l.b16 %v1261
    %v2123 = vunpack.c.h.b16 %v1261
    %v2124 = vunpack.c.l.b16 %v1262
    %v2125 = vunpack.c.h.b16 %v1262
    %v2126 = vunpack.c.l.b16 %v1263
    %v2127 = vunpack.c.h.b16 %v1263
    %v2128 = vpack.c.b16 %v1558, %v1552
    %v2129 = vpack.c.b16 %v1559, %v1553
    %v2130 = vpack.c.b16 %v1560, %v1554
    %v2131 = vpack.c.b16 %v1561, %v1555
    %v2132 = vpack.c.b16 %v1562, %v1556
    %v2133 = vpack.c.b16 %v1563, %v1557
    %v2134 = vpack.c.b16 %v1570, %v1564
    %v2135 = vpack.c.b16 %v1571, %v1565
    %v2136 = vpack.c.b16 %v1572, %v1566
    %v2137 = vpack.c.b16 %v1573, %v1567
    %v2138 = vpack.c.b16 %v1574, %v1568
    %v2139 = vpack.c.b16 %v1575, %v1569
    %v2140 = vpack.c.b16 %v1582, %v1576
    %v2141 = vpack.c.b16 %v1583, %v1577
    %v2142 = vpack.c.b16 %v1584, %v1578
    %v2143 = vpack.c.b16 %v1585, %v1579
    %v2144 = vpack.c.b16 %v1586, %v1580
    %v2145 = vpack.c.b16 %v1587, %v1581
    %v2146 = vpack.c.b16 %v1594, %v1588
    %v2147 = vpack.c.b16 %v1595, %v1589
    %v2148 = vpack.c.b16 %v1596, %v1590
    %v2149 = vpack.c.b16 %v1597, %v1591
    %v2150 = vpack.c.b16 %v1598, %v1592
    %v2151 = vpack.c.b16 %v1599, %v1593
    %v2152 = vpack.c.b16 %v1606, %v1600
    %v2153 = vpack.c.b16 %v1607, %v1601
    %v2154 = vpack.c.b16 %v1608, %v1602
    %v2155 = vpack.c.b16 %v1609, %v1603
    %v2156 = vpack.c.b16 %v1610, %v1604
    %v2157 = vpack.c.b16 %v1611, %v1605
    %v2158 = vpack.c.b16 %v1618, %v1612
    %v2159 = vpack.c.b16 %v1619, %v1613
    %v2160 = vpack.c.b16 %v1620, %v1614
    %v2161 = vpack.c.b16 %v1621, %v1615
    %v2162 = vpack.c.b16 %v1622, %v1616
    %v2163 = vpack.c.b16 %v1623, %v1617
    %v2164 = vpack.c.b16 %v1630, %v1624
    %v2165 = vpack.c.b16 %v1631, %v1625
    %v2166 = vpack.c.b16 %v1632, %v1626
    %v2167 = vpack.c.b16 %v1633, %v1627
    %v2168 = vpack.c.b16 %v1634, %v1628
    %v2169 = vpack.c.b16 %v1635, %v1629
    %v2170 = vpack.c.b16 %v1642, %v1636
    %v2171 = vpack.c.b16 %v1643, %v1637
    %v2172 = vpack.c.b16 %v1644, %v1638
    %v2173 = vpack.c.b16 %v1645, %v1639
    %v2174 = vpack.c.b16 %v1646, %v1640
    %v2175 = vpack.c.b16 %v1647, %v1641
    %v2176 = vpack.c.b16 %v1654, %v1648
    %v2177 = vpack.c.b16 %v1655, %v1649
    %v2178 = vpack.c.b16 %v1656, %v1650
    %v2179 = vpack.c.b16 %v1657, %v1651
    %v2180 = vpack.c.b16 %v1658, %v1652
    %v2181 = vpack.c.b16 %v1659, %v1653
    %v2182 = vpack.c.b16 %v1666, %v1660
    %v2183 = vpack.c.b16 %v1667, %v1661
    %v2184 = vpack.c.b16 %v1668, %v1662
    %v2185 = vpack.c.b16 %v1669, %v1663
    %v2186 = vpack.c.b16 %v1670, %v1664
    %v2187 = vpack.c.b16 %v1671, %v1665
    %v2188 = vpack.c.b16 %v1678, %v1672
    %v2189 = vpack.c.b16 %v1679, %v1673
    %v2190 = vpack.c.b16 %v1680, %v1674
    %v2191 = vpack.c.b16 %v1681, %v1675
    %v2192 = vpack.c.b16 %v1682, %v1676
    %v2193 = vpack.c.b16 %v1683, %v1677
    %v2194 = vpack.c.b16 %v1690, %v1684
    %v2195 = vpack.c.b16 %v1691, %v1685
    %v2196 = vpack.c.b16 %v1692, %v1686
    %v2197 = vpack.c.b16 %v1693, %v1687
    %v2198 = vpack.c.b16 %v1694, %v1688
    %v2199 = vpack.c.b16 %v1695, %v1689
    %v2200 = vpack.c.b16 %v1702, %v1696
    %v2201 = vpack.c.b16 %v1703, %v1697
    %v2202 = vpack.c.b16 %v1704, %v1698
    %v2203 = vpack.c.b16 %v1705, %v1699
    %v2204 = vpack.c.b16 %v1706, %v1700
    %v2205 = vpack.c.b16 %v1707, %v1701
    %v2206 = vpack.c.b16 %v1714, %v1708
    %v2207 = vpack.c.b16 %v1715, %v1709
    %v2208 = vpack.c.b16 %v1716, %v1710
    %v2209 = vpack.c.b16 %v1717, %v1711
    %v2210 = vpack.c.b16 %v1718, %v1712
    %v2211 = vpack.c.b16 %v1719, %v1713
    %v2212 = vpack.c.b16 %v1726, %v1720
    %v2213 = vpack.c.b16 %v1727, %v1721
    %v2214 = vpack.c.b16 %v1728, %v1722
    %v2215 = vpack.c.b16 %v1729, %v1723
    %v2216 = vpack.c.b16 %v1730, %v1724
    %v2217 = vpack.c.b16 %v1731, %v1725
    %v2218 = vpack.c.b16 %v1738, %v1732
    %v2219 = vpack.c.b16 %v1739, %v1733
    %v2220 = vpack.c.b16 %v1740, %v1734
    %v2221 = vpack.c.b16 %v1741, %v1735
    %v2222 = vpack.c.b16 %v1742, %v1736
    %v2223 = vpack.c.b16 %v1743, %v1737
    %v2224 = vpack.c.b16 %v1750, %v1744
    %v2225 = vpack.c.b16 %v1751, %v1745
    %v2226 = vpack.c.b16 %v1752, %v1746
    %v2227 = vpack.c.b16 %v1753, %v1747
    %v2228 = vpack.c.b16 %v1754, %v1748
    %v2229 = vpack.c.b16 %v1755, %v1749
    %v2230 = vpack.c.b16 %v1762, %v1756
    %v2231 = vpack.c.b16 %v1763, %v1757
    %v2232 = vpack.c.b16 %v1764, %v1758
    %v2233 = vpack.c.b16 %v1765, %v1759
    %v2234 = vpack.c.b16 %v1766, %v1760
    %v2235 = vpack.c.b16 %v1767, %v1761
    %v2236 = vpack.c.b16 %v1774, %v1768
    %v2237 = vpack.c.b16 %v1775, %v1769
    %v2238 = vpack.c.b16 %v1776, %v1770
    %v2239 = vpack.c.b16 %v1777, %v1771
    %v2240 = vpack.c.b16 %v1778, %v1772
    %v2241 = vpack.c.b16 %v1779, %v1773
    %v2242 = vpack.c.b16 %v1786, %v1780
    %v2243 = vpack.c.b16 %v1787, %v1781
    %v2244 = vpack.c.b16 %v1788, %v1782
    %v2245 = vpack.c.b16 %v1789, %v1783
    %v2246 = vpack.c.b16 %v1790, %v1784
    %v2247 = vpack.c.b16 %v1791, %v1785
    %v2248 = vpack.c.b16 %v1798, %v1792
    %v2249 = vpack.c.b16 %v1799, %v1793
    %v2250 = vpack.c.b16 %v1800, %v1794
    %v2251 = vpack.c.b16 %v1801, %v1795
    %v2252 = vpack.c.b16 %v1802, %v1796
    %v2253 = vpack.c.b16 %v1803, %v1797
    %v2254 = vpack.c.b16 %v1810, %v1804
    %v2255 = vpack.c.b16 %v1811, %v1805
    %v2256 = vpack.c.b16 %v1812, %v1806
    %v2257 = vpack.c.b16 %v1813, %v1807
    %v2258 = vpack.c.b16 %v1814, %v1808
    %v2259 = vpack.c.b16 %v1815, %v1809
    %v2260 = vpack.c.b16 %v1822, %v1816
    %v2261 = vpack.c.b16 %v1823, %v1817
    %v2262 = vpack.c.b16 %v1824, %v1818
    %v2263 = vpack.c.b16 %v1825, %v1819
    %v2264 = vpack.c.b16 %v1826, %v1820
    %v2265 = vpack.c.b16 %v1827, %v1821
    %v2266 = vpack.c.b16 %v1834, %v1828
    %v2267 = vpack.c.b16 %v1835, %v1829
    %v2268 = vpack.c.b16 %v1836, %v1830
    %v2269 = vpack.c.b16 %v1837, %v1831
    %v2270 = vpack.c.b16 %v1838, %v1832
    %v2271 = vpack.c.b16 %v1839, %v1833
    %v2272 = vpack.c.b16 %v1846, %v1840
    %v2273 = vpack.c.b16 %v1847, %v1841
    %v2274 = vpack.c.b16 %v1848, %v1842
    %v2275 = vpack.c.b16 %v1849, %v1843
    %v2276 = vpack.c.b16 %v1850, %v1844
    %v2277 = vpack.c.b16 %v1851, %v1845
    %v2278 = vpack.c.b16 %v1858, %v1852
    %v2279 = vpack.c.b16 %v1859, %v1853
    %v2280 = vpack.c.b16 %v1860, %v1854
    %v2281 = vpack.c.b16 %v1861, %v1855
    %v2282 = vpack.c.b16 %v1862, %v1856
    %v2283 = vpack.c.b16 %v1863, %v1857
    %v2284 = vpack.c.b16 %v1870, %v1864
    %v2285 = vpack.c.b16 %v1871, %v1865
    %v2286 = vpack.c.b16 %v1872, %v1866
    %v2287 = vpack.c.b16 %v1873, %v1867
    %v2288 = vpack.c.b16 %v1874, %v1868
    %v2289 = vpack.c.b16 %v1875, %v1869
    %v2290 = vpack.c.b16 %v1882, %v1876
    %v2291 = vpack.c.b16 %v1883, %v1877
    %v2292 = vpack.c.b16 %v1884, %v1878
    %v2293 = vpack.c.b16 %v1885, %v1879
    %v2294 = vpack.c.b16 %v1886, %v1880
    %v2295 = vpack.c.b16 %v1887, %v1881
    %v2296 = vpack.c.b16 %v1894, %v1888
    %v2297 = vpack.c.b16 %v1895, %v1889
    %v2298 = vpack.c.b16 %v1896, %v1890
    %v2299 = vpack.c.b16 %v1897, %v1891
    %v2300 = vpack.c.b16 %v1898, %v1892
    %v2301 = vpack.c.b16 %v1899, %v1893
    %v2302 = vpack.c.b16 %v1906, %v1900
    %v2303 = vpack.c.b16 %v1907, %v1901
    %v2304 = vpack.c.b16 %v1908, %v1902
    %v2305 = vpack.c.b16 %v1909, %v1903
    %v2306 = vpack.c.b16 %v1910, %v1904
    %v2307 = vpack.c.b16 %v1911, %v1905
    %v2308 = vpack.c.b16 %v1918, %v1912
    %v2309 = vpack.c.b16 %v1919, %v1913
    %v2310 = vpack.c.b16 %v1920, %v1914
    %v2311 = vpack.c.b16 %v1921, %v1915
    %v2312 = vpack.c.b16 %v1922, %v1916
    %v2313 = vpack.c.b16 %v1923, %v1917
    %v2314 = vpack.c.b16 %v1930, %v1924
    %v2315 = vpack.c.b16 %v1931, %v1925
    %v2316 = vpack.c.b16 %v1932, %v1926
    %v2317 = vpack.c.b16 %v1933, %v1927
    %v2318 = vpack.c.b16 %v1934, %v1928
    %v2319 = vpack.c.b16 %v1935, %v1929
    %v2320 = vpack.c.b16 %v1942, %v1936
    %v2321 = vpack.c.b16 %v1943, %v1937
    %v2322 = vpack.c.b16 %v1944, %v1938
    %v2323 = vpack.c.b16 %v1945, %v1939
    %v2324 = vpack.c.b16 %v1946, %v1940
    %v2325 = vpack.c.b16 %v1947, %v1941
    %v2326 = vpack.c.b16 %v1954, %v1948
    %v2327 = vpack.c.b16 %v1955, %v1949
    %v2328 = vpack.c.b16 %v1956, %v1950
    %v2329 = vpack.c.b16 %v1957, %v1951
    %v2330 = vpack.c.b16 %v1958, %v1952
    %v2331 = vpack.c.b16 %v1959, %v1953
    %v2332 = vpack.c.b16 %v1966, %v1960
    %v2333 = vpack.c.b16 %v1967, %v1961
    %v2334 = vpack.c.b16 %v1968, %v1962
    %v2335 = vpack.c.b16 %v1969, %v1963
    %v2336 = vpack.c.b16 %v1970, %v1964
    %v2337 = vpack.c.b16 %v1971, %v1965
    %v2338 = vpack.c.b16 %v1978, %v1972
    %v2339 = vpack.c.b16 %v1979, %v1973
    %v2340 = vpack.c.b16 %v1980, %v1974
    %v2341 = vpack.c.b16 %v1981, %v1975
    %v2342 = vpack.c.b16 %v1982, %v1976
    %v2343 = vpack.c.b16 %v1983, %v1977
    %v2344 = vpack.c.b16 %v1990, %v1984
    %v2345 = vpack.c.b16 %v1991, %v1985
    %v2346 = vpack.c.b16 %v1992, %v1986
    %v2347 = vpack.c.b16 %v1993, %v1987
    %v2348 = vpack.c.b16 %v1994, %v1988
    %v2349 = vpack.c.b16 %v1995, %v1989
    %v2350 = vpack.c.b16 %v2002, %v1996
    %v2351 = vpack.c.b16 %v2003, %v1997
    %v2352 = vpack.c.b16 %v2004, %v1998
    %v2353 = vpack.c.b16 %v2005, %v1999
    %v2354 = vpack.c.b16 %v2006, %v2000
    %v2355 = vpack.c.b16 %v2007, %v2001
    %v2356 = vpack.c.b16 %v2014, %v2008
    %v2357 = vpack.c.b16 %v2015, %v2009
    %v2358 = vpack.c.b16 %v2016, %v2010
    %v2359 = vpack.c.b16 %v2017, %v2011
    %v2360 = vpack.c.b16 %v2018, %v2012
    %v2361 = vpack.c.b16 %v2019, %v2013
    %v2362 = vpack.c.b16 %v2026, %v2020
    %v2363 = vpack.c.b16 %v2027, %v2021
    %v2364 = vpack.c.b16 %v2028, %v2022
    %v2365 = vpack.c.b16 %v2029, %v2023
    %v2366 = vpack.c.b16 %v2030, %v2024
    %v2367 = vpack.c.b16 %v2031, %v2025
    %v2368 = vpack.c.b16 %v2038, %v2032
    %v2369 = vpack.c.b16 %v2039, %v2033
    %v2370 = vpack.c.b16 %v2040, %v2034
    %v2371 = vpack.c.b16 %v2041, %v2035
    %v2372 = vpack.c.b16 %v2042, %v2036
    %v2373 = vpack.c.b16 %v2043, %v2037
    %v2374 = vpack.c.b16 %v2050, %v2044
    %v2375 = vpack.c.b16 %v2051, %v2045
    %v2376 = vpack.c.b16 %v2052, %v2046
    %v2377 = vpack.c.b16 %v2053, %v2047
    %v2378 = vpack.c.b16 %v2054, %v2048
    %v2379 = vpack.c.b16 %v2055, %v2049
    %v2380 = vpack.c.b16 %v2062, %v2056
    %v2381 = vpack.c.b16 %v2063, %v2057
    %v2382 = vpack.c.b16 %v2064, %v2058
    %v2383 = vpack.c.b16 %v2065, %v2059
    %v2384 = vpack.c.b16 %v2066, %v2060
    %v2385 = vpack.c.b16 %v2067, %v2061
    %v2386 = vpack.c.b16 %v2074, %v2068
    %v2387 = vpack.c.b16 %v2075, %v2069
    %v2388 = vpack.c.b16 %v2076, %v2070
    %v2389 = vpack.c.b16 %v2077, %v2071
    %v2390 = vpack.c.b16 %v2078, %v2072
    %v2391 = vpack.c.b16 %v2079, %v2073
    %v2392 = vpack.c.b16 %v2086, %v2080
    %v2393 = vpack.c.b16 %v2087, %v2081
    %v2394 = vpack.c.b16 %v2088, %v2082
    %v2395 = vpack.c.b16 %v2089, %v2083
    %v2396 = vpack.c.b16 %v2090, %v2084
    %v2397 = vpack.c.b16 %v2091, %v2085
    %v2398 = vpack.c.b16 %v2098, %v2092
    %v2399 = vpack.c.b16 %v2099, %v2093
    %v2400 = vpack.c.b16 %v2100, %v2094
    %v2401 = vpack.c.b16 %v2101, %v2095
    %v2402 = vpack.c.b16 %v2102, %v2096
    %v2403 = vpack.c.b16 %v2103, %v2097
    %v2404 = vpack.c.b16 %v2110, %v2104
    %v2405 = vpack.c.b16 %v2111, %v2105
    %v2406 = vpack.c.b16 %v2112, %v2106
    %v2407 = vpack.c.b16 %v2113, %v2107
    %v2408 = vpack.c.b16 %v2114, %v2108
    %v2409 = vpack.c.b16 %v2115, %v2109
    %v2410 = vpack.c.b16 %v2122, %v2116
    %v2411 = vpack.c.b16 %v2123, %v2117
    %v2412 = vpack.c.b16 %v2124, %v2118
    %v2413 = vpack.c.b16 %v2125, %v2119
    %v2414 = vpack.c.b16 %v2126, %v2120
    %v2415 = vpack.c.b16 %v2127, %v2121
    %2704 = vmatpush.bf16.msra.mxu0 %v2170
    %2705 = vmatpush.bf16.msra.mxu0 %v2164
    %2706 = vmatpush.bf16.msra.mxu0 %v2158
    %2707 = vmatpush.bf16.msra.mxu0 %v2152
    %2708 = vmatpush.bf16.msra.mxu0 %v2146
    %2709 = vmatpush.bf16.msra.mxu0 %v2140
    %2710 = vmatpush.bf16.msra.mxu0 %v2134
    %2711 = vmatpush.bf16.msra.mxu0 %v2128
    %2712 = vmatmul.bf16.gmra.mxu0 %v670
    %v2713 = vpop.f32.mrf.mxu0
    %v2714 = vadd.f32 0.0, %v2713
    %v2715 = vpop.f32.mrf.mxu0
    %2716 = vdwg.mxu0
    %2717 = vmatpush.bf16.msra.mxu0 %v2218
    %2718 = vmatpush.bf16.msra.mxu0 %v2212
    %2719 = vmatpush.bf16.msra.mxu0 %v2206
    %2720 = vmatpush.bf16.msra.mxu0 %v2200
    %2721 = vmatpush.bf16.msra.mxu0 %v2194
    %2722 = vmatpush.bf16.msra.mxu0 %v2188
    %2723 = vmatpush.bf16.msra.mxu0 %v2182
    %2724 = vmatpush.bf16.msra.mxu0 %v2176
    %2725 = vmatmul.bf16.gmra.mxu0 %v671
    %v2726 = vpop.f32.mrf.mxu0
    %v2727 = vadd.f32 %v2714, %v2726
    %v2728 = vpop.f32.mrf.mxu0
    %2729 = vdwg.mxu0
    %2730 = vmatpush.bf16.msra.mxu0 %v2266
    %2731 = vmatpush.bf16.msra.mxu0 %v2260
    %2732 = vmatpush.bf16.msra.mxu0 %v2254
    %2733 = vmatpush.bf16.msra.mxu0 %v2248
    %2734 = vmatpush.bf16.msra.mxu0 %v2242
    %2735 = vmatpush.bf16.msra.mxu0 %v2236
    %2736 = vmatpush.bf16.msra.mxu0 %v2230
    %2737 = vmatpush.bf16.msra.mxu0 %v2224
    %2738 = vmatmul.bf16.gmra.mxu0 %v672
    %v2739 = vpop.f32.mrf.mxu0
    %v2740 = vadd.f32 %v2727, %v2739
    %v2741 = vpop.f32.mrf.mxu0
    %2742 = vdwg.mxu0
    %2743 = vmatpush.bf16.msra.mxu0 %v2314
    %2744 = vmatpush.bf16.msra.mxu0 %v2308
    %2745 = vmatpush.bf16.msra.mxu0 %v2302
    %2746 = vmatpush.bf16.msra.mxu0 %v2296
    %2747 = vmatpush.bf16.msra.mxu0 %v2290
    %2748 = vmatpush.bf16.msra.mxu0 %v2284
    %2749 = vmatpush.bf16.msra.mxu0 %v2278
    %2750 = vmatpush.bf16.msra.mxu0 %v2272
    %2751 = vmatmul.bf16.gmra.mxu0 %v673
    %v2752 = vpop.f32.mrf.mxu0
    %v2753 = vadd.f32 %v2740, %v2752
    %v2754 = vpop.f32.mrf.mxu0
    %2755 = vdwg.mxu0
    %2756 = vmatpush.bf16.msra.mxu0 %v2362
    %2757 = vmatpush.bf16.msra.mxu0 %v2356
    %2758 = vmatpush.bf16.msra.mxu0 %v2350
    %2759 = vmatpush.bf16.msra.mxu0 %v2344
    %2760 = vmatpush.bf16.msra.mxu0 %v2338
    %2761 = vmatpush.bf16.msra.mxu0 %v2332
    %2762 = vmatpush.bf16.msra.mxu0 %v2326
    %2763 = vmatpush.bf16.msra.mxu0 %v2320
    %2764 = vmatmul.bf16.gmra.mxu0 %v674
    %v2765 = vpop.f32.mrf.mxu0
    %v2766 = vadd.f32 %v2753, %v2765
    %v2767 = vpop.f32.mrf.mxu0
    %2768 = vdwg.mxu0
    %2769 = vmatpush.bf16.msra.mxu0 %v2410
    %2770 = vmatpush.bf16.msra.mxu0 %v2404
    %2771 = vmatpush.bf16.msra.mxu0 %v2398
    %2772 = vmatpush.bf16.msra.mxu0 %v2392
    %2773 = vmatpush.bf16.msra.mxu0 %v2386
    %2774 = vmatpush.bf16.msra.mxu0 %v2380
    %2775 = vmatpush.bf16.msra.mxu0 %v2374
    %2776 = vmatpush.bf16.msra.mxu0 %v2368
    %2777 = vmatmul.bf16.gmra.mxu0 %v675
    %v2778 = vpop.f32.mrf.mxu0
    %v2779 = vadd.f32 %v2766, %v2778
    %v2780 = vpop.f32.mrf.mxu0
    %2781 = vdwg.mxu0
    %2782 = vmatpush.bf16.msra.mxu0 %v2171
    %2783 = vmatpush.bf16.msra.mxu0 %v2165
    %2784 = vmatpush.bf16.msra.mxu0 %v2159
    %2785 = vmatpush.bf16.msra.mxu0 %v2153
    %2786 = vmatpush.bf16.msra.mxu0 %v2147
    %2787 = vmatpush.bf16.msra.mxu0 %v2141
    %2788 = vmatpush.bf16.msra.mxu0 %v2135
    %2789 = vmatpush.bf16.msra.mxu0 %v2129
    %2790 = vmatmul.bf16.gmra.mxu0 %v670
    %v2791 = vpop.f32.mrf.mxu0
    %v2792 = vadd.f32 0.0, %v2791
    %v2793 = vpop.f32.mrf.mxu0
    %2794 = vdwg.mxu0
    %2795 = vmatpush.bf16.msra.mxu0 %v2219
    %2796 = vmatpush.bf16.msra.mxu0 %v2213
    %2797 = vmatpush.bf16.msra.mxu0 %v2207
    %2798 = vmatpush.bf16.msra.mxu0 %v2201
    %2799 = vmatpush.bf16.msra.mxu0 %v2195
    %2800 = vmatpush.bf16.msra.mxu0 %v2189
    %2801 = vmatpush.bf16.msra.mxu0 %v2183
    %2802 = vmatpush.bf16.msra.mxu0 %v2177
    %2803 = vmatmul.bf16.gmra.mxu0 %v671
    %v2804 = vpop.f32.mrf.mxu0
    %v2805 = vadd.f32 %v2792, %v2804
    %v2806 = vpop.f32.mrf.mxu0
    %2807 = vdwg.mxu0
    %2808 = vmatpush.bf16.msra.mxu0 %v2267
    %2809 = vmatpush.bf16.msra.mxu0 %v2261
    %2810 = vmatpush.bf16.msra.mxu0 %v2255
    %2811 = vmatpush.bf16.msra.mxu0 %v2249
    %2812 = vmatpush.bf16.msra.mxu0 %v2243
    %2813 = vmatpush.bf16.msra.mxu0 %v2237
    %2814 = vmatpush.bf16.msra.mxu0 %v2231
    %2815 = vmatpush.bf16.msra.mxu0 %v2225
    %2816 = vmatmul.bf16.gmra.mxu0 %v672
    %v2817 = vpop.f32.mrf.mxu0
    %v2818 = vadd.f32 %v2805, %v2817
    %v2819 = vpop.f32.mrf.mxu0
    %2820 = vdwg.mxu0
    %2821 = vmatpush.bf16.msra.mxu0 %v2315
    %2822 = vmatpush.bf16.msra.mxu0 %v2309
    %2823 = vmatpush.bf16.msra.mxu0 %v2303
    %2824 = vmatpush.bf16.msra.mxu0 %v2297
    %2825 = vmatpush.bf16.msra.mxu0 %v2291
    %2826 = vmatpush.bf16.msra.mxu0 %v2285
    %2827 = vmatpush.bf16.msra.mxu0 %v2279
    %2828 = vmatpush.bf16.msra.mxu0 %v2273
    %2829 = vmatmul.bf16.gmra.mxu0 %v673
    %v2830 = vpop.f32.mrf.mxu0
    %v2831 = vadd.f32 %v2818, %v2830
    %v2832 = vpop.f32.mrf.mxu0
    %2833 = vdwg.mxu0
    %2834 = vmatpush.bf16.msra.mxu0 %v2363
    %2835 = vmatpush.bf16.msra.mxu0 %v2357
    %2836 = vmatpush.bf16.msra.mxu0 %v2351
    %2837 = vmatpush.bf16.msra.mxu0 %v2345
    %2838 = vmatpush.bf16.msra.mxu0 %v2339
    %2839 = vmatpush.bf16.msra.mxu0 %v2333
    %2840 = vmatpush.bf16.msra.mxu0 %v2327
    %2841 = vmatpush.bf16.msra.mxu0 %v2321
    %2842 = vmatmul.bf16.gmra.mxu0 %v674
    %v2843 = vpop.f32.mrf.mxu0
    %v2844 = vadd.f32 %v2831, %v2843
    %v2845 = vpop.f32.mrf.mxu0
    %2846 = vdwg.mxu0
    %2847 = vmatpush.bf16.msra.mxu0 %v2411
    %2848 = vmatpush.bf16.msra.mxu0 %v2405
    %2849 = vmatpush.bf16.msra.mxu0 %v2399
    %2850 = vmatpush.bf16.msra.mxu0 %v2393
    %2851 = vmatpush.bf16.msra.mxu0 %v2387
    %2852 = vmatpush.bf16.msra.mxu0 %v2381
    %2853 = vmatpush.bf16.msra.mxu0 %v2375
    %2854 = vmatpush.bf16.msra.mxu0 %v2369
    %2855 = vmatmul.bf16.gmra.mxu0 %v675
    %v2856 = vpop.f32.mrf.mxu0
    %v2857 = vadd.f32 %v2844, %v2856
    %v2858 = vpop.f32.mrf.mxu0
    %2859 = vdwg.mxu0
    %2860 = vmatpush.bf16.msra.mxu0 %v2172
    %2861 = vmatpush.bf16.msra.mxu0 %v2166
    %2862 = vmatpush.bf16.msra.mxu0 %v2160
    %2863 = vmatpush.bf16.msra.mxu0 %v2154
    %2864 = vmatpush.bf16.msra.mxu0 %v2148
    %2865 = vmatpush.bf16.msra.mxu0 %v2142
    %2866 = vmatpush.bf16.msra.mxu0 %v2136
    %2867 = vmatpush.bf16.msra.mxu0 %v2130
    %2868 = vmatmul.bf16.gmra.mxu0 %v670
    %v2869 = vpop.f32.mrf.mxu0
    %v2870 = vadd.f32 0.0, %v2869
    %v2871 = vpop.f32.mrf.mxu0
    %2872 = vdwg.mxu0
    %2873 = vmatpush.bf16.msra.mxu0 %v2220
    %2874 = vmatpush.bf16.msra.mxu0 %v2214
    %2875 = vmatpush.bf16.msra.mxu0 %v2208
    %2876 = vmatpush.bf16.msra.mxu0 %v2202
    %2877 = vmatpush.bf16.msra.mxu0 %v2196
    %2878 = vmatpush.bf16.msra.mxu0 %v2190
    %2879 = vmatpush.bf16.msra.mxu0 %v2184
    %2880 = vmatpush.bf16.msra.mxu0 %v2178
    %2881 = vmatmul.bf16.gmra.mxu0 %v671
    %v2882 = vpop.f32.mrf.mxu0
    %v2883 = vadd.f32 %v2870, %v2882
    %v2884 = vpop.f32.mrf.mxu0
    %2885 = vdwg.mxu0
    %2886 = vmatpush.bf16.msra.mxu0 %v2268
    %2887 = vmatpush.bf16.msra.mxu0 %v2262
    %2888 = vmatpush.bf16.msra.mxu0 %v2256
    %2889 = vmatpush.bf16.msra.mxu0 %v2250
    %2890 = vmatpush.bf16.msra.mxu0 %v2244
    %2891 = vmatpush.bf16.msra.mxu0 %v2238
    %2892 = vmatpush.bf16.msra.mxu0 %v2232
    %2893 = vmatpush.bf16.msra.mxu0 %v2226
    %2894 = vmatmul.bf16.gmra.mxu0 %v672
    %v2895 = vpop.f32.mrf.mxu0
    %v2896 = vadd.f32 %v2883, %v2895
    %v2897 = vpop.f32.mrf.mxu0
    %2898 = vdwg.mxu0
    %2899 = vmatpush.bf16.msra.mxu0 %v2316
    %2900 = vmatpush.bf16.msra.mxu0 %v2310
    %2901 = vmatpush.bf16.msra.mxu0 %v2304
    %2902 = vmatpush.bf16.msra.mxu0 %v2298
    %2903 = vmatpush.bf16.msra.mxu0 %v2292
    %2904 = vmatpush.bf16.msra.mxu0 %v2286
    %2905 = vmatpush.bf16.msra.mxu0 %v2280
    %2906 = vmatpush.bf16.msra.mxu0 %v2274
    %2907 = vmatmul.bf16.gmra.mxu0 %v673
    %v2908 = vpop.f32.mrf.mxu0
    %v2909 = vadd.f32 %v2896, %v2908
    %v2910 = vpop.f32.mrf.mxu0
    %2911 = vdwg.mxu0
    %2912 = vmatpush.bf16.msra.mxu0 %v2364
    %2913 = vmatpush.bf16.msra.mxu0 %v2358
    %2914 = vmatpush.bf16.msra.mxu0 %v2352
    %2915 = vmatpush.bf16.msra.mxu0 %v2346
    %2916 = vmatpush.bf16.msra.mxu0 %v2340
    %2917 = vmatpush.bf16.msra.mxu0 %v2334
    %2918 = vmatpush.bf16.msra.mxu0 %v2328
    %2919 = vmatpush.bf16.msra.mxu0 %v2322
    %2920 = vmatmul.bf16.gmra.mxu0 %v674
    %v2921 = vpop.f32.mrf.mxu0
    %v2922 = vadd.f32 %v2909, %v2921
    %v2923 = vpop.f32.mrf.mxu0
    %2924 = vdwg.mxu0
    %2925 = vmatpush.bf16.msra.mxu0 %v2412
    %2926 = vmatpush.bf16.msra.mxu0 %v2406
    %2927 = vmatpush.bf16.msra.mxu0 %v2400
    %2928 = vmatpush.bf16.msra.mxu0 %v2394
    %2929 = vmatpush.bf16.msra.mxu0 %v2388
    %2930 = vmatpush.bf16.msra.mxu0 %v2382
    %2931 = vmatpush.bf16.msra.mxu0 %v2376
    %2932 = vmatpush.bf16.msra.mxu0 %v2370
    %2933 = vmatmul.bf16.gmra.mxu0 %v675
    %v2934 = vpop.f32.mrf.mxu0
    %v2935 = vadd.f32 %v2922, %v2934
    %v2936 = vpop.f32.mrf.mxu0
    %2937 = vdwg.mxu0
    %2938 = vmatpush.bf16.msra.mxu0 %v2173
    %2939 = vmatpush.bf16.msra.mxu0 %v2167
    %2940 = vmatpush.bf16.msra.mxu0 %v2161
    %2941 = vmatpush.bf16.msra.mxu0 %v2155
    %2942 = vmatpush.bf16.msra.mxu0 %v2149
    %2943 = vmatpush.bf16.msra.mxu0 %v2143
    %2944 = vmatpush.bf16.msra.mxu0 %v2137
    %2945 = vmatpush.bf16.msra.mxu0 %v2131
    %2946 = vmatmul.bf16.gmra.mxu0 %v670
    %v2947 = vpop.f32.mrf.mxu0
    %v2948 = vadd.f32 0.0, %v2947
    %v2949 = vpop.f32.mrf.mxu0
    %2950 = vdwg.mxu0
    %2951 = vmatpush.bf16.msra.mxu0 %v2221
    %2952 = vmatpush.bf16.msra.mxu0 %v2215
    %2953 = vmatpush.bf16.msra.mxu0 %v2209
    %2954 = vmatpush.bf16.msra.mxu0 %v2203
    %2955 = vmatpush.bf16.msra.mxu0 %v2197
    %2956 = vmatpush.bf16.msra.mxu0 %v2191
    %2957 = vmatpush.bf16.msra.mxu0 %v2185
    %2958 = vmatpush.bf16.msra.mxu0 %v2179
    %2959 = vmatmul.bf16.gmra.mxu0 %v671
    %v2960 = vpop.f32.mrf.mxu0
    %v2961 = vadd.f32 %v2948, %v2960
    %v2962 = vpop.f32.mrf.mxu0
    %2963 = vdwg.mxu0
    %2964 = vmatpush.bf16.msra.mxu0 %v2269
    %2965 = vmatpush.bf16.msra.mxu0 %v2263
    %2966 = vmatpush.bf16.msra.mxu0 %v2257
    %2967 = vmatpush.bf16.msra.mxu0 %v2251
    %2968 = vmatpush.bf16.msra.mxu0 %v2245
    %2969 = vmatpush.bf16.msra.mxu0 %v2239
    %2970 = vmatpush.bf16.msra.mxu0 %v2233
    %2971 = vmatpush.bf16.msra.mxu0 %v2227
    %2972 = vmatmul.bf16.gmra.mxu0 %v672
    %v2973 = vpop.f32.mrf.mxu0
    %v2974 = vadd.f32 %v2961, %v2973
    %v2975 = vpop.f32.mrf.mxu0
    %2976 = vdwg.mxu0
    %2977 = vmatpush.bf16.msra.mxu0 %v2317
    %2978 = vmatpush.bf16.msra.mxu0 %v2311
    %2979 = vmatpush.bf16.msra.mxu0 %v2305
    %2980 = vmatpush.bf16.msra.mxu0 %v2299
    %2981 = vmatpush.bf16.msra.mxu0 %v2293
    %2982 = vmatpush.bf16.msra.mxu0 %v2287
    %2983 = vmatpush.bf16.msra.mxu0 %v2281
    %2984 = vmatpush.bf16.msra.mxu0 %v2275
    %2985 = vmatmul.bf16.gmra.mxu0 %v673
    %v2986 = vpop.f32.mrf.mxu0
    %v2987 = vadd.f32 %v2974, %v2986
    %v2988 = vpop.f32.mrf.mxu0
    %2989 = vdwg.mxu0
    %2990 = vmatpush.bf16.msra.mxu0 %v2365
    %2991 = vmatpush.bf16.msra.mxu0 %v2359
    %2992 = vmatpush.bf16.msra.mxu0 %v2353
    %2993 = vmatpush.bf16.msra.mxu0 %v2347
    %2994 = vmatpush.bf16.msra.mxu0 %v2341
    %2995 = vmatpush.bf16.msra.mxu0 %v2335
    %2996 = vmatpush.bf16.msra.mxu0 %v2329
    %2997 = vmatpush.bf16.msra.mxu0 %v2323
    %2998 = vmatmul.bf16.gmra.mxu0 %v674
    %v2999 = vpop.f32.mrf.mxu0
    %v3000 = vadd.f32 %v2987, %v2999
    %v3001 = vpop.f32.mrf.mxu0
    %3002 = vdwg.mxu0
    %3003 = vmatpush.bf16.msra.mxu0 %v2413
    %3004 = vmatpush.bf16.msra.mxu0 %v2407
    %3005 = vmatpush.bf16.msra.mxu0 %v2401
    %3006 = vmatpush.bf16.msra.mxu0 %v2395
    %3007 = vmatpush.bf16.msra.mxu0 %v2389
    %3008 = vmatpush.bf16.msra.mxu0 %v2383
    %3009 = vmatpush.bf16.msra.mxu0 %v2377
    %3010 = vmatpush.bf16.msra.mxu0 %v2371
    %3011 = vmatmul.bf16.gmra.mxu0 %v675
    %v3012 = vpop.f32.mrf.mxu0
    %v3013 = vadd.f32 %v3000, %v3012
    %v3014 = vpop.f32.mrf.mxu0
    %3015 = vdwg.mxu0
    %3016 = vmatpush.bf16.msra.mxu0 %v2174
    %3017 = vmatpush.bf16.msra.mxu0 %v2168
    %3018 = vmatpush.bf16.msra.mxu0 %v2162
    %3019 = vmatpush.bf16.msra.mxu0 %v2156
    %3020 = vmatpush.bf16.msra.mxu0 %v2150
    %3021 = vmatpush.bf16.msra.mxu0 %v2144
    %3022 = vmatpush.bf16.msra.mxu0 %v2138
    %3023 = vmatpush.bf16.msra.mxu0 %v2132
    %3024 = vmatmul.bf16.gmra.mxu0 %v670
    %v3025 = vpop.f32.mrf.mxu0
    %v3026 = vadd.f32 0.0, %v3025
    %v3027 = vpop.f32.mrf.mxu0
    %3028 = vdwg.mxu0
    %3029 = vmatpush.bf16.msra.mxu0 %v2222
    %3030 = vmatpush.bf16.msra.mxu0 %v2216
    %3031 = vmatpush.bf16.msra.mxu0 %v2210
    %3032 = vmatpush.bf16.msra.mxu0 %v2204
    %3033 = vmatpush.bf16.msra.mxu0 %v2198
    %3034 = vmatpush.bf16.msra.mxu0 %v2192
    %3035 = vmatpush.bf16.msra.mxu0 %v2186
    %3036 = vmatpush.bf16.msra.mxu0 %v2180
    %3037 = vmatmul.bf16.gmra.mxu0 %v671
    %v3038 = vpop.f32.mrf.mxu0
    %v3039 = vadd.f32 %v3026, %v3038
    %v3040 = vpop.f32.mrf.mxu0
    %3041 = vdwg.mxu0
    %3042 = vmatpush.bf16.msra.mxu0 %v2270
    %3043 = vmatpush.bf16.msra.mxu0 %v2264
    %3044 = vmatpush.bf16.msra.mxu0 %v2258
    %3045 = vmatpush.bf16.msra.mxu0 %v2252
    %3046 = vmatpush.bf16.msra.mxu0 %v2246
    %3047 = vmatpush.bf16.msra.mxu0 %v2240
    %3048 = vmatpush.bf16.msra.mxu0 %v2234
    %3049 = vmatpush.bf16.msra.mxu0 %v2228
    %3050 = vmatmul.bf16.gmra.mxu0 %v672
    %v3051 = vpop.f32.mrf.mxu0
    %v3052 = vadd.f32 %v3039, %v3051
    %v3053 = vpop.f32.mrf.mxu0
    %3054 = vdwg.mxu0
    %3055 = vmatpush.bf16.msra.mxu0 %v2318
    %3056 = vmatpush.bf16.msra.mxu0 %v2312
    %3057 = vmatpush.bf16.msra.mxu0 %v2306
    %3058 = vmatpush.bf16.msra.mxu0 %v2300
    %3059 = vmatpush.bf16.msra.mxu0 %v2294
    %3060 = vmatpush.bf16.msra.mxu0 %v2288
    %3061 = vmatpush.bf16.msra.mxu0 %v2282
    %3062 = vmatpush.bf16.msra.mxu0 %v2276
    %3063 = vmatmul.bf16.gmra.mxu0 %v673
    %v3064 = vpop.f32.mrf.mxu0
    %v3065 = vadd.f32 %v3052, %v3064
    %v3066 = vpop.f32.mrf.mxu0
    %3067 = vdwg.mxu0
    %3068 = vmatpush.bf16.msra.mxu0 %v2366
    %3069 = vmatpush.bf16.msra.mxu0 %v2360
    %3070 = vmatpush.bf16.msra.mxu0 %v2354
    %3071 = vmatpush.bf16.msra.mxu0 %v2348
    %3072 = vmatpush.bf16.msra.mxu0 %v2342
    %3073 = vmatpush.bf16.msra.mxu0 %v2336
    %3074 = vmatpush.bf16.msra.mxu0 %v2330
    %3075 = vmatpush.bf16.msra.mxu0 %v2324
    %3076 = vmatmul.bf16.gmra.mxu0 %v674
    %v3077 = vpop.f32.mrf.mxu0
    %v3078 = vadd.f32 %v3065, %v3077
    %v3079 = vpop.f32.mrf.mxu0
    %3080 = vdwg.mxu0
    %3081 = vmatpush.bf16.msra.mxu0 %v2414
    %3082 = vmatpush.bf16.msra.mxu0 %v2408
    %3083 = vmatpush.bf16.msra.mxu0 %v2402
    %3084 = vmatpush.bf16.msra.mxu0 %v2396
    %3085 = vmatpush.bf16.msra.mxu0 %v2390
    %3086 = vmatpush.bf16.msra.mxu0 %v2384
    %3087 = vmatpush.bf16.msra.mxu0 %v2378
    %3088 = vmatpush.bf16.msra.mxu0 %v2372
    %3089 = vmatmul.bf16.gmra.mxu0 %v675
    %v3090 = vpop.f32.mrf.mxu0
    %v3091 = vadd.f32 %v3078, %v3090
    %v3092 = vpop.f32.mrf.mxu0
    %3093 = vdwg.mxu0
    %3094 = vmatpush.bf16.msra.mxu0 %v2175
    %3095 = vmatpush.bf16.msra.mxu0 %v2169
    %3096 = vmatpush.bf16.msra.mxu0 %v2163
    %3097 = vmatpush.bf16.msra.mxu0 %v2157
    %3098 = vmatpush.bf16.msra.mxu0 %v2151
    %3099 = vmatpush.bf16.msra.mxu0 %v2145
    %3100 = vmatpush.bf16.msra.mxu0 %v2139
    %3101 = vmatpush.bf16.msra.mxu0 %v2133
    %3102 = vmatmul.bf16.gmra.mxu0 %v670
    %v3103 = vpop.f32.mrf.mxu0
    %v3104 = vadd.f32 0.0, %v3103
    %v3105 = vpop.f32.mrf.mxu0
    %3106 = vdwg.mxu0
    %3107 = vmatpush.bf16.msra.mxu0 %v2223
    %3108 = vmatpush.bf16.msra.mxu0 %v2217
    %3109 = vmatpush.bf16.msra.mxu0 %v2211
    %3110 = vmatpush.bf16.msra.mxu0 %v2205
    %3111 = vmatpush.bf16.msra.mxu0 %v2199
    %3112 = vmatpush.bf16.msra.mxu0 %v2193
    %3113 = vmatpush.bf16.msra.mxu0 %v2187
    %3114 = vmatpush.bf16.msra.mxu0 %v2181
    %3115 = vmatmul.bf16.gmra.mxu0 %v671
    %v3116 = vpop.f32.mrf.mxu0
    %v3117 = vadd.f32 %v3104, %v3116
    %v3118 = vpop.f32.mrf.mxu0
    %3119 = vdwg.mxu0
    %3120 = vmatpush.bf16.msra.mxu0 %v2271
    %3121 = vmatpush.bf16.msra.mxu0 %v2265
    %3122 = vmatpush.bf16.msra.mxu0 %v2259
    %3123 = vmatpush.bf16.msra.mxu0 %v2253
    %3124 = vmatpush.bf16.msra.mxu0 %v2247
    %3125 = vmatpush.bf16.msra.mxu0 %v2241
    %3126 = vmatpush.bf16.msra.mxu0 %v2235
    %3127 = vmatpush.bf16.msra.mxu0 %v2229
    %3128 = vmatmul.bf16.gmra.mxu0 %v672
    %v3129 = vpop.f32.mrf.mxu0
    %v3130 = vadd.f32 %v3117, %v3129
    %v3131 = vpop.f32.mrf.mxu0
    %3132 = vdwg.mxu0
    %3133 = vmatpush.bf16.msra.mxu0 %v2319
    %3134 = vmatpush.bf16.msra.mxu0 %v2313
    %3135 = vmatpush.bf16.msra.mxu0 %v2307
    %3136 = vmatpush.bf16.msra.mxu0 %v2301
    %3137 = vmatpush.bf16.msra.mxu0 %v2295
    %3138 = vmatpush.bf16.msra.mxu0 %v2289
    %3139 = vmatpush.bf16.msra.mxu0 %v2283
    %3140 = vmatpush.bf16.msra.mxu0 %v2277
    %3141 = vmatmul.bf16.gmra.mxu0 %v673
    %v3142 = vpop.f32.mrf.mxu0
    %v3143 = vadd.f32 %v3130, %v3142
    %v3144 = vpop.f32.mrf.mxu0
    %3145 = vdwg.mxu0
    %3146 = vmatpush.bf16.msra.mxu0 %v2367
    %3147 = vmatpush.bf16.msra.mxu0 %v2361
    %3148 = vmatpush.bf16.msra.mxu0 %v2355
    %3149 = vmatpush.bf16.msra.mxu0 %v2349
    %3150 = vmatpush.bf16.msra.mxu0 %v2343
    %3151 = vmatpush.bf16.msra.mxu0 %v2337
    %3152 = vmatpush.bf16.msra.mxu0 %v2331
    %3153 = vmatpush.bf16.msra.mxu0 %v2325
    %3154 = vmatmul.bf16.gmra.mxu0 %v674
    %v3155 = vpop.f32.mrf.mxu0
    %v3156 = vadd.f32 %v3143, %v3155
    %v3157 = vpop.f32.mrf.mxu0
    %3158 = vdwg.mxu0
    %3159 = vmatpush.bf16.msra.mxu0 %v2415
    %3160 = vmatpush.bf16.msra.mxu0 %v2409
    %3161 = vmatpush.bf16.msra.mxu0 %v2403
    %3162 = vmatpush.bf16.msra.mxu0 %v2397
    %3163 = vmatpush.bf16.msra.mxu0 %v2391
    %3164 = vmatpush.bf16.msra.mxu0 %v2385
    %3165 = vmatpush.bf16.msra.mxu0 %v2379
    %3166 = vmatpush.bf16.msra.mxu0 %v2373
    %3167 = vmatmul.bf16.gmra.mxu0 %v675
    %v3168 = vpop.f32.mrf.mxu0
    %v3169 = vadd.f32 %v3156, %v3168
    %v3170 = vpop.f32.mrf.mxu0
    %3171 = vdwg.mxu0
    %v3460 = vunpack.c.l.b16 %v688
    %v3461 = vunpack.c.h.b16 %v688
    %v3462 = vunpack.c.l.b16 %v689
    %v3463 = vunpack.c.h.b16 %v689
    %v3464 = vunpack.c.l.b16 %v690
    %v3465 = vunpack.c.h.b16 %v690
    %v3466 = vunpack.c.l.b16 %v691
    %v3467 = vunpack.c.h.b16 %v691
    %v3468 = vunpack.c.l.b16 %v692
    %v3469 = vunpack.c.h.b16 %v692
    %v3470 = vunpack.c.l.b16 %v693
    %v3471 = vunpack.c.h.b16 %v693
    %v3472 = vunpack.c.l.b16 %v694
    %v3473 = vunpack.c.h.b16 %v694
    %v3474 = vunpack.c.l.b16 %v695
    %v3475 = vunpack.c.h.b16 %v695
    %v3476 = vunpack.c.l.b16 %v696
    %v3477 = vunpack.c.h.b16 %v696
    %v3478 = vunpack.c.l.b16 %v697
    %v3479 = vunpack.c.h.b16 %v697
    %v3480 = vunpack.c.l.b16 %v698
    %v3481 = vunpack.c.h.b16 %v698
    %v3482 = vunpack.c.l.b16 %v699
    %v3483 = vunpack.c.h.b16 %v699
    %v3484 = vunpack.c.l.b16 %v700
    %v3485 = vunpack.c.h.b16 %v700
    %v3486 = vunpack.c.l.b16 %v701
    %v3487 = vunpack.c.h.b16 %v701
    %v3488 = vunpack.c.l.b16 %v702
    %v3489 = vunpack.c.h.b16 %v702
    %v3490 = vunpack.c.l.b16 %v703
    %v3491 = vunpack.c.h.b16 %v703
    %v3492 = vunpack.c.l.b16 %v704
    %v3493 = vunpack.c.h.b16 %v704
    %v3494 = vunpack.c.l.b16 %v705
    %v3495 = vunpack.c.h.b16 %v705
    %v3496 = vunpack.c.l.b16 %v706
    %v3497 = vunpack.c.h.b16 %v706
    %v3498 = vunpack.c.l.b16 %v707
    %v3499 = vunpack.c.h.b16 %v707
    %v3500 = vunpack.c.l.b16 %v708
    %v3501 = vunpack.c.h.b16 %v708
    %v3502 = vunpack.c.l.b16 %v709
    %v3503 = vunpack.c.h.b16 %v709
    %v3504 = vunpack.c.l.b16 %v710
    %v3505 = vunpack.c.h.b16 %v710
    %v3506 = vunpack.c.l.b16 %v711
    %v3507 = vunpack.c.h.b16 %v711
    %v3508 = vunpack.c.l.b16 %v712
    %v3509 = vunpack.c.h.b16 %v712
    %v3510 = vunpack.c.l.b16 %v713
    %v3511 = vunpack.c.h.b16 %v713
    %v3512 = vunpack.c.l.b16 %v714
    %v3513 = vunpack.c.h.b16 %v714
    %v3514 = vunpack.c.l.b16 %v715
    %v3515 = vunpack.c.h.b16 %v715
    %v3516 = vunpack.c.l.b16 %v716
    %v3517 = vunpack.c.h.b16 %v716
    %v3518 = vunpack.c.l.b16 %v717
    %v3519 = vunpack.c.h.b16 %v717
    %v3520 = vunpack.c.l.b16 %v718
    %v3521 = vunpack.c.h.b16 %v718
    %v3522 = vunpack.c.l.b16 %v719
    %v3523 = vunpack.c.h.b16 %v719
    %v3524 = vunpack.c.l.b16 %v720
    %v3525 = vunpack.c.h.b16 %v720
    %v3526 = vunpack.c.l.b16 %v721
    %v3527 = vunpack.c.h.b16 %v721
    %v3528 = vunpack.c.l.b16 %v722
    %v3529 = vunpack.c.h.b16 %v722
    %v3530 = vunpack.c.l.b16 %v723
    %v3531 = vunpack.c.h.b16 %v723
    %v3532 = vunpack.c.l.b16 %v724
    %v3533 = vunpack.c.h.b16 %v724
    %v3534 = vunpack.c.l.b16 %v725
    %v3535 = vunpack.c.h.b16 %v725
    %v3536 = vunpack.c.l.b16 %v726
    %v3537 = vunpack.c.h.b16 %v726
    %v3538 = vunpack.c.l.b16 %v727
    %v3539 = vunpack.c.h.b16 %v727
    %v3540 = vunpack.c.l.b16 %v728
    %v3541 = vunpack.c.h.b16 %v728
    %v3542 = vunpack.c.l.b16 %v729
    %v3543 = vunpack.c.h.b16 %v729
    %v3544 = vunpack.c.l.b16 %v730
    %v3545 = vunpack.c.h.b16 %v730
    %v3546 = vunpack.c.l.b16 %v731
    %v3547 = vunpack.c.h.b16 %v731
    %v3548 = vunpack.c.l.b16 %v732
    %v3549 = vunpack.c.h.b16 %v732
    %v3550 = vunpack.c.l.b16 %v733
    %v3551 = vunpack.c.h.b16 %v733
    %v3552 = vunpack.c.l.b16 %v734
    %v3553 = vunpack.c.h.b16 %v734
    %v3554 = vunpack.c.l.b16 %v735
    %v3555 = vunpack.c.h.b16 %v735
    %v3556 = vunpack.c.l.b16 %v736
    %v3557 = vunpack.c.h.b16 %v736
    %v3558 = vunpack.c.l.b16 %v737
    %v3559 = vunpack.c.h.b16 %v737
    %v3560 = vunpack.c.l.b16 %v738
    %v3561 = vunpack.c.h.b16 %v738
    %v3562 = vunpack.c.l.b16 %v739
    %v3563 = vunpack.c.h.b16 %v739
    %v3564 = vunpack.c.l.b16 %v740
    %v3565 = vunpack.c.h.b16 %v740
    %v3566 = vunpack.c.l.b16 %v741
    %v3567 = vunpack.c.h.b16 %v741
    %v3568 = vunpack.c.l.b16 %v742
    %v3569 = vunpack.c.h.b16 %v742
    %v3570 = vunpack.c.l.b16 %v743
    %v3571 = vunpack.c.h.b16 %v743
    %v3572 = vunpack.c.l.b16 %v744
    %v3573 = vunpack.c.h.b16 %v744
    %v3574 = vunpack.c.l.b16 %v745
    %v3575 = vunpack.c.h.b16 %v745
    %v3576 = vunpack.c.l.b16 %v746
    %v3577 = vunpack.c.h.b16 %v746
    %v3578 = vunpack.c.l.b16 %v747
    %v3579 = vunpack.c.h.b16 %v747
    %v3580 = vunpack.c.l.b16 %v748
    %v3581 = vunpack.c.h.b16 %v748
    %v3582 = vunpack.c.l.b16 %v749
    %v3583 = vunpack.c.h.b16 %v749
    %v3584 = vunpack.c.l.b16 %v750
    %v3585 = vunpack.c.h.b16 %v750
    %v3586 = vunpack.c.l.b16 %v751
    %v3587 = vunpack.c.h.b16 %v751
    %v3588 = vunpack.c.l.b16 %v752
    %v3589 = vunpack.c.h.b16 %v752
    %v3590 = vunpack.c.l.b16 %v753
    %v3591 = vunpack.c.h.b16 %v753
    %v3592 = vunpack.c.l.b16 %v754
    %v3593 = vunpack.c.h.b16 %v754
    %v3594 = vunpack.c.l.b16 %v755
    %v3595 = vunpack.c.h.b16 %v755
    %v3596 = vunpack.c.l.b16 %v756
    %v3597 = vunpack.c.h.b16 %v756
    %v3598 = vunpack.c.l.b16 %v757
    %v3599 = vunpack.c.h.b16 %v757
    %v3600 = vunpack.c.l.b16 %v758
    %v3601 = vunpack.c.h.b16 %v758
    %v3602 = vunpack.c.l.b16 %v759
    %v3603 = vunpack.c.h.b16 %v759
    %v3604 = vunpack.c.l.b16 %v760
    %v3605 = vunpack.c.h.b16 %v760
    %v3606 = vunpack.c.l.b16 %v761
    %v3607 = vunpack.c.h.b16 %v761
    %v3608 = vunpack.c.l.b16 %v762
    %v3609 = vunpack.c.h.b16 %v762
    %v3610 = vunpack.c.l.b16 %v763
    %v3611 = vunpack.c.h.b16 %v763
    %v3612 = vunpack.c.l.b16 %v764
    %v3613 = vunpack.c.h.b16 %v764
    %v3614 = vunpack.c.l.b16 %v765
    %v3615 = vunpack.c.h.b16 %v765
    %v3616 = vunpack.c.l.b16 %v766
    %v3617 = vunpack.c.h.b16 %v766
    %v3618 = vunpack.c.l.b16 %v767
    %v3619 = vunpack.c.h.b16 %v767
    %v3620 = vunpack.c.l.b16 %v768
    %v3621 = vunpack.c.h.b16 %v768
    %v3622 = vunpack.c.l.b16 %v769
    %v3623 = vunpack.c.h.b16 %v769
    %v3624 = vunpack.c.l.b16 %v770
    %v3625 = vunpack.c.h.b16 %v770
    %v3626 = vunpack.c.l.b16 %v771
    %v3627 = vunpack.c.h.b16 %v771
    %v3628 = vunpack.c.l.b16 %v772
    %v3629 = vunpack.c.h.b16 %v772
    %v3630 = vunpack.c.l.b16 %v773
    %v3631 = vunpack.c.h.b16 %v773
    %v3632 = vunpack.c.l.b16 %v774
    %v3633 = vunpack.c.h.b16 %v774
    %v3634 = vunpack.c.l.b16 %v775
    %v3635 = vunpack.c.h.b16 %v775
    %v3636 = vunpack.c.l.b16 %v776
    %v3637 = vunpack.c.h.b16 %v776
    %v3638 = vunpack.c.l.b16 %v777
    %v3639 = vunpack.c.h.b16 %v777
    %v3640 = vunpack.c.l.b16 %v778
    %v3641 = vunpack.c.h.b16 %v778
    %v3642 = vunpack.c.l.b16 %v779
    %v3643 = vunpack.c.h.b16 %v779
    %v3644 = vunpack.c.l.b16 %v780
    %v3645 = vunpack.c.h.b16 %v780
    %v3646 = vunpack.c.l.b16 %v781
    %v3647 = vunpack.c.h.b16 %v781
    %v3648 = vunpack.c.l.b16 %v782
    %v3649 = vunpack.c.h.b16 %v782
    %v3650 = vunpack.c.l.b16 %v783
    %v3651 = vunpack.c.h.b16 %v783
    %v3652 = vunpack.c.l.b16 %v784
    %v3653 = vunpack.c.h.b16 %v784
    %v3654 = vunpack.c.l.b16 %v785
    %v3655 = vunpack.c.h.b16 %v785
    %v3656 = vunpack.c.l.b16 %v786
    %v3657 = vunpack.c.h.b16 %v786
    %v3658 = vunpack.c.l.b16 %v787
    %v3659 = vunpack.c.h.b16 %v787
    %v3660 = vunpack.c.l.b16 %v788
    %v3661 = vunpack.c.h.b16 %v788
    %v3662 = vunpack.c.l.b16 %v789
    %v3663 = vunpack.c.h.b16 %v789
    %v3664 = vunpack.c.l.b16 %v790
    %v3665 = vunpack.c.h.b16 %v790
    %v3666 = vunpack.c.l.b16 %v791
    %v3667 = vunpack.c.h.b16 %v791
    %v3668 = vunpack.c.l.b16 %v792
    %v3669 = vunpack.c.h.b16 %v792
    %v3670 = vunpack.c.l.b16 %v793
    %v3671 = vunpack.c.h.b16 %v793
    %v3672 = vunpack.c.l.b16 %v794
    %v3673 = vunpack.c.h.b16 %v794
    %v3674 = vunpack.c.l.b16 %v795
    %v3675 = vunpack.c.h.b16 %v795
    %v3676 = vunpack.c.l.b16 %v796
    %v3677 = vunpack.c.h.b16 %v796
    %v3678 = vunpack.c.l.b16 %v797
    %v3679 = vunpack.c.h.b16 %v797
    %v3680 = vunpack.c.l.b16 %v798
    %v3681 = vunpack.c.h.b16 %v798
    %v3682 = vunpack.c.l.b16 %v799
    %v3683 = vunpack.c.h.b16 %v799
    %v3684 = vunpack.c.l.b16 %v800
    %v3685 = vunpack.c.h.b16 %v800
    %v3686 = vunpack.c.l.b16 %v801
    %v3687 = vunpack.c.h.b16 %v801
    %v3688 = vunpack.c.l.b16 %v802
    %v3689 = vunpack.c.h.b16 %v802
    %v3690 = vunpack.c.l.b16 %v803
    %v3691 = vunpack.c.h.b16 %v803
    %v3692 = vunpack.c.l.b16 %v804
    %v3693 = vunpack.c.h.b16 %v804
    %v3694 = vunpack.c.l.b16 %v805
    %v3695 = vunpack.c.h.b16 %v805
    %v3696 = vunpack.c.l.b16 %v806
    %v3697 = vunpack.c.h.b16 %v806
    %v3698 = vunpack.c.l.b16 %v807
    %v3699 = vunpack.c.h.b16 %v807
    %v3700 = vunpack.c.l.b16 %v808
    %v3701 = vunpack.c.h.b16 %v808
    %v3702 = vunpack.c.l.b16 %v809
    %v3703 = vunpack.c.h.b16 %v809
    %v3704 = vunpack.c.l.b16 %v810
    %v3705 = vunpack.c.h.b16 %v810
    %v3706 = vunpack.c.l.b16 %v811
    %v3707 = vunpack.c.h.b16 %v811
    %v3708 = vunpack.c.l.b16 %v812
    %v3709 = vunpack.c.h.b16 %v812
    %v3710 = vunpack.c.l.b16 %v813
    %v3711 = vunpack.c.h.b16 %v813
    %v3712 = vunpack.c.l.b16 %v814
    %v3713 = vunpack.c.h.b16 %v814
    %v3714 = vunpack.c.l.b16 %v815
    %v3715 = vunpack.c.h.b16 %v815
    %v3716 = vunpack.c.l.b16 %v816
    %v3717 = vunpack.c.h.b16 %v816
    %v3718 = vunpack.c.l.b16 %v817
    %v3719 = vunpack.c.h.b16 %v817
    %v3720 = vunpack.c.l.b16 %v818
    %v3721 = vunpack.c.h.b16 %v818
    %v3722 = vunpack.c.l.b16 %v819
    %v3723 = vunpack.c.h.b16 %v819
    %v3724 = vunpack.c.l.b16 %v820
    %v3725 = vunpack.c.h.b16 %v820
    %v3726 = vunpack.c.l.b16 %v821
    %v3727 = vunpack.c.h.b16 %v821
    %v3728 = vunpack.c.l.b16 %v822
    %v3729 = vunpack.c.h.b16 %v822
    %v3730 = vunpack.c.l.b16 %v823
    %v3731 = vunpack.c.h.b16 %v823
    %v3732 = vunpack.c.l.b16 %v824
    %v3733 = vunpack.c.h.b16 %v824
    %v3734 = vunpack.c.l.b16 %v825
    %v3735 = vunpack.c.h.b16 %v825
    %v3736 = vunpack.c.l.b16 %v826
    %v3737 = vunpack.c.h.b16 %v826
    %v3738 = vunpack.c.l.b16 %v827
    %v3739 = vunpack.c.h.b16 %v827
    %v3740 = vunpack.c.l.b16 %v828
    %v3741 = vunpack.c.h.b16 %v828
    %v3742 = vunpack.c.l.b16 %v829
    %v3743 = vunpack.c.h.b16 %v829
    %v3744 = vunpack.c.l.b16 %v830
    %v3745 = vunpack.c.h.b16 %v830
    %v3746 = vunpack.c.l.b16 %v831
    %v3747 = vunpack.c.h.b16 %v831
    %v3748 = vunpack.c.l.b16 %v832
    %v3749 = vunpack.c.h.b16 %v832
    %v3750 = vunpack.c.l.b16 %v833
    %v3751 = vunpack.c.h.b16 %v833
    %v3752 = vunpack.c.l.b16 %v834
    %v3753 = vunpack.c.h.b16 %v834
    %v3754 = vunpack.c.l.b16 %v835
    %v3755 = vunpack.c.h.b16 %v835
    %v3756 = vunpack.c.l.b16 %v836
    %v3757 = vunpack.c.h.b16 %v836
    %v3758 = vunpack.c.l.b16 %v837
    %v3759 = vunpack.c.h.b16 %v837
    %v3760 = vunpack.c.l.b16 %v838
    %v3761 = vunpack.c.h.b16 %v838
    %v3762 = vunpack.c.l.b16 %v839
    %v3763 = vunpack.c.h.b16 %v839
    %v3764 = vunpack.c.l.b16 %v840
    %v3765 = vunpack.c.h.b16 %v840
    %v3766 = vunpack.c.l.b16 %v841
    %v3767 = vunpack.c.h.b16 %v841
    %v3768 = vunpack.c.l.b16 %v842
    %v3769 = vunpack.c.h.b16 %v842
    %v3770 = vunpack.c.l.b16 %v843
    %v3771 = vunpack.c.h.b16 %v843
    %v3772 = vunpack.c.l.b16 %v844
    %v3773 = vunpack.c.h.b16 %v844
    %v3774 = vunpack.c.l.b16 %v845
    %v3775 = vunpack.c.h.b16 %v845
    %v3776 = vunpack.c.l.b16 %v846
    %v3777 = vunpack.c.h.b16 %v846
    %v3778 = vunpack.c.l.b16 %v847
    %v3779 = vunpack.c.h.b16 %v847
    %v3780 = vunpack.c.l.b16 %v848
    %v3781 = vunpack.c.h.b16 %v848
    %v3782 = vunpack.c.l.b16 %v849
    %v3783 = vunpack.c.h.b16 %v849
    %v3784 = vunpack.c.l.b16 %v850
    %v3785 = vunpack.c.h.b16 %v850
    %v3786 = vunpack.c.l.b16 %v851
    %v3787 = vunpack.c.h.b16 %v851
    %v3788 = vunpack.c.l.b16 %v852
    %v3789 = vunpack.c.h.b16 %v852
    %v3790 = vunpack.c.l.b16 %v853
    %v3791 = vunpack.c.h.b16 %v853
    %v3792 = vunpack.c.l.b16 %v854
    %v3793 = vunpack.c.h.b16 %v854
    %v3794 = vunpack.c.l.b16 %v855
    %v3795 = vunpack.c.h.b16 %v855
    %v3796 = vunpack.c.l.b16 %v856
    %v3797 = vunpack.c.h.b16 %v856
    %v3798 = vunpack.c.l.b16 %v857
    %v3799 = vunpack.c.h.b16 %v857
    %v3800 = vunpack.c.l.b16 %v858
    %v3801 = vunpack.c.h.b16 %v858
    %v3802 = vunpack.c.l.b16 %v859
    %v3803 = vunpack.c.h.b16 %v859
    %v3804 = vunpack.c.l.b16 %v860
    %v3805 = vunpack.c.h.b16 %v860
    %v3806 = vunpack.c.l.b16 %v861
    %v3807 = vunpack.c.h.b16 %v861
    %v3808 = vunpack.c.l.b16 %v862
    %v3809 = vunpack.c.h.b16 %v862
    %v3810 = vunpack.c.l.b16 %v863
    %v3811 = vunpack.c.h.b16 %v863
    %v3812 = vunpack.c.l.b16 %v864
    %v3813 = vunpack.c.h.b16 %v864
    %v3814 = vunpack.c.l.b16 %v865
    %v3815 = vunpack.c.h.b16 %v865
    %v3816 = vunpack.c.l.b16 %v866
    %v3817 = vunpack.c.h.b16 %v866
    %v3818 = vunpack.c.l.b16 %v867
    %v3819 = vunpack.c.h.b16 %v867
    %v3820 = vunpack.c.l.b16 %v868
    %v3821 = vunpack.c.h.b16 %v868
    %v3822 = vunpack.c.l.b16 %v869
    %v3823 = vunpack.c.h.b16 %v869
    %v3824 = vunpack.c.l.b16 %v870
    %v3825 = vunpack.c.h.b16 %v870
    %v3826 = vunpack.c.l.b16 %v871
    %v3827 = vunpack.c.h.b16 %v871
    %v3828 = vunpack.c.l.b16 %v872
    %v3829 = vunpack.c.h.b16 %v872
    %v3830 = vunpack.c.l.b16 %v873
    %v3831 = vunpack.c.h.b16 %v873
    %v3832 = vunpack.c.l.b16 %v874
    %v3833 = vunpack.c.h.b16 %v874
    %v3834 = vunpack.c.l.b16 %v875
    %v3835 = vunpack.c.h.b16 %v875
    %v3836 = vunpack.c.l.b16 %v876
    %v3837 = vunpack.c.h.b16 %v876
    %v3838 = vunpack.c.l.b16 %v877
    %v3839 = vunpack.c.h.b16 %v877
    %v3840 = vunpack.c.l.b16 %v878
    %v3841 = vunpack.c.h.b16 %v878
    %v3842 = vunpack.c.l.b16 %v879
    %v3843 = vunpack.c.h.b16 %v879
    %v3844 = vunpack.c.l.b16 %v880
    %v3845 = vunpack.c.h.b16 %v880
    %v3846 = vunpack.c.l.b16 %v881
    %v3847 = vunpack.c.h.b16 %v881
    %v3848 = vunpack.c.l.b16 %v882
    %v3849 = vunpack.c.h.b16 %v882
    %v3850 = vunpack.c.l.b16 %v883
    %v3851 = vunpack.c.h.b16 %v883
    %v3852 = vunpack.c.l.b16 %v884
    %v3853 = vunpack.c.h.b16 %v884
    %v3854 = vunpack.c.l.b16 %v885
    %v3855 = vunpack.c.h.b16 %v885
    %v3856 = vunpack.c.l.b16 %v886
    %v3857 = vunpack.c.h.b16 %v886
    %v3858 = vunpack.c.l.b16 %v887
    %v3859 = vunpack.c.h.b16 %v887
    %v3860 = vunpack.c.l.b16 %v888
    %v3861 = vunpack.c.h.b16 %v888
    %v3862 = vunpack.c.l.b16 %v889
    %v3863 = vunpack.c.h.b16 %v889
    %v3864 = vunpack.c.l.b16 %v890
    %v3865 = vunpack.c.h.b16 %v890
    %v3866 = vunpack.c.l.b16 %v891
    %v3867 = vunpack.c.h.b16 %v891
    %v3868 = vunpack.c.l.b16 %v892
    %v3869 = vunpack.c.h.b16 %v892
    %v3870 = vunpack.c.l.b16 %v893
    %v3871 = vunpack.c.h.b16 %v893
    %v3872 = vunpack.c.l.b16 %v894
    %v3873 = vunpack.c.h.b16 %v894
    %v3874 = vunpack.c.l.b16 %v895
    %v3875 = vunpack.c.h.b16 %v895
    %v3876 = vunpack.c.l.b16 %v896
    %v3877 = vunpack.c.h.b16 %v896
    %v3878 = vunpack.c.l.b16 %v897
    %v3879 = vunpack.c.h.b16 %v897
    %v3880 = vunpack.c.l.b16 %v898
    %v3881 = vunpack.c.h.b16 %v898
    %v3882 = vunpack.c.l.b16 %v899
    %v3883 = vunpack.c.h.b16 %v899
    %v3884 = vunpack.c.l.b16 %v900
    %v3885 = vunpack.c.h.b16 %v900
    %v3886 = vunpack.c.l.b16 %v901
    %v3887 = vunpack.c.h.b16 %v901
    %v3888 = vunpack.c.l.b16 %v902
    %v3889 = vunpack.c.h.b16 %v902
    %v3890 = vunpack.c.l.b16 %v903
    %v3891 = vunpack.c.h.b16 %v903
    %v3892 = vunpack.c.l.b16 %v904
    %v3893 = vunpack.c.h.b16 %v904
    %v3894 = vunpack.c.l.b16 %v905
    %v3895 = vunpack.c.h.b16 %v905
    %v3896 = vunpack.c.l.b16 %v906
    %v3897 = vunpack.c.h.b16 %v906
    %v3898 = vunpack.c.l.b16 %v907
    %v3899 = vunpack.c.h.b16 %v907
    %v3900 = vunpack.c.l.b16 %v908
    %v3901 = vunpack.c.h.b16 %v908
    %v3902 = vunpack.c.l.b16 %v909
    %v3903 = vunpack.c.h.b16 %v909
    %v3904 = vunpack.c.l.b16 %v910
    %v3905 = vunpack.c.h.b16 %v910
    %v3906 = vunpack.c.l.b16 %v911
    %v3907 = vunpack.c.h.b16 %v911
    %v3908 = vunpack.c.l.b16 %v912
    %v3909 = vunpack.c.h.b16 %v912
    %v3910 = vunpack.c.l.b16 %v913
    %v3911 = vunpack.c.h.b16 %v913
    %v3912 = vunpack.c.l.b16 %v914
    %v3913 = vunpack.c.h.b16 %v914
    %v3914 = vunpack.c.l.b16 %v915
    %v3915 = vunpack.c.h.b16 %v915
    %v3916 = vunpack.c.l.b16 %v916
    %v3917 = vunpack.c.h.b16 %v916
    %v3918 = vunpack.c.l.b16 %v917
    %v3919 = vunpack.c.h.b16 %v917
    %v3920 = vunpack.c.l.b16 %v918
    %v3921 = vunpack.c.h.b16 %v918
    %v3922 = vunpack.c.l.b16 %v919
    %v3923 = vunpack.c.h.b16 %v919
    %v3924 = vunpack.c.l.b16 %v920
    %v3925 = vunpack.c.h.b16 %v920
    %v3926 = vunpack.c.l.b16 %v921
    %v3927 = vunpack.c.h.b16 %v921
    %v3928 = vunpack.c.l.b16 %v922
    %v3929 = vunpack.c.h.b16 %v922
    %v3930 = vunpack.c.l.b16 %v923
    %v3931 = vunpack.c.h.b16 %v923
    %v3932 = vunpack.c.l.b16 %v924
    %v3933 = vunpack.c.h.b16 %v924
    %v3934 = vunpack.c.l.b16 %v925
    %v3935 = vunpack.c.h.b16 %v925
    %v3936 = vunpack.c.l.b16 %v926
    %v3937 = vunpack.c.h.b16 %v926
    %v3938 = vunpack.c.l.b16 %v927
    %v3939 = vunpack.c.h.b16 %v927
    %v3940 = vunpack.c.l.b16 %v928
    %v3941 = vunpack.c.h.b16 %v928
    %v3942 = vunpack.c.l.b16 %v929
    %v3943 = vunpack.c.h.b16 %v929
    %v3944 = vunpack.c.l.b16 %v930
    %v3945 = vunpack.c.h.b16 %v930
    %v3946 = vunpack.c.l.b16 %v931
    %v3947 = vunpack.c.h.b16 %v931
    %v3948 = vunpack.c.l.b16 %v932
    %v3949 = vunpack.c.h.b16 %v932
    %v3950 = vunpack.c.l.b16 %v933
    %v3951 = vunpack.c.h.b16 %v933
    %v3952 = vunpack.c.l.b16 %v934
    %v3953 = vunpack.c.h.b16 %v934
    %v3954 = vunpack.c.l.b16 %v935
    %v3955 = vunpack.c.h.b16 %v935
    %v3956 = vunpack.c.l.b16 %v936
    %v3957 = vunpack.c.h.b16 %v936
    %v3958 = vunpack.c.l.b16 %v937
    %v3959 = vunpack.c.h.b16 %v937
    %v3960 = vunpack.c.l.b16 %v938
    %v3961 = vunpack.c.h.b16 %v938
    %v3962 = vunpack.c.l.b16 %v939
    %v3963 = vunpack.c.h.b16 %v939
    %v3964 = vunpack.c.l.b16 %v940
    %v3965 = vunpack.c.h.b16 %v940
    %v3966 = vunpack.c.l.b16 %v941
    %v3967 = vunpack.c.h.b16 %v941
    %v3968 = vunpack.c.l.b16 %v942
    %v3969 = vunpack.c.h.b16 %v942
    %v3970 = vunpack.c.l.b16 %v943
    %v3971 = vunpack.c.h.b16 %v943
    %v3972 = vunpack.c.l.b16 %v944
    %v3973 = vunpack.c.h.b16 %v944
    %v3974 = vunpack.c.l.b16 %v945
    %v3975 = vunpack.c.h.b16 %v945
    %v3976 = vunpack.c.l.b16 %v946
    %v3977 = vunpack.c.h.b16 %v946
    %v3978 = vunpack.c.l.b16 %v947
    %v3979 = vunpack.c.h.b16 %v947
    %v3980 = vunpack.c.l.b16 %v948
    %v3981 = vunpack.c.h.b16 %v948
    %v3982 = vunpack.c.l.b16 %v949
    %v3983 = vunpack.c.h.b16 %v949
    %v3984 = vunpack.c.l.b16 %v950
    %v3985 = vunpack.c.h.b16 %v950
    %v3986 = vunpack.c.l.b16 %v951
    %v3987 = vunpack.c.h.b16 %v951
    %v3988 = vunpack.c.l.b16 %v952
    %v3989 = vunpack.c.h.b16 %v952
    %v3990 = vunpack.c.l.b16 %v953
    %v3991 = vunpack.c.h.b16 %v953
    %v3992 = vunpack.c.l.b16 %v954
    %v3993 = vunpack.c.h.b16 %v954
    %v3994 = vunpack.c.l.b16 %v955
    %v3995 = vunpack.c.h.b16 %v955
    %v3996 = vunpack.c.l.b16 %v956
    %v3997 = vunpack.c.h.b16 %v956
    %v3998 = vunpack.c.l.b16 %v957
    %v3999 = vunpack.c.h.b16 %v957
    %v4000 = vunpack.c.l.b16 %v958
    %v4001 = vunpack.c.h.b16 %v958
    %v4002 = vunpack.c.l.b16 %v959
    %v4003 = vunpack.c.h.b16 %v959
    %v4004 = vunpack.c.l.b16 %v960
    %v4005 = vunpack.c.h.b16 %v960
    %v4006 = vunpack.c.l.b16 %v961
    %v4007 = vunpack.c.h.b16 %v961
    %v4008 = vunpack.c.l.b16 %v962
    %v4009 = vunpack.c.h.b16 %v962
    %v4010 = vunpack.c.l.b16 %v963
    %v4011 = vunpack.c.h.b16 %v963
    %v4012 = vunpack.c.l.b16 %v964
    %v4013 = vunpack.c.h.b16 %v964
    %v4014 = vunpack.c.l.b16 %v965
    %v4015 = vunpack.c.h.b16 %v965
    %v4016 = vunpack.c.l.b16 %v966
    %v4017 = vunpack.c.h.b16 %v966
    %v4018 = vunpack.c.l.b16 %v967
    %v4019 = vunpack.c.h.b16 %v967
    %v4020 = vunpack.c.l.b16 %v968
    %v4021 = vunpack.c.h.b16 %v968
    %v4022 = vunpack.c.l.b16 %v969
    %v4023 = vunpack.c.h.b16 %v969
    %v4024 = vunpack.c.l.b16 %v970
    %v4025 = vunpack.c.h.b16 %v970
    %v4026 = vunpack.c.l.b16 %v971
    %v4027 = vunpack.c.h.b16 %v971
    %v4028 = vunpack.c.l.b16 %v972
    %v4029 = vunpack.c.h.b16 %v972
    %v4030 = vunpack.c.l.b16 %v973
    %v4031 = vunpack.c.h.b16 %v973
    %v4032 = vunpack.c.l.b16 %v974
    %v4033 = vunpack.c.h.b16 %v974
    %v4034 = vunpack.c.l.b16 %v975
    %v4035 = vunpack.c.h.b16 %v975
    %v4036 = vpack.c.b16 %v3466, %v3460
    %v4037 = vpack.c.b16 %v3467, %v3461
    %v4038 = vpack.c.b16 %v3468, %v3462
    %v4039 = vpack.c.b16 %v3469, %v3463
    %v4040 = vpack.c.b16 %v3470, %v3464
    %v4041 = vpack.c.b16 %v3471, %v3465
    %v4042 = vpack.c.b16 %v3478, %v3472
    %v4043 = vpack.c.b16 %v3479, %v3473
    %v4044 = vpack.c.b16 %v3480, %v3474
    %v4045 = vpack.c.b16 %v3481, %v3475
    %v4046 = vpack.c.b16 %v3482, %v3476
    %v4047 = vpack.c.b16 %v3483, %v3477
    %v4048 = vpack.c.b16 %v3490, %v3484
    %v4049 = vpack.c.b16 %v3491, %v3485
    %v4050 = vpack.c.b16 %v3492, %v3486
    %v4051 = vpack.c.b16 %v3493, %v3487
    %v4052 = vpack.c.b16 %v3494, %v3488
    %v4053 = vpack.c.b16 %v3495, %v3489
    %v4054 = vpack.c.b16 %v3502, %v3496
    %v4055 = vpack.c.b16 %v3503, %v3497
    %v4056 = vpack.c.b16 %v3504, %v3498
    %v4057 = vpack.c.b16 %v3505, %v3499
    %v4058 = vpack.c.b16 %v3506, %v3500
    %v4059 = vpack.c.b16 %v3507, %v3501
    %v4060 = vpack.c.b16 %v3514, %v3508
    %v4061 = vpack.c.b16 %v3515, %v3509
    %v4062 = vpack.c.b16 %v3516, %v3510
    %v4063 = vpack.c.b16 %v3517, %v3511
    %v4064 = vpack.c.b16 %v3518, %v3512
    %v4065 = vpack.c.b16 %v3519, %v3513
    %v4066 = vpack.c.b16 %v3526, %v3520
    %v4067 = vpack.c.b16 %v3527, %v3521
    %v4068 = vpack.c.b16 %v3528, %v3522
    %v4069 = vpack.c.b16 %v3529, %v3523
    %v4070 = vpack.c.b16 %v3530, %v3524
    %v4071 = vpack.c.b16 %v3531, %v3525
    %v4072 = vpack.c.b16 %v3538, %v3532
    %v4073 = vpack.c.b16 %v3539, %v3533
    %v4074 = vpack.c.b16 %v3540, %v3534
    %v4075 = vpack.c.b16 %v3541, %v3535
    %v4076 = vpack.c.b16 %v3542, %v3536
    %v4077 = vpack.c.b16 %v3543, %v3537
    %v4078 = vpack.c.b16 %v3550, %v3544
    %v4079 = vpack.c.b16 %v3551, %v3545
    %v4080 = vpack.c.b16 %v3552, %v3546
    %v4081 = vpack.c.b16 %v3553, %v3547
    %v4082 = vpack.c.b16 %v3554, %v3548
    %v4083 = vpack.c.b16 %v3555, %v3549
    %v4084 = vpack.c.b16 %v3562, %v3556
    %v4085 = vpack.c.b16 %v3563, %v3557
    %v4086 = vpack.c.b16 %v3564, %v3558
    %v4087 = vpack.c.b16 %v3565, %v3559
    %v4088 = vpack.c.b16 %v3566, %v3560
    %v4089 = vpack.c.b16 %v3567, %v3561
    %v4090 = vpack.c.b16 %v3574, %v3568
    %v4091 = vpack.c.b16 %v3575, %v3569
    %v4092 = vpack.c.b16 %v3576, %v3570
    %v4093 = vpack.c.b16 %v3577, %v3571
    %v4094 = vpack.c.b16 %v3578, %v3572
    %v4095 = vpack.c.b16 %v3579, %v3573
    %v4096 = vpack.c.b16 %v3586, %v3580
    %v4097 = vpack.c.b16 %v3587, %v3581
    %v4098 = vpack.c.b16 %v3588, %v3582
    %v4099 = vpack.c.b16 %v3589, %v3583
    %v4100 = vpack.c.b16 %v3590, %v3584
    %v4101 = vpack.c.b16 %v3591, %v3585
    %v4102 = vpack.c.b16 %v3598, %v3592
    %v4103 = vpack.c.b16 %v3599, %v3593
    %v4104 = vpack.c.b16 %v3600, %v3594
    %v4105 = vpack.c.b16 %v3601, %v3595
    %v4106 = vpack.c.b16 %v3602, %v3596
    %v4107 = vpack.c.b16 %v3603, %v3597
    %v4108 = vpack.c.b16 %v3610, %v3604
    %v4109 = vpack.c.b16 %v3611, %v3605
    %v4110 = vpack.c.b16 %v3612, %v3606
    %v4111 = vpack.c.b16 %v3613, %v3607
    %v4112 = vpack.c.b16 %v3614, %v3608
    %v4113 = vpack.c.b16 %v3615, %v3609
    %v4114 = vpack.c.b16 %v3622, %v3616
    %v4115 = vpack.c.b16 %v3623, %v3617
    %v4116 = vpack.c.b16 %v3624, %v3618
    %v4117 = vpack.c.b16 %v3625, %v3619
    %v4118 = vpack.c.b16 %v3626, %v3620
    %v4119 = vpack.c.b16 %v3627, %v3621
    %v4120 = vpack.c.b16 %v3634, %v3628
    %v4121 = vpack.c.b16 %v3635, %v3629
    %v4122 = vpack.c.b16 %v3636, %v3630
    %v4123 = vpack.c.b16 %v3637, %v3631
    %v4124 = vpack.c.b16 %v3638, %v3632
    %v4125 = vpack.c.b16 %v3639, %v3633
    %v4126 = vpack.c.b16 %v3646, %v3640
    %v4127 = vpack.c.b16 %v3647, %v3641
    %v4128 = vpack.c.b16 %v3648, %v3642
    %v4129 = vpack.c.b16 %v3649, %v3643
    %v4130 = vpack.c.b16 %v3650, %v3644
    %v4131 = vpack.c.b16 %v3651, %v3645
    %v4132 = vpack.c.b16 %v3658, %v3652
    %v4133 = vpack.c.b16 %v3659, %v3653
    %v4134 = vpack.c.b16 %v3660, %v3654
    %v4135 = vpack.c.b16 %v3661, %v3655
    %v4136 = vpack.c.b16 %v3662, %v3656
    %v4137 = vpack.c.b16 %v3663, %v3657
    %v4138 = vpack.c.b16 %v3670, %v3664
    %v4139 = vpack.c.b16 %v3671, %v3665
    %v4140 = vpack.c.b16 %v3672, %v3666
    %v4141 = vpack.c.b16 %v3673, %v3667
    %v4142 = vpack.c.b16 %v3674, %v3668
    %v4143 = vpack.c.b16 %v3675, %v3669
    %v4144 = vpack.c.b16 %v3682, %v3676
    %v4145 = vpack.c.b16 %v3683, %v3677
    %v4146 = vpack.c.b16 %v3684, %v3678
    %v4147 = vpack.c.b16 %v3685, %v3679
    %v4148 = vpack.c.b16 %v3686, %v3680
    %v4149 = vpack.c.b16 %v3687, %v3681
    %v4150 = vpack.c.b16 %v3694, %v3688
    %v4151 = vpack.c.b16 %v3695, %v3689
    %v4152 = vpack.c.b16 %v3696, %v3690
    %v4153 = vpack.c.b16 %v3697, %v3691
    %v4154 = vpack.c.b16 %v3698, %v3692
    %v4155 = vpack.c.b16 %v3699, %v3693
    %v4156 = vpack.c.b16 %v3706, %v3700
    %v4157 = vpack.c.b16 %v3707, %v3701
    %v4158 = vpack.c.b16 %v3708, %v3702
    %v4159 = vpack.c.b16 %v3709, %v3703
    %v4160 = vpack.c.b16 %v3710, %v3704
    %v4161 = vpack.c.b16 %v3711, %v3705
    %v4162 = vpack.c.b16 %v3718, %v3712
    %v4163 = vpack.c.b16 %v3719, %v3713
    %v4164 = vpack.c.b16 %v3720, %v3714
    %v4165 = vpack.c.b16 %v3721, %v3715
    %v4166 = vpack.c.b16 %v3722, %v3716
    %v4167 = vpack.c.b16 %v3723, %v3717
    %v4168 = vpack.c.b16 %v3730, %v3724
    %v4169 = vpack.c.b16 %v3731, %v3725
    %v4170 = vpack.c.b16 %v3732, %v3726
    %v4171 = vpack.c.b16 %v3733, %v3727
    %v4172 = vpack.c.b16 %v3734, %v3728
    %v4173 = vpack.c.b16 %v3735, %v3729
    %v4174 = vpack.c.b16 %v3742, %v3736
    %v4175 = vpack.c.b16 %v3743, %v3737
    %v4176 = vpack.c.b16 %v3744, %v3738
    %v4177 = vpack.c.b16 %v3745, %v3739
    %v4178 = vpack.c.b16 %v3746, %v3740
    %v4179 = vpack.c.b16 %v3747, %v3741
    %v4180 = vpack.c.b16 %v3754, %v3748
    %v4181 = vpack.c.b16 %v3755, %v3749
    %v4182 = vpack.c.b16 %v3756, %v3750
    %v4183 = vpack.c.b16 %v3757, %v3751
    %v4184 = vpack.c.b16 %v3758, %v3752
    %v4185 = vpack.c.b16 %v3759, %v3753
    %v4186 = vpack.c.b16 %v3766, %v3760
    %v4187 = vpack.c.b16 %v3767, %v3761
    %v4188 = vpack.c.b16 %v3768, %v3762
    %v4189 = vpack.c.b16 %v3769, %v3763
    %v4190 = vpack.c.b16 %v3770, %v3764
    %v4191 = vpack.c.b16 %v3771, %v3765
    %v4192 = vpack.c.b16 %v3778, %v3772
    %v4193 = vpack.c.b16 %v3779, %v3773
    %v4194 = vpack.c.b16 %v3780, %v3774
    %v4195 = vpack.c.b16 %v3781, %v3775
    %v4196 = vpack.c.b16 %v3782, %v3776
    %v4197 = vpack.c.b16 %v3783, %v3777
    %v4198 = vpack.c.b16 %v3790, %v3784
    %v4199 = vpack.c.b16 %v3791, %v3785
    %v4200 = vpack.c.b16 %v3792, %v3786
    %v4201 = vpack.c.b16 %v3793, %v3787
    %v4202 = vpack.c.b16 %v3794, %v3788
    %v4203 = vpack.c.b16 %v3795, %v3789
    %v4204 = vpack.c.b16 %v3802, %v3796
    %v4205 = vpack.c.b16 %v3803, %v3797
    %v4206 = vpack.c.b16 %v3804, %v3798
    %v4207 = vpack.c.b16 %v3805, %v3799
    %v4208 = vpack.c.b16 %v3806, %v3800
    %v4209 = vpack.c.b16 %v3807, %v3801
    %v4210 = vpack.c.b16 %v3814, %v3808
    %v4211 = vpack.c.b16 %v3815, %v3809
    %v4212 = vpack.c.b16 %v3816, %v3810
    %v4213 = vpack.c.b16 %v3817, %v3811
    %v4214 = vpack.c.b16 %v3818, %v3812
    %v4215 = vpack.c.b16 %v3819, %v3813
    %v4216 = vpack.c.b16 %v3826, %v3820
    %v4217 = vpack.c.b16 %v3827, %v3821
    %v4218 = vpack.c.b16 %v3828, %v3822
    %v4219 = vpack.c.b16 %v3829, %v3823
    %v4220 = vpack.c.b16 %v3830, %v3824
    %v4221 = vpack.c.b16 %v3831, %v3825
    %v4222 = vpack.c.b16 %v3838, %v3832
    %v4223 = vpack.c.b16 %v3839, %v3833
    %v4224 = vpack.c.b16 %v3840, %v3834
    %v4225 = vpack.c.b16 %v3841, %v3835
    %v4226 = vpack.c.b16 %v3842, %v3836
    %v4227 = vpack.c.b16 %v3843, %v3837
    %v4228 = vpack.c.b16 %v3850, %v3844
    %v4229 = vpack.c.b16 %v3851, %v3845
    %v4230 = vpack.c.b16 %v3852, %v3846
    %v4231 = vpack.c.b16 %v3853, %v3847
    %v4232 = vpack.c.b16 %v3854, %v3848
    %v4233 = vpack.c.b16 %v3855, %v3849
    %v4234 = vpack.c.b16 %v3862, %v3856
    %v4235 = vpack.c.b16 %v3863, %v3857
    %v4236 = vpack.c.b16 %v3864, %v3858
    %v4237 = vpack.c.b16 %v3865, %v3859
    %v4238 = vpack.c.b16 %v3866, %v3860
    %v4239 = vpack.c.b16 %v3867, %v3861
    %v4240 = vpack.c.b16 %v3874, %v3868
    %v4241 = vpack.c.b16 %v3875, %v3869
    %v4242 = vpack.c.b16 %v3876, %v3870
    %v4243 = vpack.c.b16 %v3877, %v3871
    %v4244 = vpack.c.b16 %v3878, %v3872
    %v4245 = vpack.c.b16 %v3879, %v3873
    %v4246 = vpack.c.b16 %v3886, %v3880
    %v4247 = vpack.c.b16 %v3887, %v3881
    %v4248 = vpack.c.b16 %v3888, %v3882
    %v4249 = vpack.c.b16 %v3889, %v3883
    %v4250 = vpack.c.b16 %v3890, %v3884
    %v4251 = vpack.c.b16 %v3891, %v3885
    %v4252 = vpack.c.b16 %v3898, %v3892
    %v4253 = vpack.c.b16 %v3899, %v3893
    %v4254 = vpack.c.b16 %v3900, %v3894
    %v4255 = vpack.c.b16 %v3901, %v3895
    %v4256 = vpack.c.b16 %v3902, %v3896
    %v4257 = vpack.c.b16 %v3903, %v3897
    %v4258 = vpack.c.b16 %v3910, %v3904
    %v4259 = vpack.c.b16 %v3911, %v3905
    %v4260 = vpack.c.b16 %v3912, %v3906
    %v4261 = vpack.c.b16 %v3913, %v3907
    %v4262 = vpack.c.b16 %v3914, %v3908
    %v4263 = vpack.c.b16 %v3915, %v3909
    %v4264 = vpack.c.b16 %v3922, %v3916
    %v4265 = vpack.c.b16 %v3923, %v3917
    %v4266 = vpack.c.b16 %v3924, %v3918
    %v4267 = vpack.c.b16 %v3925, %v3919
    %v4268 = vpack.c.b16 %v3926, %v3920
    %v4269 = vpack.c.b16 %v3927, %v3921
    %v4270 = vpack.c.b16 %v3934, %v3928
    %v4271 = vpack.c.b16 %v3935, %v3929
    %v4272 = vpack.c.b16 %v3936, %v3930
    %v4273 = vpack.c.b16 %v3937, %v3931
    %v4274 = vpack.c.b16 %v3938, %v3932
    %v4275 = vpack.c.b16 %v3939, %v3933
    %v4276 = vpack.c.b16 %v3946, %v3940
    %v4277 = vpack.c.b16 %v3947, %v3941
    %v4278 = vpack.c.b16 %v3948, %v3942
    %v4279 = vpack.c.b16 %v3949, %v3943
    %v4280 = vpack.c.b16 %v3950, %v3944
    %v4281 = vpack.c.b16 %v3951, %v3945
    %v4282 = vpack.c.b16 %v3958, %v3952
    %v4283 = vpack.c.b16 %v3959, %v3953
    %v4284 = vpack.c.b16 %v3960, %v3954
    %v4285 = vpack.c.b16 %v3961, %v3955
    %v4286 = vpack.c.b16 %v3962, %v3956
    %v4287 = vpack.c.b16 %v3963, %v3957
    %v4288 = vpack.c.b16 %v3970, %v3964
    %v4289 = vpack.c.b16 %v3971, %v3965
    %v4290 = vpack.c.b16 %v3972, %v3966
    %v4291 = vpack.c.b16 %v3973, %v3967
    %v4292 = vpack.c.b16 %v3974, %v3968
    %v4293 = vpack.c.b16 %v3975, %v3969
    %v4294 = vpack.c.b16 %v3982, %v3976
    %v4295 = vpack.c.b16 %v3983, %v3977
    %v4296 = vpack.c.b16 %v3984, %v3978
    %v4297 = vpack.c.b16 %v3985, %v3979
    %v4298 = vpack.c.b16 %v3986, %v3980
    %v4299 = vpack.c.b16 %v3987, %v3981
    %v4300 = vpack.c.b16 %v3994, %v3988
    %v4301 = vpack.c.b16 %v3995, %v3989
    %v4302 = vpack.c.b16 %v3996, %v3990
    %v4303 = vpack.c.b16 %v3997, %v3991
    %v4304 = vpack.c.b16 %v3998, %v3992
    %v4305 = vpack.c.b16 %v3999, %v3993
    %v4306 = vpack.c.b16 %v4006, %v4000
    %v4307 = vpack.c.b16 %v4007, %v4001
    %v4308 = vpack.c.b16 %v4008, %v4002
    %v4309 = vpack.c.b16 %v4009, %v4003
    %v4310 = vpack.c.b16 %v4010, %v4004
    %v4311 = vpack.c.b16 %v4011, %v4005
    %v4312 = vpack.c.b16 %v4018, %v4012
    %v4313 = vpack.c.b16 %v4019, %v4013
    %v4314 = vpack.c.b16 %v4020, %v4014
    %v4315 = vpack.c.b16 %v4021, %v4015
    %v4316 = vpack.c.b16 %v4022, %v4016
    %v4317 = vpack.c.b16 %v4023, %v4017
    %v4318 = vpack.c.b16 %v4030, %v4024
    %v4319 = vpack.c.b16 %v4031, %v4025
    %v4320 = vpack.c.b16 %v4032, %v4026
    %v4321 = vpack.c.b16 %v4033, %v4027
    %v4322 = vpack.c.b16 %v4034, %v4028
    %v4323 = vpack.c.b16 %v4035, %v4029
    %4612 = vmatpush.bf16.msra.mxu0 %v4078
    %4613 = vmatpush.bf16.msra.mxu0 %v4072
    %4614 = vmatpush.bf16.msra.mxu0 %v4066
    %4615 = vmatpush.bf16.msra.mxu0 %v4060
    %4616 = vmatpush.bf16.msra.mxu0 %v4054
    %4617 = vmatpush.bf16.msra.mxu0 %v4048
    %4618 = vmatpush.bf16.msra.mxu0 %v4042
    %4619 = vmatpush.bf16.msra.mxu0 %v4036
    %4620 = vmatmul.bf16.gmra.mxu0 %v664
    %v4621 = vpop.f32.mrf.mxu0
    %v4622 = vadd.f32 %v2779, %v4621
    %v4623 = vpop.f32.mrf.mxu0
    %4624 = vdwg.mxu0
    %4625 = vmatpush.bf16.msra.mxu0 %v4126
    %4626 = vmatpush.bf16.msra.mxu0 %v4120
    %4627 = vmatpush.bf16.msra.mxu0 %v4114
    %4628 = vmatpush.bf16.msra.mxu0 %v4108
    %4629 = vmatpush.bf16.msra.mxu0 %v4102
    %4630 = vmatpush.bf16.msra.mxu0 %v4096
    %4631 = vmatpush.bf16.msra.mxu0 %v4090
    %4632 = vmatpush.bf16.msra.mxu0 %v4084
    %4633 = vmatmul.bf16.gmra.mxu0 %v665
    %v4634 = vpop.f32.mrf.mxu0
    %v4635 = vadd.f32 %v4622, %v4634
    %v4636 = vpop.f32.mrf.mxu0
    %4637 = vdwg.mxu0
    %4638 = vmatpush.bf16.msra.mxu0 %v4174
    %4639 = vmatpush.bf16.msra.mxu0 %v4168
    %4640 = vmatpush.bf16.msra.mxu0 %v4162
    %4641 = vmatpush.bf16.msra.mxu0 %v4156
    %4642 = vmatpush.bf16.msra.mxu0 %v4150
    %4643 = vmatpush.bf16.msra.mxu0 %v4144
    %4644 = vmatpush.bf16.msra.mxu0 %v4138
    %4645 = vmatpush.bf16.msra.mxu0 %v4132
    %4646 = vmatmul.bf16.gmra.mxu0 %v666
    %v4647 = vpop.f32.mrf.mxu0
    %v4648 = vadd.f32 %v4635, %v4647
    %v4649 = vpop.f32.mrf.mxu0
    %4650 = vdwg.mxu0
    %4651 = vmatpush.bf16.msra.mxu0 %v4222
    %4652 = vmatpush.bf16.msra.mxu0 %v4216
    %4653 = vmatpush.bf16.msra.mxu0 %v4210
    %4654 = vmatpush.bf16.msra.mxu0 %v4204
    %4655 = vmatpush.bf16.msra.mxu0 %v4198
    %4656 = vmatpush.bf16.msra.mxu0 %v4192
    %4657 = vmatpush.bf16.msra.mxu0 %v4186
    %4658 = vmatpush.bf16.msra.mxu0 %v4180
    %4659 = vmatmul.bf16.gmra.mxu0 %v667
    %v4660 = vpop.f32.mrf.mxu0
    %v4661 = vadd.f32 %v4648, %v4660
    %v4662 = vpop.f32.mrf.mxu0
    %4663 = vdwg.mxu0
    %4664 = vmatpush.bf16.msra.mxu0 %v4270
    %4665 = vmatpush.bf16.msra.mxu0 %v4264
    %4666 = vmatpush.bf16.msra.mxu0 %v4258
    %4667 = vmatpush.bf16.msra.mxu0 %v4252
    %4668 = vmatpush.bf16.msra.mxu0 %v4246
    %4669 = vmatpush.bf16.msra.mxu0 %v4240
    %4670 = vmatpush.bf16.msra.mxu0 %v4234
    %4671 = vmatpush.bf16.msra.mxu0 %v4228
    %4672 = vmatmul.bf16.gmra.mxu0 %v668
    %v4673 = vpop.f32.mrf.mxu0
    %v4674 = vadd.f32 %v4661, %v4673
    %v4675 = vpop.f32.mrf.mxu0
    %4676 = vdwg.mxu0
    %4677 = vmatpush.bf16.msra.mxu0 %v4318
    %4678 = vmatpush.bf16.msra.mxu0 %v4312
    %4679 = vmatpush.bf16.msra.mxu0 %v4306
    %4680 = vmatpush.bf16.msra.mxu0 %v4300
    %4681 = vmatpush.bf16.msra.mxu0 %v4294
    %4682 = vmatpush.bf16.msra.mxu0 %v4288
    %4683 = vmatpush.bf16.msra.mxu0 %v4282
    %4684 = vmatpush.bf16.msra.mxu0 %v4276
    %4685 = vmatmul.bf16.gmra.mxu0 %v669
    %v4686 = vpop.f32.mrf.mxu0
    %v4687 = vadd.f32 %v4674, %v4686
    %v4688 = vpop.f32.mrf.mxu0
    %4689 = vdwg.mxu0
    %4690 = vmatpush.bf16.msra.mxu0 %v4079
    %4691 = vmatpush.bf16.msra.mxu0 %v4073
    %4692 = vmatpush.bf16.msra.mxu0 %v4067
    %4693 = vmatpush.bf16.msra.mxu0 %v4061
    %4694 = vmatpush.bf16.msra.mxu0 %v4055
    %4695 = vmatpush.bf16.msra.mxu0 %v4049
    %4696 = vmatpush.bf16.msra.mxu0 %v4043
    %4697 = vmatpush.bf16.msra.mxu0 %v4037
    %4698 = vmatmul.bf16.gmra.mxu0 %v664
    %v4699 = vpop.f32.mrf.mxu0
    %v4700 = vadd.f32 %v2857, %v4699
    %v4701 = vpop.f32.mrf.mxu0
    %4702 = vdwg.mxu0
    %4703 = vmatpush.bf16.msra.mxu0 %v4127
    %4704 = vmatpush.bf16.msra.mxu0 %v4121
    %4705 = vmatpush.bf16.msra.mxu0 %v4115
    %4706 = vmatpush.bf16.msra.mxu0 %v4109
    %4707 = vmatpush.bf16.msra.mxu0 %v4103
    %4708 = vmatpush.bf16.msra.mxu0 %v4097
    %4709 = vmatpush.bf16.msra.mxu0 %v4091
    %4710 = vmatpush.bf16.msra.mxu0 %v4085
    %4711 = vmatmul.bf16.gmra.mxu0 %v665
    %v4712 = vpop.f32.mrf.mxu0
    %v4713 = vadd.f32 %v4700, %v4712
    %v4714 = vpop.f32.mrf.mxu0
    %4715 = vdwg.mxu0
    %4716 = vmatpush.bf16.msra.mxu0 %v4175
    %4717 = vmatpush.bf16.msra.mxu0 %v4169
    %4718 = vmatpush.bf16.msra.mxu0 %v4163
    %4719 = vmatpush.bf16.msra.mxu0 %v4157
    %4720 = vmatpush.bf16.msra.mxu0 %v4151
    %4721 = vmatpush.bf16.msra.mxu0 %v4145
    %4722 = vmatpush.bf16.msra.mxu0 %v4139
    %4723 = vmatpush.bf16.msra.mxu0 %v4133
    %4724 = vmatmul.bf16.gmra.mxu0 %v666
    %v4725 = vpop.f32.mrf.mxu0
    %v4726 = vadd.f32 %v4713, %v4725
    %v4727 = vpop.f32.mrf.mxu0
    %4728 = vdwg.mxu0
    %4729 = vmatpush.bf16.msra.mxu0 %v4223
    %4730 = vmatpush.bf16.msra.mxu0 %v4217
    %4731 = vmatpush.bf16.msra.mxu0 %v4211
    %4732 = vmatpush.bf16.msra.mxu0 %v4205
    %4733 = vmatpush.bf16.msra.mxu0 %v4199
    %4734 = vmatpush.bf16.msra.mxu0 %v4193
    %4735 = vmatpush.bf16.msra.mxu0 %v4187
    %4736 = vmatpush.bf16.msra.mxu0 %v4181
    %4737 = vmatmul.bf16.gmra.mxu0 %v667
    %v4738 = vpop.f32.mrf.mxu0
    %v4739 = vadd.f32 %v4726, %v4738
    %v4740 = vpop.f32.mrf.mxu0
    %4741 = vdwg.mxu0
    %4742 = vmatpush.bf16.msra.mxu0 %v4271
    %4743 = vmatpush.bf16.msra.mxu0 %v4265
    %4744 = vmatpush.bf16.msra.mxu0 %v4259
    %4745 = vmatpush.bf16.msra.mxu0 %v4253
    %4746 = vmatpush.bf16.msra.mxu0 %v4247
    %4747 = vmatpush.bf16.msra.mxu0 %v4241
    %4748 = vmatpush.bf16.msra.mxu0 %v4235
    %4749 = vmatpush.bf16.msra.mxu0 %v4229
    %4750 = vmatmul.bf16.gmra.mxu0 %v668
    %v4751 = vpop.f32.mrf.mxu0
    %v4752 = vadd.f32 %v4739, %v4751
    %v4753 = vpop.f32.mrf.mxu0
    %4754 = vdwg.mxu0
    %4755 = vmatpush.bf16.msra.mxu0 %v4319
    %4756 = vmatpush.bf16.msra.mxu0 %v4313
    %4757 = vmatpush.bf16.msra.mxu0 %v4307
    %4758 = vmatpush.bf16.msra.mxu0 %v4301
    %4759 = vmatpush.bf16.msra.mxu0 %v4295
    %4760 = vmatpush.bf16.msra.mxu0 %v4289
    %4761 = vmatpush.bf16.msra.mxu0 %v4283
    %4762 = vmatpush.bf16.msra.mxu0 %v4277
    %4763 = vmatmul.bf16.gmra.mxu0 %v669
    %v4764 = vpop.f32.mrf.mxu0
    %v4765 = vadd.f32 %v4752, %v4764
    %v4766 = vpop.f32.mrf.mxu0
    %4767 = vdwg.mxu0
    %4768 = vmatpush.bf16.msra.mxu0 %v4080
    %4769 = vmatpush.bf16.msra.mxu0 %v4074
    %4770 = vmatpush.bf16.msra.mxu0 %v4068
    %4771 = vmatpush.bf16.msra.mxu0 %v4062
    %4772 = vmatpush.bf16.msra.mxu0 %v4056
    %4773 = vmatpush.bf16.msra.mxu0 %v4050
    %4774 = vmatpush.bf16.msra.mxu0 %v4044
    %4775 = vmatpush.bf16.msra.mxu0 %v4038
    %4776 = vmatmul.bf16.gmra.mxu0 %v664
    %v4777 = vpop.f32.mrf.mxu0
    %v4778 = vadd.f32 %v2935, %v4777
    %v4779 = vpop.f32.mrf.mxu0
    %4780 = vdwg.mxu0
    %4781 = vmatpush.bf16.msra.mxu0 %v4128
    %4782 = vmatpush.bf16.msra.mxu0 %v4122
    %4783 = vmatpush.bf16.msra.mxu0 %v4116
    %4784 = vmatpush.bf16.msra.mxu0 %v4110
    %4785 = vmatpush.bf16.msra.mxu0 %v4104
    %4786 = vmatpush.bf16.msra.mxu0 %v4098
    %4787 = vmatpush.bf16.msra.mxu0 %v4092
    %4788 = vmatpush.bf16.msra.mxu0 %v4086
    %4789 = vmatmul.bf16.gmra.mxu0 %v665
    %v4790 = vpop.f32.mrf.mxu0
    %v4791 = vadd.f32 %v4778, %v4790
    %v4792 = vpop.f32.mrf.mxu0
    %4793 = vdwg.mxu0
    %4794 = vmatpush.bf16.msra.mxu0 %v4176
    %4795 = vmatpush.bf16.msra.mxu0 %v4170
    %4796 = vmatpush.bf16.msra.mxu0 %v4164
    %4797 = vmatpush.bf16.msra.mxu0 %v4158
    %4798 = vmatpush.bf16.msra.mxu0 %v4152
    %4799 = vmatpush.bf16.msra.mxu0 %v4146
    %4800 = vmatpush.bf16.msra.mxu0 %v4140
    %4801 = vmatpush.bf16.msra.mxu0 %v4134
    %4802 = vmatmul.bf16.gmra.mxu0 %v666
    %v4803 = vpop.f32.mrf.mxu0
    %v4804 = vadd.f32 %v4791, %v4803
    %v4805 = vpop.f32.mrf.mxu0
    %4806 = vdwg.mxu0
    %4807 = vmatpush.bf16.msra.mxu0 %v4224
    %4808 = vmatpush.bf16.msra.mxu0 %v4218
    %4809 = vmatpush.bf16.msra.mxu0 %v4212
    %4810 = vmatpush.bf16.msra.mxu0 %v4206
    %4811 = vmatpush.bf16.msra.mxu0 %v4200
    %4812 = vmatpush.bf16.msra.mxu0 %v4194
    %4813 = vmatpush.bf16.msra.mxu0 %v4188
    %4814 = vmatpush.bf16.msra.mxu0 %v4182
    %4815 = vmatmul.bf16.gmra.mxu0 %v667
    %v4816 = vpop.f32.mrf.mxu0
    %v4817 = vadd.f32 %v4804, %v4816
    %v4818 = vpop.f32.mrf.mxu0
    %4819 = vdwg.mxu0
    %4820 = vmatpush.bf16.msra.mxu0 %v4272
    %4821 = vmatpush.bf16.msra.mxu0 %v4266
    %4822 = vmatpush.bf16.msra.mxu0 %v4260
    %4823 = vmatpush.bf16.msra.mxu0 %v4254
    %4824 = vmatpush.bf16.msra.mxu0 %v4248
    %4825 = vmatpush.bf16.msra.mxu0 %v4242
    %4826 = vmatpush.bf16.msra.mxu0 %v4236
    %4827 = vmatpush.bf16.msra.mxu0 %v4230
    %4828 = vmatmul.bf16.gmra.mxu0 %v668
    %v4829 = vpop.f32.mrf.mxu0
    %v4830 = vadd.f32 %v4817, %v4829
    %v4831 = vpop.f32.mrf.mxu0
    %4832 = vdwg.mxu0
    %4833 = vmatpush.bf16.msra.mxu0 %v4320
    %4834 = vmatpush.bf16.msra.mxu0 %v4314
    %4835 = vmatpush.bf16.msra.mxu0 %v4308
    %4836 = vmatpush.bf16.msra.mxu0 %v4302
    %4837 = vmatpush.bf16.msra.mxu0 %v4296
    %4838 = vmatpush.bf16.msra.mxu0 %v4290
    %4839 = vmatpush.bf16.msra.mxu0 %v4284
    %4840 = vmatpush.bf16.msra.mxu0 %v4278
    %4841 = vmatmul.bf16.gmra.mxu0 %v669
    %v4842 = vpop.f32.mrf.mxu0
    %v4843 = vadd.f32 %v4830, %v4842
    %v4844 = vpop.f32.mrf.mxu0
    %4845 = vdwg.mxu0
    %4846 = vmatpush.bf16.msra.mxu0 %v4081
    %4847 = vmatpush.bf16.msra.mxu0 %v4075
    %4848 = vmatpush.bf16.msra.mxu0 %v4069
    %4849 = vmatpush.bf16.msra.mxu0 %v4063
    %4850 = vmatpush.bf16.msra.mxu0 %v4057
    %4851 = vmatpush.bf16.msra.mxu0 %v4051
    %4852 = vmatpush.bf16.msra.mxu0 %v4045
    %4853 = vmatpush.bf16.msra.mxu0 %v4039
    %4854 = vmatmul.bf16.gmra.mxu0 %v664
    %v4855 = vpop.f32.mrf.mxu0
    %v4856 = vadd.f32 %v3013, %v4855
    %v4857 = vpop.f32.mrf.mxu0
    %4858 = vdwg.mxu0
    %4859 = vmatpush.bf16.msra.mxu0 %v4129
    %4860 = vmatpush.bf16.msra.mxu0 %v4123
    %4861 = vmatpush.bf16.msra.mxu0 %v4117
    %4862 = vmatpush.bf16.msra.mxu0 %v4111
    %4863 = vmatpush.bf16.msra.mxu0 %v4105
    %4864 = vmatpush.bf16.msra.mxu0 %v4099
    %4865 = vmatpush.bf16.msra.mxu0 %v4093
    %4866 = vmatpush.bf16.msra.mxu0 %v4087
    %4867 = vmatmul.bf16.gmra.mxu0 %v665
    %v4868 = vpop.f32.mrf.mxu0
    %v4869 = vadd.f32 %v4856, %v4868
    %v4870 = vpop.f32.mrf.mxu0
    %4871 = vdwg.mxu0
    %4872 = vmatpush.bf16.msra.mxu0 %v4177
    %4873 = vmatpush.bf16.msra.mxu0 %v4171
    %4874 = vmatpush.bf16.msra.mxu0 %v4165
    %4875 = vmatpush.bf16.msra.mxu0 %v4159
    %4876 = vmatpush.bf16.msra.mxu0 %v4153
    %4877 = vmatpush.bf16.msra.mxu0 %v4147
    %4878 = vmatpush.bf16.msra.mxu0 %v4141
    %4879 = vmatpush.bf16.msra.mxu0 %v4135
    %4880 = vmatmul.bf16.gmra.mxu0 %v666
    %v4881 = vpop.f32.mrf.mxu0
    %v4882 = vadd.f32 %v4869, %v4881
    %v4883 = vpop.f32.mrf.mxu0
    %4884 = vdwg.mxu0
    %4885 = vmatpush.bf16.msra.mxu0 %v4225
    %4886 = vmatpush.bf16.msra.mxu0 %v4219
    %4887 = vmatpush.bf16.msra.mxu0 %v4213
    %4888 = vmatpush.bf16.msra.mxu0 %v4207
    %4889 = vmatpush.bf16.msra.mxu0 %v4201
    %4890 = vmatpush.bf16.msra.mxu0 %v4195
    %4891 = vmatpush.bf16.msra.mxu0 %v4189
    %4892 = vmatpush.bf16.msra.mxu0 %v4183
    %4893 = vmatmul.bf16.gmra.mxu0 %v667
    %v4894 = vpop.f32.mrf.mxu0
    %v4895 = vadd.f32 %v4882, %v4894
    %v4896 = vpop.f32.mrf.mxu0
    %4897 = vdwg.mxu0
    %4898 = vmatpush.bf16.msra.mxu0 %v4273
    %4899 = vmatpush.bf16.msra.mxu0 %v4267
    %4900 = vmatpush.bf16.msra.mxu0 %v4261
    %4901 = vmatpush.bf16.msra.mxu0 %v4255
    %4902 = vmatpush.bf16.msra.mxu0 %v4249
    %4903 = vmatpush.bf16.msra.mxu0 %v4243
    %4904 = vmatpush.bf16.msra.mxu0 %v4237
    %4905 = vmatpush.bf16.msra.mxu0 %v4231
    %4906 = vmatmul.bf16.gmra.mxu0 %v668
    %v4907 = vpop.f32.mrf.mxu0
    %v4908 = vadd.f32 %v4895, %v4907
    %v4909 = vpop.f32.mrf.mxu0
    %4910 = vdwg.mxu0
    %4911 = vmatpush.bf16.msra.mxu0 %v4321
    %4912 = vmatpush.bf16.msra.mxu0 %v4315
    %4913 = vmatpush.bf16.msra.mxu0 %v4309
    %4914 = vmatpush.bf16.msra.mxu0 %v4303
    %4915 = vmatpush.bf16.msra.mxu0 %v4297
    %4916 = vmatpush.bf16.msra.mxu0 %v4291
    %4917 = vmatpush.bf16.msra.mxu0 %v4285
    %4918 = vmatpush.bf16.msra.mxu0 %v4279
    %4919 = vmatmul.bf16.gmra.mxu0 %v669
    %v4920 = vpop.f32.mrf.mxu0
    %v4921 = vadd.f32 %v4908, %v4920
    %v4922 = vpop.f32.mrf.mxu0
    %4923 = vdwg.mxu0
    %4924 = vmatpush.bf16.msra.mxu0 %v4082
    %4925 = vmatpush.bf16.msra.mxu0 %v4076
    %4926 = vmatpush.bf16.msra.mxu0 %v4070
    %4927 = vmatpush.bf16.msra.mxu0 %v4064
    %4928 = vmatpush.bf16.msra.mxu0 %v4058
    %4929 = vmatpush.bf16.msra.mxu0 %v4052
    %4930 = vmatpush.bf16.msra.mxu0 %v4046
    %4931 = vmatpush.bf16.msra.mxu0 %v4040
    %4932 = vmatmul.bf16.gmra.mxu0 %v664
    %v4933 = vpop.f32.mrf.mxu0
    %v4934 = vadd.f32 %v3091, %v4933
    %v4935 = vpop.f32.mrf.mxu0
    %4936 = vdwg.mxu0
    %4937 = vmatpush.bf16.msra.mxu0 %v4130
    %4938 = vmatpush.bf16.msra.mxu0 %v4124
    %4939 = vmatpush.bf16.msra.mxu0 %v4118
    %4940 = vmatpush.bf16.msra.mxu0 %v4112
    %4941 = vmatpush.bf16.msra.mxu0 %v4106
    %4942 = vmatpush.bf16.msra.mxu0 %v4100
    %4943 = vmatpush.bf16.msra.mxu0 %v4094
    %4944 = vmatpush.bf16.msra.mxu0 %v4088
    %4945 = vmatmul.bf16.gmra.mxu0 %v665
    %v4946 = vpop.f32.mrf.mxu0
    %v4947 = vadd.f32 %v4934, %v4946
    %v4948 = vpop.f32.mrf.mxu0
    %4949 = vdwg.mxu0
    %4950 = vmatpush.bf16.msra.mxu0 %v4178
    %4951 = vmatpush.bf16.msra.mxu0 %v4172
    %4952 = vmatpush.bf16.msra.mxu0 %v4166
    %4953 = vmatpush.bf16.msra.mxu0 %v4160
    %4954 = vmatpush.bf16.msra.mxu0 %v4154
    %4955 = vmatpush.bf16.msra.mxu0 %v4148
    %4956 = vmatpush.bf16.msra.mxu0 %v4142
    %4957 = vmatpush.bf16.msra.mxu0 %v4136
    %4958 = vmatmul.bf16.gmra.mxu0 %v666
    %v4959 = vpop.f32.mrf.mxu0
    %v4960 = vadd.f32 %v4947, %v4959
    %v4961 = vpop.f32.mrf.mxu0
    %4962 = vdwg.mxu0
    %4963 = vmatpush.bf16.msra.mxu0 %v4226
    %4964 = vmatpush.bf16.msra.mxu0 %v4220
    %4965 = vmatpush.bf16.msra.mxu0 %v4214
    %4966 = vmatpush.bf16.msra.mxu0 %v4208
    %4967 = vmatpush.bf16.msra.mxu0 %v4202
    %4968 = vmatpush.bf16.msra.mxu0 %v4196
    %4969 = vmatpush.bf16.msra.mxu0 %v4190
    %4970 = vmatpush.bf16.msra.mxu0 %v4184
    %4971 = vmatmul.bf16.gmra.mxu0 %v667
    %v4972 = vpop.f32.mrf.mxu0
    %v4973 = vadd.f32 %v4960, %v4972
    %v4974 = vpop.f32.mrf.mxu0
    %4975 = vdwg.mxu0
    %4976 = vmatpush.bf16.msra.mxu0 %v4274
    %4977 = vmatpush.bf16.msra.mxu0 %v4268
    %4978 = vmatpush.bf16.msra.mxu0 %v4262
    %4979 = vmatpush.bf16.msra.mxu0 %v4256
    %4980 = vmatpush.bf16.msra.mxu0 %v4250
    %4981 = vmatpush.bf16.msra.mxu0 %v4244
    %4982 = vmatpush.bf16.msra.mxu0 %v4238
    %4983 = vmatpush.bf16.msra.mxu0 %v4232
    %4984 = vmatmul.bf16.gmra.mxu0 %v668
    %v4985 = vpop.f32.mrf.mxu0
    %v4986 = vadd.f32 %v4973, %v4985
    %v4987 = vpop.f32.mrf.mxu0
    %4988 = vdwg.mxu0
    %4989 = vmatpush.bf16.msra.mxu0 %v4322
    %4990 = vmatpush.bf16.msra.mxu0 %v4316
    %4991 = vmatpush.bf16.msra.mxu0 %v4310
    %4992 = vmatpush.bf16.msra.mxu0 %v4304
    %4993 = vmatpush.bf16.msra.mxu0 %v4298
    %4994 = vmatpush.bf16.msra.mxu0 %v4292
    %4995 = vmatpush.bf16.msra.mxu0 %v4286
    %4996 = vmatpush.bf16.msra.mxu0 %v4280
    %4997 = vmatmul.bf16.gmra.mxu0 %v669
    %v4998 = vpop.f32.mrf.mxu0
    %v4999 = vadd.f32 %v4986, %v4998
    %v5000 = vpop.f32.mrf.mxu0
    %5001 = vdwg.mxu0
    %5002 = vmatpush.bf16.msra.mxu0 %v4083
    %5003 = vmatpush.bf16.msra.mxu0 %v4077
    %5004 = vmatpush.bf16.msra.mxu0 %v4071
    %5005 = vmatpush.bf16.msra.mxu0 %v4065
    %5006 = vmatpush.bf16.msra.mxu0 %v4059
    %5007 = vmatpush.bf16.msra.mxu0 %v4053
    %5008 = vmatpush.bf16.msra.mxu0 %v4047
    %5009 = vmatpush.bf16.msra.mxu0 %v4041
    %5010 = vmatmul.bf16.gmra.mxu0 %v664
    %v5011 = vpop.f32.mrf.mxu0
    %v5012 = vadd.f32 %v3169, %v5011
    %v5013 = vpop.f32.mrf.mxu0
    %5014 = vdwg.mxu0
    %5015 = vmatpush.bf16.msra.mxu0 %v4131
    %5016 = vmatpush.bf16.msra.mxu0 %v4125
    %5017 = vmatpush.bf16.msra.mxu0 %v4119
    %5018 = vmatpush.bf16.msra.mxu0 %v4113
    %5019 = vmatpush.bf16.msra.mxu0 %v4107
    %5020 = vmatpush.bf16.msra.mxu0 %v4101
    %5021 = vmatpush.bf16.msra.mxu0 %v4095
    %5022 = vmatpush.bf16.msra.mxu0 %v4089
    %5023 = vmatmul.bf16.gmra.mxu0 %v665
    %v5024 = vpop.f32.mrf.mxu0
    %v5025 = vadd.f32 %v5012, %v5024
    %v5026 = vpop.f32.mrf.mxu0
    %5027 = vdwg.mxu0
    %5028 = vmatpush.bf16.msra.mxu0 %v4179
    %5029 = vmatpush.bf16.msra.mxu0 %v4173
    %5030 = vmatpush.bf16.msra.mxu0 %v4167
    %5031 = vmatpush.bf16.msra.mxu0 %v4161
    %5032 = vmatpush.bf16.msra.mxu0 %v4155
    %5033 = vmatpush.bf16.msra.mxu0 %v4149
    %5034 = vmatpush.bf16.msra.mxu0 %v4143
    %5035 = vmatpush.bf16.msra.mxu0 %v4137
    %5036 = vmatmul.bf16.gmra.mxu0 %v666
    %v5037 = vpop.f32.mrf.mxu0
    %v5038 = vadd.f32 %v5025, %v5037
    %v5039 = vpop.f32.mrf.mxu0
    %5040 = vdwg.mxu0
    %5041 = vmatpush.bf16.msra.mxu0 %v4227
    %5042 = vmatpush.bf16.msra.mxu0 %v4221
    %5043 = vmatpush.bf16.msra.mxu0 %v4215
    %5044 = vmatpush.bf16.msra.mxu0 %v4209
    %5045 = vmatpush.bf16.msra.mxu0 %v4203
    %5046 = vmatpush.bf16.msra.mxu0 %v4197
    %5047 = vmatpush.bf16.msra.mxu0 %v4191
    %5048 = vmatpush.bf16.msra.mxu0 %v4185
    %5049 = vmatmul.bf16.gmra.mxu0 %v667
    %v5050 = vpop.f32.mrf.mxu0
    %v5051 = vadd.f32 %v5038, %v5050
    %v5052 = vpop.f32.mrf.mxu0
    %5053 = vdwg.mxu0
    %5054 = vmatpush.bf16.msra.mxu0 %v4275
    %5055 = vmatpush.bf16.msra.mxu0 %v4269
    %5056 = vmatpush.bf16.msra.mxu0 %v4263
    %5057 = vmatpush.bf16.msra.mxu0 %v4257
    %5058 = vmatpush.bf16.msra.mxu0 %v4251
    %5059 = vmatpush.bf16.msra.mxu0 %v4245
    %5060 = vmatpush.bf16.msra.mxu0 %v4239
    %5061 = vmatpush.bf16.msra.mxu0 %v4233
    %5062 = vmatmul.bf16.gmra.mxu0 %v668
    %v5063 = vpop.f32.mrf.mxu0
    %v5064 = vadd.f32 %v5051, %v5063
    %v5065 = vpop.f32.mrf.mxu0
    %5066 = vdwg.mxu0
    %5067 = vmatpush.bf16.msra.mxu0 %v4323
    %5068 = vmatpush.bf16.msra.mxu0 %v4317
    %5069 = vmatpush.bf16.msra.mxu0 %v4311
    %5070 = vmatpush.bf16.msra.mxu0 %v4305
    %5071 = vmatpush.bf16.msra.mxu0 %v4299
    %5072 = vmatpush.bf16.msra.mxu0 %v4293
    %5073 = vmatpush.bf16.msra.mxu0 %v4287
    %5074 = vmatpush.bf16.msra.mxu0 %v4281
    %5075 = vmatmul.bf16.gmra.mxu0 %v669
    %v5076 = vpop.f32.mrf.mxu0
    %v5077 = vadd.f32 %v5064, %v5076
    %v5078 = vpop.f32.mrf.mxu0
    %5079 = vdwg.mxu0
    %v5080 = vld [vmem:[%s4] sm:$0xff]
    %v5081 = vld [vmem:[%s4 + $0x8] sm:$0xff]
    %v5082 = vld [vmem:[%s4 + $0x10] sm:$0xff]
    %v5083 = vld [vmem:[%s4 + $0x18] sm:$0xff]
    %v5084 = vld [vmem:[%s4 + $0x20] sm:$0xff]
    %v5085 = vld [vmem:[%s4 + $0x28] sm:$0xff]
    %v5086 = vld [vmem:[%s4 + $0x30] sm:$0xff]
    %v5087 = vld [vmem:[%s4 + $0x38] sm:$0xff]
    %v5088 = vld [vmem:[%s4 + $0x40] sm:$0xff]
    %v5089 = vld [vmem:[%s4 + $0x48] sm:$0xff]
    %v5090 = vld [vmem:[%s4 + $0x50] sm:$0xff]
    %v5091 = vld [vmem:[%s4 + $0x58] sm:$0xff]
    %v5092 = vld [vmem:[%s4 + $0x60] sm:$0xff]
    %v5093 = vld [vmem:[%s4 + $0x68] sm:$0xff]
    %v5094 = vld [vmem:[%s4 + $0x70] sm:$0xff]
    %v5095 = vld [vmem:[%s4 + $0x78] sm:$0xff]
    %v5096 = vld [vmem:[%s4 + $0x80] sm:$0xff]
    %v5097 = vld [vmem:[%s4 + $0x88] sm:$0xff]
    %v5098 = vld [vmem:[%s4 + $0x90] sm:$0xff]
    %v5099 = vld [vmem:[%s4 + $0x98] sm:$0xff]
    %v5100 = vld [vmem:[%s4 + $0xa0] sm:$0xff]
    %v5101 = vld [vmem:[%s4 + $0xa8] sm:$0xff]
    %v5102 = vld [vmem:[%s4 + $0xb0] sm:$0xff]
    %v5103 = vld [vmem:[%s4 + $0xb8] sm:$0xff]
    %v5104 = vld [vmem:[%s4 + $0xc0] sm:$0xff]
    %v5105 = vld [vmem:[%s4 + $0xc8] sm:$0xff]
    %v5106 = vld [vmem:[%s4 + $0xd0] sm:$0xff]
    %v5107 = vld [vmem:[%s4 + $0xd8] sm:$0xff]
    %v5108 = vld [vmem:[%s4 + $0xe0] sm:$0xff]
    %v5109 = vld [vmem:[%s4 + $0xe8] sm:$0xff]
    %v5110 = vld [vmem:[%s4 + $0xf0] sm:$0xff]
    %v5111 = vld [vmem:[%s4 + $0xf8] sm:$0xff]
    %v5112 = vld [vmem:[%s4 + $0x100] sm:$0xff]
    %v5113 = vld [vmem:[%s4 + $0x108] sm:$0xff]
    %v5114 = vld [vmem:[%s4 + $0x110] sm:$0xff]
    %v5115 = vld [vmem:[%s4 + $0x118] sm:$0xff]
    %v5116 = vld [vmem:[%s4 + $0x120] sm:$0xff]
    %v5117 = vld [vmem:[%s4 + $0x128] sm:$0xff]
    %v5118 = vld [vmem:[%s4 + $0x130] sm:$0xff]
    %v5119 = vld [vmem:[%s4 + $0x138] sm:$0xff]
    %v5120 = vld [vmem:[%s4 + $0x140] sm:$0xff]
    %v5121 = vld [vmem:[%s4 + $0x148] sm:$0xff]
    %v5122 = vld [vmem:[%s4 + $0x150] sm:$0xff]
    %v5123 = vld [vmem:[%s4 + $0x158] sm:$0xff]
    %v5124 = vld [vmem:[%s4 + $0x160] sm:$0xff]
    %v5125 = vld [vmem:[%s4 + $0x168] sm:$0xff]
    %v5126 = vld [vmem:[%s4 + $0x170] sm:$0xff]
    %v5127 = vld [vmem:[%s4 + $0x178] sm:$0xff]
    %v5128 = vld [vmem:[%s4 + $0x180] sm:$0xff]
    %v5129 = vld [vmem:[%s4 + $0x188] sm:$0xff]
    %v5130 = vld [vmem:[%s4 + $0x190] sm:$0xff]
    %v5131 = vld [vmem:[%s4 + $0x198] sm:$0xff]
    %v5132 = vld [vmem:[%s4 + $0x1a0] sm:$0xff]
    %v5133 = vld [vmem:[%s4 + $0x1a8] sm:$0xff]
    %v5134 = vld [vmem:[%s4 + $0x1b0] sm:$0xff]
    %v5135 = vld [vmem:[%s4 + $0x1b8] sm:$0xff]
    %v5136 = vld [vmem:[%s4 + $0x1c0] sm:$0xff]
    %v5137 = vld [vmem:[%s4 + $0x1c8] sm:$0xff]
    %v5138 = vld [vmem:[%s4 + $0x1d0] sm:$0xff]
    %v5139 = vld [vmem:[%s4 + $0x1d8] sm:$0xff]
    %v5140 = vld [vmem:[%s4 + $0x1e0] sm:$0xff]
    %v5141 = vld [vmem:[%s4 + $0x1e8] sm:$0xff]
    %v5142 = vld [vmem:[%s4 + $0x1f0] sm:$0xff]
    %v5143 = vld [vmem:[%s4 + $0x1f8] sm:$0xff]
    %v5144 = vld [vmem:[%s4 + $0x200] sm:$0xff]
    %v5145 = vld [vmem:[%s4 + $0x208] sm:$0xff]
    %v5146 = vld [vmem:[%s4 + $0x210] sm:$0xff]
    %v5147 = vld [vmem:[%s4 + $0x218] sm:$0xff]
    %v5148 = vld [vmem:[%s4 + $0x220] sm:$0xff]
    %v5149 = vld [vmem:[%s4 + $0x228] sm:$0xff]
    %v5150 = vld [vmem:[%s4 + $0x230] sm:$0xff]
    %v5151 = vld [vmem:[%s4 + $0x238] sm:$0xff]
    %v5152 = vld [vmem:[%s4 + $0x240] sm:$0xff]
    %v5153 = vld [vmem:[%s4 + $0x248] sm:$0xff]
    %v5154 = vld [vmem:[%s4 + $0x250] sm:$0xff]
    %v5155 = vld [vmem:[%s4 + $0x258] sm:$0xff]
    %v5156 = vld [vmem:[%s4 + $0x260] sm:$0xff]
    %v5157 = vld [vmem:[%s4 + $0x268] sm:$0xff]
    %v5158 = vld [vmem:[%s4 + $0x270] sm:$0xff]
    %v5159 = vld [vmem:[%s4 + $0x278] sm:$0xff]
    %v5160 = vld [vmem:[%s4 + $0x280] sm:$0xff]
    %v5161 = vld [vmem:[%s4 + $0x288] sm:$0xff]
    %v5162 = vld [vmem:[%s4 + $0x290] sm:$0xff]
    %v5163 = vld [vmem:[%s4 + $0x298] sm:$0xff]
    %v5164 = vld [vmem:[%s4 + $0x2a0] sm:$0xff]
    %v5165 = vld [vmem:[%s4 + $0x2a8] sm:$0xff]
    %v5166 = vld [vmem:[%s4 + $0x2b0] sm:$0xff]
    %v5167 = vld [vmem:[%s4 + $0x2b8] sm:$0xff]
    %v5168 = vld [vmem:[%s4 + $0x2c0] sm:$0xff]
    %v5169 = vld [vmem:[%s4 + $0x2c8] sm:$0xff]
    %v5170 = vld [vmem:[%s4 + $0x2d0] sm:$0xff]
    %v5171 = vld [vmem:[%s4 + $0x2d8] sm:$0xff]
    %v5172 = vld [vmem:[%s4 + $0x2e0] sm:$0xff]
    %v5173 = vld [vmem:[%s4 + $0x2e8] sm:$0xff]
    %v5174 = vld [vmem:[%s4 + $0x2f0] sm:$0xff]
    %v5175 = vld [vmem:[%s4 + $0x2f8] sm:$0xff]
    %v5176 = vld [vmem:[%s4 + $0x300] sm:$0xff]
    %v5177 = vld [vmem:[%s4 + $0x308] sm:$0xff]
    %v5178 = vld [vmem:[%s4 + $0x310] sm:$0xff]
    %v5179 = vld [vmem:[%s4 + $0x318] sm:$0xff]
    %v5180 = vld [vmem:[%s4 + $0x320] sm:$0xff]
    %v5181 = vld [vmem:[%s4 + $0x328] sm:$0xff]
    %v5182 = vld [vmem:[%s4 + $0x330] sm:$0xff]
    %v5183 = vld [vmem:[%s4 + $0x338] sm:$0xff]
    %v5184 = vld [vmem:[%s4 + $0x340] sm:$0xff]
    %v5185 = vld [vmem:[%s4 + $0x348] sm:$0xff]
    %v5186 = vld [vmem:[%s4 + $0x350] sm:$0xff]
    %v5187 = vld [vmem:[%s4 + $0x358] sm:$0xff]
    %v5188 = vld [vmem:[%s4 + $0x360] sm:$0xff]
    %v5189 = vld [vmem:[%s4 + $0x368] sm:$0xff]
    %v5190 = vld [vmem:[%s4 + $0x370] sm:$0xff]
    %v5191 = vld [vmem:[%s4 + $0x378] sm:$0xff]
    %v5192 = vld [vmem:[%s4 + $0x380] sm:$0xff]
    %v5193 = vld [vmem:[%s4 + $0x388] sm:$0xff]
    %v5194 = vld [vmem:[%s4 + $0x390] sm:$0xff]
    %v5195 = vld [vmem:[%s4 + $0x398] sm:$0xff]
    %v5196 = vld [vmem:[%s4 + $0x3a0] sm:$0xff]
    %v5197 = vld [vmem:[%s4 + $0x3a8] sm:$0xff]
    %v5198 = vld [vmem:[%s4 + $0x3b0] sm:$0xff]
    %v5199 = vld [vmem:[%s4 + $0x3b8] sm:$0xff]
    %v5200 = vld [vmem:[%s4 + $0x3c0] sm:$0xff]
    %v5201 = vld [vmem:[%s4 + $0x3c8] sm:$0xff]
    %v5202 = vld [vmem:[%s4 + $0x3d0] sm:$0xff]
    %v5203 = vld [vmem:[%s4 + $0x3d8] sm:$0xff]
    %v5204 = vld [vmem:[%s4 + $0x3e0] sm:$0xff]
    %v5205 = vld [vmem:[%s4 + $0x3e8] sm:$0xff]
    %v5206 = vld [vmem:[%s4 + $0x3f0] sm:$0xff]
    %v5207 = vld [vmem:[%s4 + $0x3f8] sm:$0xff]
    %v5208 = vld [vmem:[%s4 + $0x400] sm:$0xff]
    %v5209 = vld [vmem:[%s4 + $0x408] sm:$0xff]
    %v5210 = vld [vmem:[%s4 + $0x410] sm:$0xff]
    %v5211 = vld [vmem:[%s4 + $0x418] sm:$0xff]
    %v5212 = vld [vmem:[%s4 + $0x420] sm:$0xff]
    %v5213 = vld [vmem:[%s4 + $0x428] sm:$0xff]
    %v5214 = vld [vmem:[%s4 + $0x430] sm:$0xff]
    %v5215 = vld [vmem:[%s4 + $0x438] sm:$0xff]
    %v5216 = vld [vmem:[%s4 + $0x440] sm:$0xff]
    %v5217 = vld [vmem:[%s4 + $0x448] sm:$0xff]
    %v5218 = vld [vmem:[%s4 + $0x450] sm:$0xff]
    %v5219 = vld [vmem:[%s4 + $0x458] sm:$0xff]
    %v5220 = vld [vmem:[%s4 + $0x460] sm:$0xff]
    %v5221 = vld [vmem:[%s4 + $0x468] sm:$0xff]
    %v5222 = vld [vmem:[%s4 + $0x470] sm:$0xff]
    %v5223 = vld [vmem:[%s4 + $0x478] sm:$0xff]
    %v5224 = vld [vmem:[%s4 + $0x480] sm:$0xff]
    %v5225 = vld [vmem:[%s4 + $0x488] sm:$0xff]
    %v5226 = vld [vmem:[%s4 + $0x490] sm:$0xff]
    %v5227 = vld [vmem:[%s4 + $0x498] sm:$0xff]
    %v5228 = vld [vmem:[%s4 + $0x4a0] sm:$0xff]
    %v5229 = vld [vmem:[%s4 + $0x4a8] sm:$0xff]
    %v5230 = vld [vmem:[%s4 + $0x4b0] sm:$0xff]
    %v5231 = vld [vmem:[%s4 + $0x4b8] sm:$0xff]
    %v5232 = vld [vmem:[%s4 + $0x4c0] sm:$0xff]
    %v5233 = vld [vmem:[%s4 + $0x4c8] sm:$0xff]
    %v5234 = vld [vmem:[%s4 + $0x4d0] sm:$0xff]
    %v5235 = vld [vmem:[%s4 + $0x4d8] sm:$0xff]
    %v5236 = vld [vmem:[%s4 + $0x4e0] sm:$0xff]
    %v5237 = vld [vmem:[%s4 + $0x4e8] sm:$0xff]
    %v5238 = vld [vmem:[%s4 + $0x4f0] sm:$0xff]
    %v5239 = vld [vmem:[%s4 + $0x4f8] sm:$0xff]
    %v5240 = vld [vmem:[%s4 + $0x500] sm:$0xff]
    %v5241 = vld [vmem:[%s4 + $0x508] sm:$0xff]
    %v5242 = vld [vmem:[%s4 + $0x510] sm:$0xff]
    %v5243 = vld [vmem:[%s4 + $0x518] sm:$0xff]
    %v5244 = vld [vmem:[%s4 + $0x520] sm:$0xff]
    %v5245 = vld [vmem:[%s4 + $0x528] sm:$0xff]
    %v5246 = vld [vmem:[%s4 + $0x530] sm:$0xff]
    %v5247 = vld [vmem:[%s4 + $0x538] sm:$0xff]
    %v5248 = vld [vmem:[%s4 + $0x540] sm:$0xff]
    %v5249 = vld [vmem:[%s4 + $0x548] sm:$0xff]
    %v5250 = vld [vmem:[%s4 + $0x550] sm:$0xff]
    %v5251 = vld [vmem:[%s4 + $0x558] sm:$0xff]
    %v5252 = vld [vmem:[%s4 + $0x560] sm:$0xff]
    %v5253 = vld [vmem:[%s4 + $0x568] sm:$0xff]
    %v5254 = vld [vmem:[%s4 + $0x570] sm:$0xff]
    %v5255 = vld [vmem:[%s4 + $0x578] sm:$0xff]
    %v5256 = vld [vmem:[%s4 + $0x580] sm:$0xff]
    %v5257 = vld [vmem:[%s4 + $0x588] sm:$0xff]
    %v5258 = vld [vmem:[%s4 + $0x590] sm:$0xff]
    %v5259 = vld [vmem:[%s4 + $0x598] sm:$0xff]
    %v5260 = vld [vmem:[%s4 + $0x5a0] sm:$0xff]
    %v5261 = vld [vmem:[%s4 + $0x5a8] sm:$0xff]
    %v5262 = vld [vmem:[%s4 + $0x5b0] sm:$0xff]
    %v5263 = vld [vmem:[%s4 + $0x5b8] sm:$0xff]
    %v5264 = vld [vmem:[%s4 + $0x5c0] sm:$0xff]
    %v5265 = vld [vmem:[%s4 + $0x5c8] sm:$0xff]
    %v5266 = vld [vmem:[%s4 + $0x5d0] sm:$0xff]
    %v5267 = vld [vmem:[%s4 + $0x5d8] sm:$0xff]
    %v5268 = vld [vmem:[%s4 + $0x5e0] sm:$0xff]
    %v5269 = vld [vmem:[%s4 + $0x5e8] sm:$0xff]
    %v5270 = vld [vmem:[%s4 + $0x5f0] sm:$0xff]
    %v5271 = vld [vmem:[%s4 + $0x5f8] sm:$0xff]
    %v5272 = vld [vmem:[%s4 + $0x600] sm:$0xff]
    %v5273 = vld [vmem:[%s4 + $0x608] sm:$0xff]
    %v5274 = vld [vmem:[%s4 + $0x610] sm:$0xff]
    %v5275 = vld [vmem:[%s4 + $0x618] sm:$0xff]
    %v5276 = vld [vmem:[%s4 + $0x620] sm:$0xff]
    %v5277 = vld [vmem:[%s4 + $0x628] sm:$0xff]
    %v5278 = vld [vmem:[%s4 + $0x630] sm:$0xff]
    %v5279 = vld [vmem:[%s4 + $0x638] sm:$0xff]
    %v5280 = vld [vmem:[%s4 + $0x640] sm:$0xff]
    %v5281 = vld [vmem:[%s4 + $0x648] sm:$0xff]
    %v5282 = vld [vmem:[%s4 + $0x650] sm:$0xff]
    %v5283 = vld [vmem:[%s4 + $0x658] sm:$0xff]
    %v5284 = vld [vmem:[%s4 + $0x660] sm:$0xff]
    %v5285 = vld [vmem:[%s4 + $0x668] sm:$0xff]
    %v5286 = vld [vmem:[%s4 + $0x670] sm:$0xff]
    %v5287 = vld [vmem:[%s4 + $0x678] sm:$0xff]
    %v5288 = vld [vmem:[%s4 + $0x680] sm:$0xff]
    %v5289 = vld [vmem:[%s4 + $0x688] sm:$0xff]
    %v5290 = vld [vmem:[%s4 + $0x690] sm:$0xff]
    %v5291 = vld [vmem:[%s4 + $0x698] sm:$0xff]
    %v5292 = vld [vmem:[%s4 + $0x6a0] sm:$0xff]
    %v5293 = vld [vmem:[%s4 + $0x6a8] sm:$0xff]
    %v5294 = vld [vmem:[%s4 + $0x6b0] sm:$0xff]
    %v5295 = vld [vmem:[%s4 + $0x6b8] sm:$0xff]
    %v5296 = vld [vmem:[%s4 + $0x6c0] sm:$0xff]
    %v5297 = vld [vmem:[%s4 + $0x6c8] sm:$0xff]
    %v5298 = vld [vmem:[%s4 + $0x6d0] sm:$0xff]
    %v5299 = vld [vmem:[%s4 + $0x6d8] sm:$0xff]
    %v5300 = vld [vmem:[%s4 + $0x6e0] sm:$0xff]
    %v5301 = vld [vmem:[%s4 + $0x6e8] sm:$0xff]
    %v5302 = vld [vmem:[%s4 + $0x6f0] sm:$0xff]
    %v5303 = vld [vmem:[%s4 + $0x6f8] sm:$0xff]
    %v5304 = vld [vmem:[%s4 + $0x700] sm:$0xff]
    %v5305 = vld [vmem:[%s4 + $0x708] sm:$0xff]
    %v5306 = vld [vmem:[%s4 + $0x710] sm:$0xff]
    %v5307 = vld [vmem:[%s4 + $0x718] sm:$0xff]
    %v5308 = vld [vmem:[%s4 + $0x720] sm:$0xff]
    %v5309 = vld [vmem:[%s4 + $0x728] sm:$0xff]
    %v5310 = vld [vmem:[%s4 + $0x730] sm:$0xff]
    %v5311 = vld [vmem:[%s4 + $0x738] sm:$0xff]
    %v5312 = vld [vmem:[%s4 + $0x740] sm:$0xff]
    %v5313 = vld [vmem:[%s4 + $0x748] sm:$0xff]
    %v5314 = vld [vmem:[%s4 + $0x750] sm:$0xff]
    %v5315 = vld [vmem:[%s4 + $0x758] sm:$0xff]
    %v5316 = vld [vmem:[%s4 + $0x760] sm:$0xff]
    %v5317 = vld [vmem:[%s4 + $0x768] sm:$0xff]
    %v5318 = vld [vmem:[%s4 + $0x770] sm:$0xff]
    %v5319 = vld [vmem:[%s4 + $0x778] sm:$0xff]
    %v5320 = vld [vmem:[%s4 + $0x780] sm:$0xff]
    %v5321 = vld [vmem:[%s4 + $0x788] sm:$0xff]
    %v5322 = vld [vmem:[%s4 + $0x790] sm:$0xff]
    %v5323 = vld [vmem:[%s4 + $0x798] sm:$0xff]
    %v5324 = vld [vmem:[%s4 + $0x7a0] sm:$0xff]
    %v5325 = vld [vmem:[%s4 + $0x7a8] sm:$0xff]
    %v5326 = vld [vmem:[%s4 + $0x7b0] sm:$0xff]
    %v5327 = vld [vmem:[%s4 + $0x7b8] sm:$0xff]
    %v5328 = vld [vmem:[%s4 + $0x7c0] sm:$0xff]
    %v5329 = vld [vmem:[%s4 + $0x7c8] sm:$0xff]
    %v5330 = vld [vmem:[%s4 + $0x7d0] sm:$0xff]
    %v5331 = vld [vmem:[%s4 + $0x7d8] sm:$0xff]
    %v5332 = vld [vmem:[%s4 + $0x7e0] sm:$0xff]
    %v5333 = vld [vmem:[%s4 + $0x7e8] sm:$0xff]
    %v5334 = vld [vmem:[%s4 + $0x7f0] sm:$0xff]
    %v5335 = vld [vmem:[%s4 + $0x7f8] sm:$0xff]
    %v5336 = vld [vmem:[%s4 + $0x800] sm:$0xff]
    %v5337 = vld [vmem:[%s4 + $0x808] sm:$0xff]
    %v5338 = vld [vmem:[%s4 + $0x810] sm:$0xff]
    %v5339 = vld [vmem:[%s4 + $0x818] sm:$0xff]
    %v5340 = vld [vmem:[%s4 + $0x820] sm:$0xff]
    %v5341 = vld [vmem:[%s4 + $0x828] sm:$0xff]
    %v5342 = vld [vmem:[%s4 + $0x830] sm:$0xff]
    %v5343 = vld [vmem:[%s4 + $0x838] sm:$0xff]
    %v5344 = vld [vmem:[%s4 + $0x840] sm:$0xff]
    %v5345 = vld [vmem:[%s4 + $0x848] sm:$0xff]
    %v5346 = vld [vmem:[%s4 + $0x850] sm:$0xff]
    %v5347 = vld [vmem:[%s4 + $0x858] sm:$0xff]
    %v5348 = vld [vmem:[%s4 + $0x860] sm:$0xff]
    %v5349 = vld [vmem:[%s4 + $0x868] sm:$0xff]
    %v5350 = vld [vmem:[%s4 + $0x870] sm:$0xff]
    %v5351 = vld [vmem:[%s4 + $0x878] sm:$0xff]
    %v5352 = vld [vmem:[%s4 + $0x880] sm:$0xff]
    %v5353 = vld [vmem:[%s4 + $0x888] sm:$0xff]
    %v5354 = vld [vmem:[%s4 + $0x890] sm:$0xff]
    %v5355 = vld [vmem:[%s4 + $0x898] sm:$0xff]
    %v5356 = vld [vmem:[%s4 + $0x8a0] sm:$0xff]
    %v5357 = vld [vmem:[%s4 + $0x8a8] sm:$0xff]
    %v5358 = vld [vmem:[%s4 + $0x8b0] sm:$0xff]
    %v5359 = vld [vmem:[%s4 + $0x8b8] sm:$0xff]
    %v5360 = vld [vmem:[%s4 + $0x8c0] sm:$0xff]
    %v5361 = vld [vmem:[%s4 + $0x8c8] sm:$0xff]
    %v5362 = vld [vmem:[%s4 + $0x8d0] sm:$0xff]
    %v5363 = vld [vmem:[%s4 + $0x8d8] sm:$0xff]
    %v5364 = vld [vmem:[%s4 + $0x8e0] sm:$0xff]
    %v5365 = vld [vmem:[%s4 + $0x8e8] sm:$0xff]
    %v5366 = vld [vmem:[%s4 + $0x8f0] sm:$0xff]
    %v5367 = vld [vmem:[%s4 + $0x8f8] sm:$0xff]
    %v5656 = vunpack.c.l.b16 %v5080
    %v5657 = vunpack.c.h.b16 %v5080
    %v5658 = vunpack.c.l.b16 %v5081
    %v5659 = vunpack.c.h.b16 %v5081
    %v5660 = vunpack.c.l.b16 %v5082
    %v5661 = vunpack.c.h.b16 %v5082
    %v5662 = vunpack.c.l.b16 %v5083
    %v5663 = vunpack.c.h.b16 %v5083
    %v5664 = vunpack.c.l.b16 %v5084
    %v5665 = vunpack.c.h.b16 %v5084
    %v5666 = vunpack.c.l.b16 %v5085
    %v5667 = vunpack.c.h.b16 %v5085
    %v5668 = vunpack.c.l.b16 %v5086
    %v5669 = vunpack.c.h.b16 %v5086
    %v5670 = vunpack.c.l.b16 %v5087
    %v5671 = vunpack.c.h.b16 %v5087
    %v5672 = vunpack.c.l.b16 %v5088
    %v5673 = vunpack.c.h.b16 %v5088
    %v5674 = vunpack.c.l.b16 %v5089
    %v5675 = vunpack.c.h.b16 %v5089
    %v5676 = vunpack.c.l.b16 %v5090
    %v5677 = vunpack.c.h.b16 %v5090
    %v5678 = vunpack.c.l.b16 %v5091
    %v5679 = vunpack.c.h.b16 %v5091
    %v5680 = vunpack.c.l.b16 %v5092
    %v5681 = vunpack.c.h.b16 %v5092
    %v5682 = vunpack.c.l.b16 %v5093
    %v5683 = vunpack.c.h.b16 %v5093
    %v5684 = vunpack.c.l.b16 %v5094
    %v5685 = vunpack.c.h.b16 %v5094
    %v5686 = vunpack.c.l.b16 %v5095
    %v5687 = vunpack.c.h.b16 %v5095
    %v5688 = vunpack.c.l.b16 %v5096
    %v5689 = vunpack.c.h.b16 %v5096
    %v5690 = vunpack.c.l.b16 %v5097
    %v5691 = vunpack.c.h.b16 %v5097
    %v5692 = vunpack.c.l.b16 %v5098
    %v5693 = vunpack.c.h.b16 %v5098
    %v5694 = vunpack.c.l.b16 %v5099
    %v5695 = vunpack.c.h.b16 %v5099
    %v5696 = vunpack.c.l.b16 %v5100
    %v5697 = vunpack.c.h.b16 %v5100
    %v5698 = vunpack.c.l.b16 %v5101
    %v5699 = vunpack.c.h.b16 %v5101
    %v5700 = vunpack.c.l.b16 %v5102
    %v5701 = vunpack.c.h.b16 %v5102
    %v5702 = vunpack.c.l.b16 %v5103
    %v5703 = vunpack.c.h.b16 %v5103
    %v5704 = vunpack.c.l.b16 %v5104
    %v5705 = vunpack.c.h.b16 %v5104
    %v5706 = vunpack.c.l.b16 %v5105
    %v5707 = vunpack.c.h.b16 %v5105
    %v5708 = vunpack.c.l.b16 %v5106
    %v5709 = vunpack.c.h.b16 %v5106
    %v5710 = vunpack.c.l.b16 %v5107
    %v5711 = vunpack.c.h.b16 %v5107
    %v5712 = vunpack.c.l.b16 %v5108
    %v5713 = vunpack.c.h.b16 %v5108
    %v5714 = vunpack.c.l.b16 %v5109
    %v5715 = vunpack.c.h.b16 %v5109
    %v5716 = vunpack.c.l.b16 %v5110
    %v5717 = vunpack.c.h.b16 %v5110
    %v5718 = vunpack.c.l.b16 %v5111
    %v5719 = vunpack.c.h.b16 %v5111
    %v5720 = vunpack.c.l.b16 %v5112
    %v5721 = vunpack.c.h.b16 %v5112
    %v5722 = vunpack.c.l.b16 %v5113
    %v5723 = vunpack.c.h.b16 %v5113
    %v5724 = vunpack.c.l.b16 %v5114
    %v5725 = vunpack.c.h.b16 %v5114
    %v5726 = vunpack.c.l.b16 %v5115
    %v5727 = vunpack.c.h.b16 %v5115
    %v5728 = vunpack.c.l.b16 %v5116
    %v5729 = vunpack.c.h.b16 %v5116
    %v5730 = vunpack.c.l.b16 %v5117
    %v5731 = vunpack.c.h.b16 %v5117
    %v5732 = vunpack.c.l.b16 %v5118
    %v5733 = vunpack.c.h.b16 %v5118
    %v5734 = vunpack.c.l.b16 %v5119
    %v5735 = vunpack.c.h.b16 %v5119
    %v5736 = vunpack.c.l.b16 %v5120
    %v5737 = vunpack.c.h.b16 %v5120
    %v5738 = vunpack.c.l.b16 %v5121
    %v5739 = vunpack.c.h.b16 %v5121
    %v5740 = vunpack.c.l.b16 %v5122
    %v5741 = vunpack.c.h.b16 %v5122
    %v5742 = vunpack.c.l.b16 %v5123
    %v5743 = vunpack.c.h.b16 %v5123
    %v5744 = vunpack.c.l.b16 %v5124
    %v5745 = vunpack.c.h.b16 %v5124
    %v5746 = vunpack.c.l.b16 %v5125
    %v5747 = vunpack.c.h.b16 %v5125
    %v5748 = vunpack.c.l.b16 %v5126
    %v5749 = vunpack.c.h.b16 %v5126
    %v5750 = vunpack.c.l.b16 %v5127
    %v5751 = vunpack.c.h.b16 %v5127
    %v5752 = vunpack.c.l.b16 %v5128
    %v5753 = vunpack.c.h.b16 %v5128
    %v5754 = vunpack.c.l.b16 %v5129
    %v5755 = vunpack.c.h.b16 %v5129
    %v5756 = vunpack.c.l.b16 %v5130
    %v5757 = vunpack.c.h.b16 %v5130
    %v5758 = vunpack.c.l.b16 %v5131
    %v5759 = vunpack.c.h.b16 %v5131
    %v5760 = vunpack.c.l.b16 %v5132
    %v5761 = vunpack.c.h.b16 %v5132
    %v5762 = vunpack.c.l.b16 %v5133
    %v5763 = vunpack.c.h.b16 %v5133
    %v5764 = vunpack.c.l.b16 %v5134
    %v5765 = vunpack.c.h.b16 %v5134
    %v5766 = vunpack.c.l.b16 %v5135
    %v5767 = vunpack.c.h.b16 %v5135
    %v5768 = vunpack.c.l.b16 %v5136
    %v5769 = vunpack.c.h.b16 %v5136
    %v5770 = vunpack.c.l.b16 %v5137
    %v5771 = vunpack.c.h.b16 %v5137
    %v5772 = vunpack.c.l.b16 %v5138
    %v5773 = vunpack.c.h.b16 %v5138
    %v5774 = vunpack.c.l.b16 %v5139
    %v5775 = vunpack.c.h.b16 %v5139
    %v5776 = vunpack.c.l.b16 %v5140
    %v5777 = vunpack.c.h.b16 %v5140
    %v5778 = vunpack.c.l.b16 %v5141
    %v5779 = vunpack.c.h.b16 %v5141
    %v5780 = vunpack.c.l.b16 %v5142
    %v5781 = vunpack.c.h.b16 %v5142
    %v5782 = vunpack.c.l.b16 %v5143
    %v5783 = vunpack.c.h.b16 %v5143
    %v5784 = vunpack.c.l.b16 %v5144
    %v5785 = vunpack.c.h.b16 %v5144
    %v5786 = vunpack.c.l.b16 %v5145
    %v5787 = vunpack.c.h.b16 %v5145
    %v5788 = vunpack.c.l.b16 %v5146
    %v5789 = vunpack.c.h.b16 %v5146
    %v5790 = vunpack.c.l.b16 %v5147
    %v5791 = vunpack.c.h.b16 %v5147
    %v5792 = vunpack.c.l.b16 %v5148
    %v5793 = vunpack.c.h.b16 %v5148
    %v5794 = vunpack.c.l.b16 %v5149
    %v5795 = vunpack.c.h.b16 %v5149
    %v5796 = vunpack.c.l.b16 %v5150
    %v5797 = vunpack.c.h.b16 %v5150
    %v5798 = vunpack.c.l.b16 %v5151
    %v5799 = vunpack.c.h.b16 %v5151
    %v5800 = vunpack.c.l.b16 %v5152
    %v5801 = vunpack.c.h.b16 %v5152
    %v5802 = vunpack.c.l.b16 %v5153
    %v5803 = vunpack.c.h.b16 %v5153
    %v5804 = vunpack.c.l.b16 %v5154
    %v5805 = vunpack.c.h.b16 %v5154
    %v5806 = vunpack.c.l.b16 %v5155
    %v5807 = vunpack.c.h.b16 %v5155
    %v5808 = vunpack.c.l.b16 %v5156
    %v5809 = vunpack.c.h.b16 %v5156
    %v5810 = vunpack.c.l.b16 %v5157
    %v5811 = vunpack.c.h.b16 %v5157
    %v5812 = vunpack.c.l.b16 %v5158
    %v5813 = vunpack.c.h.b16 %v5158
    %v5814 = vunpack.c.l.b16 %v5159
    %v5815 = vunpack.c.h.b16 %v5159
    %v5816 = vunpack.c.l.b16 %v5160
    %v5817 = vunpack.c.h.b16 %v5160
    %v5818 = vunpack.c.l.b16 %v5161
    %v5819 = vunpack.c.h.b16 %v5161
    %v5820 = vunpack.c.l.b16 %v5162
    %v5821 = vunpack.c.h.b16 %v5162
    %v5822 = vunpack.c.l.b16 %v5163
    %v5823 = vunpack.c.h.b16 %v5163
    %v5824 = vunpack.c.l.b16 %v5164
    %v5825 = vunpack.c.h.b16 %v5164
    %v5826 = vunpack.c.l.b16 %v5165
    %v5827 = vunpack.c.h.b16 %v5165
    %v5828 = vunpack.c.l.b16 %v5166
    %v5829 = vunpack.c.h.b16 %v5166
    %v5830 = vunpack.c.l.b16 %v5167
    %v5831 = vunpack.c.h.b16 %v5167
    %v5832 = vunpack.c.l.b16 %v5168
    %v5833 = vunpack.c.h.b16 %v5168
    %v5834 = vunpack.c.l.b16 %v5169
    %v5835 = vunpack.c.h.b16 %v5169
    %v5836 = vunpack.c.l.b16 %v5170
    %v5837 = vunpack.c.h.b16 %v5170
    %v5838 = vunpack.c.l.b16 %v5171
    %v5839 = vunpack.c.h.b16 %v5171
    %v5840 = vunpack.c.l.b16 %v5172
    %v5841 = vunpack.c.h.b16 %v5172
    %v5842 = vunpack.c.l.b16 %v5173
    %v5843 = vunpack.c.h.b16 %v5173
    %v5844 = vunpack.c.l.b16 %v5174
    %v5845 = vunpack.c.h.b16 %v5174
    %v5846 = vunpack.c.l.b16 %v5175
    %v5847 = vunpack.c.h.b16 %v5175
    %v5848 = vunpack.c.l.b16 %v5176
    %v5849 = vunpack.c.h.b16 %v5176
    %v5850 = vunpack.c.l.b16 %v5177
    %v5851 = vunpack.c.h.b16 %v5177
    %v5852 = vunpack.c.l.b16 %v5178
    %v5853 = vunpack.c.h.b16 %v5178
    %v5854 = vunpack.c.l.b16 %v5179
    %v5855 = vunpack.c.h.b16 %v5179
    %v5856 = vunpack.c.l.b16 %v5180
    %v5857 = vunpack.c.h.b16 %v5180
    %v5858 = vunpack.c.l.b16 %v5181
    %v5859 = vunpack.c.h.b16 %v5181
    %v5860 = vunpack.c.l.b16 %v5182
    %v5861 = vunpack.c.h.b16 %v5182
    %v5862 = vunpack.c.l.b16 %v5183
    %v5863 = vunpack.c.h.b16 %v5183
    %v5864 = vunpack.c.l.b16 %v5184
    %v5865 = vunpack.c.h.b16 %v5184
    %v5866 = vunpack.c.l.b16 %v5185
    %v5867 = vunpack.c.h.b16 %v5185
    %v5868 = vunpack.c.l.b16 %v5186
    %v5869 = vunpack.c.h.b16 %v5186
    %v5870 = vunpack.c.l.b16 %v5187
    %v5871 = vunpack.c.h.b16 %v5187
    %v5872 = vunpack.c.l.b16 %v5188
    %v5873 = vunpack.c.h.b16 %v5188
    %v5874 = vunpack.c.l.b16 %v5189
    %v5875 = vunpack.c.h.b16 %v5189
    %v5876 = vunpack.c.l.b16 %v5190
    %v5877 = vunpack.c.h.b16 %v5190
    %v5878 = vunpack.c.l.b16 %v5191
    %v5879 = vunpack.c.h.b16 %v5191
    %v5880 = vunpack.c.l.b16 %v5192
    %v5881 = vunpack.c.h.b16 %v5192
    %v5882 = vunpack.c.l.b16 %v5193
    %v5883 = vunpack.c.h.b16 %v5193
    %v5884 = vunpack.c.l.b16 %v5194
    %v5885 = vunpack.c.h.b16 %v5194
    %v5886 = vunpack.c.l.b16 %v5195
    %v5887 = vunpack.c.h.b16 %v5195
    %v5888 = vunpack.c.l.b16 %v5196
    %v5889 = vunpack.c.h.b16 %v5196
    %v5890 = vunpack.c.l.b16 %v5197
    %v5891 = vunpack.c.h.b16 %v5197
    %v5892 = vunpack.c.l.b16 %v5198
    %v5893 = vunpack.c.h.b16 %v5198
    %v5894 = vunpack.c.l.b16 %v5199
    %v5895 = vunpack.c.h.b16 %v5199
    %v5896 = vunpack.c.l.b16 %v5200
    %v5897 = vunpack.c.h.b16 %v5200
    %v5898 = vunpack.c.l.b16 %v5201
    %v5899 = vunpack.c.h.b16 %v5201
    %v5900 = vunpack.c.l.b16 %v5202
    %v5901 = vunpack.c.h.b16 %v5202
    %v5902 = vunpack.c.l.b16 %v5203
    %v5903 = vunpack.c.h.b16 %v5203
    %v5904 = vunpack.c.l.b16 %v5204
    %v5905 = vunpack.c.h.b16 %v5204
    %v5906 = vunpack.c.l.b16 %v5205
    %v5907 = vunpack.c.h.b16 %v5205
    %v5908 = vunpack.c.l.b16 %v5206
    %v5909 = vunpack.c.h.b16 %v5206
    %v5910 = vunpack.c.l.b16 %v5207
    %v5911 = vunpack.c.h.b16 %v5207
    %v5912 = vunpack.c.l.b16 %v5208
    %v5913 = vunpack.c.h.b16 %v5208
    %v5914 = vunpack.c.l.b16 %v5209
    %v5915 = vunpack.c.h.b16 %v5209
    %v5916 = vunpack.c.l.b16 %v5210
    %v5917 = vunpack.c.h.b16 %v5210
    %v5918 = vunpack.c.l.b16 %v5211
    %v5919 = vunpack.c.h.b16 %v5211
    %v5920 = vunpack.c.l.b16 %v5212
    %v5921 = vunpack.c.h.b16 %v5212
    %v5922 = vunpack.c.l.b16 %v5213
    %v5923 = vunpack.c.h.b16 %v5213
    %v5924 = vunpack.c.l.b16 %v5214
    %v5925 = vunpack.c.h.b16 %v5214
    %v5926 = vunpack.c.l.b16 %v5215
    %v5927 = vunpack.c.h.b16 %v5215
    %v5928 = vunpack.c.l.b16 %v5216
    %v5929 = vunpack.c.h.b16 %v5216
    %v5930 = vunpack.c.l.b16 %v5217
    %v5931 = vunpack.c.h.b16 %v5217
    %v5932 = vunpack.c.l.b16 %v5218
    %v5933 = vunpack.c.h.b16 %v5218
    %v5934 = vunpack.c.l.b16 %v5219
    %v5935 = vunpack.c.h.b16 %v5219
    %v5936 = vunpack.c.l.b16 %v5220
    %v5937 = vunpack.c.h.b16 %v5220
    %v5938 = vunpack.c.l.b16 %v5221
    %v5939 = vunpack.c.h.b16 %v5221
    %v5940 = vunpack.c.l.b16 %v5222
    %v5941 = vunpack.c.h.b16 %v5222
    %v5942 = vunpack.c.l.b16 %v5223
    %v5943 = vunpack.c.h.b16 %v5223
    %v5944 = vunpack.c.l.b16 %v5224
    %v5945 = vunpack.c.h.b16 %v5224
    %v5946 = vunpack.c.l.b16 %v5225
    %v5947 = vunpack.c.h.b16 %v5225
    %v5948 = vunpack.c.l.b16 %v5226
    %v5949 = vunpack.c.h.b16 %v5226
    %v5950 = vunpack.c.l.b16 %v5227
    %v5951 = vunpack.c.h.b16 %v5227
    %v5952 = vunpack.c.l.b16 %v5228
    %v5953 = vunpack.c.h.b16 %v5228
    %v5954 = vunpack.c.l.b16 %v5229
    %v5955 = vunpack.c.h.b16 %v5229
    %v5956 = vunpack.c.l.b16 %v5230
    %v5957 = vunpack.c.h.b16 %v5230
    %v5958 = vunpack.c.l.b16 %v5231
    %v5959 = vunpack.c.h.b16 %v5231
    %v5960 = vunpack.c.l.b16 %v5232
    %v5961 = vunpack.c.h.b16 %v5232
    %v5962 = vunpack.c.l.b16 %v5233
    %v5963 = vunpack.c.h.b16 %v5233
    %v5964 = vunpack.c.l.b16 %v5234
    %v5965 = vunpack.c.h.b16 %v5234
    %v5966 = vunpack.c.l.b16 %v5235
    %v5967 = vunpack.c.h.b16 %v5235
    %v5968 = vunpack.c.l.b16 %v5236
    %v5969 = vunpack.c.h.b16 %v5236
    %v5970 = vunpack.c.l.b16 %v5237
    %v5971 = vunpack.c.h.b16 %v5237
    %v5972 = vunpack.c.l.b16 %v5238
    %v5973 = vunpack.c.h.b16 %v5238
    %v5974 = vunpack.c.l.b16 %v5239
    %v5975 = vunpack.c.h.b16 %v5239
    %v5976 = vunpack.c.l.b16 %v5240
    %v5977 = vunpack.c.h.b16 %v5240
    %v5978 = vunpack.c.l.b16 %v5241
    %v5979 = vunpack.c.h.b16 %v5241
    %v5980 = vunpack.c.l.b16 %v5242
    %v5981 = vunpack.c.h.b16 %v5242
    %v5982 = vunpack.c.l.b16 %v5243
    %v5983 = vunpack.c.h.b16 %v5243
    %v5984 = vunpack.c.l.b16 %v5244
    %v5985 = vunpack.c.h.b16 %v5244
    %v5986 = vunpack.c.l.b16 %v5245
    %v5987 = vunpack.c.h.b16 %v5245
    %v5988 = vunpack.c.l.b16 %v5246
    %v5989 = vunpack.c.h.b16 %v5246
    %v5990 = vunpack.c.l.b16 %v5247
    %v5991 = vunpack.c.h.b16 %v5247
    %v5992 = vunpack.c.l.b16 %v5248
    %v5993 = vunpack.c.h.b16 %v5248
    %v5994 = vunpack.c.l.b16 %v5249
    %v5995 = vunpack.c.h.b16 %v5249
    %v5996 = vunpack.c.l.b16 %v5250
    %v5997 = vunpack.c.h.b16 %v5250
    %v5998 = vunpack.c.l.b16 %v5251
    %v5999 = vunpack.c.h.b16 %v5251
    %v6000 = vunpack.c.l.b16 %v5252
    %v6001 = vunpack.c.h.b16 %v5252
    %v6002 = vunpack.c.l.b16 %v5253
    %v6003 = vunpack.c.h.b16 %v5253
    %v6004 = vunpack.c.l.b16 %v5254
    %v6005 = vunpack.c.h.b16 %v5254
    %v6006 = vunpack.c.l.b16 %v5255
    %v6007 = vunpack.c.h.b16 %v5255
    %v6008 = vunpack.c.l.b16 %v5256
    %v6009 = vunpack.c.h.b16 %v5256
    %v6010 = vunpack.c.l.b16 %v5257
    %v6011 = vunpack.c.h.b16 %v5257
    %v6012 = vunpack.c.l.b16 %v5258
    %v6013 = vunpack.c.h.b16 %v5258
    %v6014 = vunpack.c.l.b16 %v5259
    %v6015 = vunpack.c.h.b16 %v5259
    %v6016 = vunpack.c.l.b16 %v5260
    %v6017 = vunpack.c.h.b16 %v5260
    %v6018 = vunpack.c.l.b16 %v5261
    %v6019 = vunpack.c.h.b16 %v5261
    %v6020 = vunpack.c.l.b16 %v5262
    %v6021 = vunpack.c.h.b16 %v5262
    %v6022 = vunpack.c.l.b16 %v5263
    %v6023 = vunpack.c.h.b16 %v5263
    %v6024 = vunpack.c.l.b16 %v5264
    %v6025 = vunpack.c.h.b16 %v5264
    %v6026 = vunpack.c.l.b16 %v5265
    %v6027 = vunpack.c.h.b16 %v5265
    %v6028 = vunpack.c.l.b16 %v5266
    %v6029 = vunpack.c.h.b16 %v5266
    %v6030 = vunpack.c.l.b16 %v5267
    %v6031 = vunpack.c.h.b16 %v5267
    %v6032 = vunpack.c.l.b16 %v5268
    %v6033 = vunpack.c.h.b16 %v5268
    %v6034 = vunpack.c.l.b16 %v5269
    %v6035 = vunpack.c.h.b16 %v5269
    %v6036 = vunpack.c.l.b16 %v5270
    %v6037 = vunpack.c.h.b16 %v5270
    %v6038 = vunpack.c.l.b16 %v5271
    %v6039 = vunpack.c.h.b16 %v5271
    %v6040 = vunpack.c.l.b16 %v5272
    %v6041 = vunpack.c.h.b16 %v5272
    %v6042 = vunpack.c.l.b16 %v5273
    %v6043 = vunpack.c.h.b16 %v5273
    %v6044 = vunpack.c.l.b16 %v5274
    %v6045 = vunpack.c.h.b16 %v5274
    %v6046 = vunpack.c.l.b16 %v5275
    %v6047 = vunpack.c.h.b16 %v5275
    %v6048 = vunpack.c.l.b16 %v5276
    %v6049 = vunpack.c.h.b16 %v5276
    %v6050 = vunpack.c.l.b16 %v5277
    %v6051 = vunpack.c.h.b16 %v5277
    %v6052 = vunpack.c.l.b16 %v5278
    %v6053 = vunpack.c.h.b16 %v5278
    %v6054 = vunpack.c.l.b16 %v5279
    %v6055 = vunpack.c.h.b16 %v5279
    %v6056 = vunpack.c.l.b16 %v5280
    %v6057 = vunpack.c.h.b16 %v5280
    %v6058 = vunpack.c.l.b16 %v5281
    %v6059 = vunpack.c.h.b16 %v5281
    %v6060 = vunpack.c.l.b16 %v5282
    %v6061 = vunpack.c.h.b16 %v5282
    %v6062 = vunpack.c.l.b16 %v5283
    %v6063 = vunpack.c.h.b16 %v5283
    %v6064 = vunpack.c.l.b16 %v5284
    %v6065 = vunpack.c.h.b16 %v5284
    %v6066 = vunpack.c.l.b16 %v5285
    %v6067 = vunpack.c.h.b16 %v5285
    %v6068 = vunpack.c.l.b16 %v5286
    %v6069 = vunpack.c.h.b16 %v5286
    %v6070 = vunpack.c.l.b16 %v5287
    %v6071 = vunpack.c.h.b16 %v5287
    %v6072 = vunpack.c.l.b16 %v5288
    %v6073 = vunpack.c.h.b16 %v5288
    %v6074 = vunpack.c.l.b16 %v5289
    %v6075 = vunpack.c.h.b16 %v5289
    %v6076 = vunpack.c.l.b16 %v5290
    %v6077 = vunpack.c.h.b16 %v5290
    %v6078 = vunpack.c.l.b16 %v5291
    %v6079 = vunpack.c.h.b16 %v5291
    %v6080 = vunpack.c.l.b16 %v5292
    %v6081 = vunpack.c.h.b16 %v5292
    %v6082 = vunpack.c.l.b16 %v5293
    %v6083 = vunpack.c.h.b16 %v5293
    %v6084 = vunpack.c.l.b16 %v5294
    %v6085 = vunpack.c.h.b16 %v5294
    %v6086 = vunpack.c.l.b16 %v5295
    %v6087 = vunpack.c.h.b16 %v5295
    %v6088 = vunpack.c.l.b16 %v5296
    %v6089 = vunpack.c.h.b16 %v5296
    %v6090 = vunpack.c.l.b16 %v5297
    %v6091 = vunpack.c.h.b16 %v5297
    %v6092 = vunpack.c.l.b16 %v5298
    %v6093 = vunpack.c.h.b16 %v5298
    %v6094 = vunpack.c.l.b16 %v5299
    %v6095 = vunpack.c.h.b16 %v5299
    %v6096 = vunpack.c.l.b16 %v5300
    %v6097 = vunpack.c.h.b16 %v5300
    %v6098 = vunpack.c.l.b16 %v5301
    %v6099 = vunpack.c.h.b16 %v5301
    %v6100 = vunpack.c.l.b16 %v5302
    %v6101 = vunpack.c.h.b16 %v5302
    %v6102 = vunpack.c.l.b16 %v5303
    %v6103 = vunpack.c.h.b16 %v5303
    %v6104 = vunpack.c.l.b16 %v5304
    %v6105 = vunpack.c.h.b16 %v5304
    %v6106 = vunpack.c.l.b16 %v5305
    %v6107 = vunpack.c.h.b16 %v5305
    %v6108 = vunpack.c.l.b16 %v5306
    %v6109 = vunpack.c.h.b16 %v5306
    %v6110 = vunpack.c.l.b16 %v5307
    %v6111 = vunpack.c.h.b16 %v5307
    %v6112 = vunpack.c.l.b16 %v5308
    %v6113 = vunpack.c.h.b16 %v5308
    %v6114 = vunpack.c.l.b16 %v5309
    %v6115 = vunpack.c.h.b16 %v5309
    %v6116 = vunpack.c.l.b16 %v5310
    %v6117 = vunpack.c.h.b16 %v5310
    %v6118 = vunpack.c.l.b16 %v5311
    %v6119 = vunpack.c.h.b16 %v5311
    %v6120 = vunpack.c.l.b16 %v5312
    %v6121 = vunpack.c.h.b16 %v5312
    %v6122 = vunpack.c.l.b16 %v5313
    %v6123 = vunpack.c.h.b16 %v5313
    %v6124 = vunpack.c.l.b16 %v5314
    %v6125 = vunpack.c.h.b16 %v5314
    %v6126 = vunpack.c.l.b16 %v5315
    %v6127 = vunpack.c.h.b16 %v5315
    %v6128 = vunpack.c.l.b16 %v5316
    %v6129 = vunpack.c.h.b16 %v5316
    %v6130 = vunpack.c.l.b16 %v5317
    %v6131 = vunpack.c.h.b16 %v5317
    %v6132 = vunpack.c.l.b16 %v5318
    %v6133 = vunpack.c.h.b16 %v5318
    %v6134 = vunpack.c.l.b16 %v5319
    %v6135 = vunpack.c.h.b16 %v5319
    %v6136 = vunpack.c.l.b16 %v5320
    %v6137 = vunpack.c.h.b16 %v5320
    %v6138 = vunpack.c.l.b16 %v5321
    %v6139 = vunpack.c.h.b16 %v5321
    %v6140 = vunpack.c.l.b16 %v5322
    %v6141 = vunpack.c.h.b16 %v5322
    %v6142 = vunpack.c.l.b16 %v5323
    %v6143 = vunpack.c.h.b16 %v5323
    %v6144 = vunpack.c.l.b16 %v5324
    %v6145 = vunpack.c.h.b16 %v5324
    %v6146 = vunpack.c.l.b16 %v5325
    %v6147 = vunpack.c.h.b16 %v5325
    %v6148 = vunpack.c.l.b16 %v5326
    %v6149 = vunpack.c.h.b16 %v5326
    %v6150 = vunpack.c.l.b16 %v5327
    %v6151 = vunpack.c.h.b16 %v5327
    %v6152 = vunpack.c.l.b16 %v5328
    %v6153 = vunpack.c.h.b16 %v5328
    %v6154 = vunpack.c.l.b16 %v5329
    %v6155 = vunpack.c.h.b16 %v5329
    %v6156 = vunpack.c.l.b16 %v5330
    %v6157 = vunpack.c.h.b16 %v5330
    %v6158 = vunpack.c.l.b16 %v5331
    %v6159 = vunpack.c.h.b16 %v5331
    %v6160 = vunpack.c.l.b16 %v5332
    %v6161 = vunpack.c.h.b16 %v5332
    %v6162 = vunpack.c.l.b16 %v5333
    %v6163 = vunpack.c.h.b16 %v5333
    %v6164 = vunpack.c.l.b16 %v5334
    %v6165 = vunpack.c.h.b16 %v5334
    %v6166 = vunpack.c.l.b16 %v5335
    %v6167 = vunpack.c.h.b16 %v5335
    %v6168 = vunpack.c.l.b16 %v5336
    %v6169 = vunpack.c.h.b16 %v5336
    %v6170 = vunpack.c.l.b16 %v5337
    %v6171 = vunpack.c.h.b16 %v5337
    %v6172 = vunpack.c.l.b16 %v5338
    %v6173 = vunpack.c.h.b16 %v5338
    %v6174 = vunpack.c.l.b16 %v5339
    %v6175 = vunpack.c.h.b16 %v5339
    %v6176 = vunpack.c.l.b16 %v5340
    %v6177 = vunpack.c.h.b16 %v5340
    %v6178 = vunpack.c.l.b16 %v5341
    %v6179 = vunpack.c.h.b16 %v5341
    %v6180 = vunpack.c.l.b16 %v5342
    %v6181 = vunpack.c.h.b16 %v5342
    %v6182 = vunpack.c.l.b16 %v5343
    %v6183 = vunpack.c.h.b16 %v5343
    %v6184 = vunpack.c.l.b16 %v5344
    %v6185 = vunpack.c.h.b16 %v5344
    %v6186 = vunpack.c.l.b16 %v5345
    %v6187 = vunpack.c.h.b16 %v5345
    %v6188 = vunpack.c.l.b16 %v5346
    %v6189 = vunpack.c.h.b16 %v5346
    %v6190 = vunpack.c.l.b16 %v5347
    %v6191 = vunpack.c.h.b16 %v5347
    %v6192 = vunpack.c.l.b16 %v5348
    %v6193 = vunpack.c.h.b16 %v5348
    %v6194 = vunpack.c.l.b16 %v5349
    %v6195 = vunpack.c.h.b16 %v5349
    %v6196 = vunpack.c.l.b16 %v5350
    %v6197 = vunpack.c.h.b16 %v5350
    %v6198 = vunpack.c.l.b16 %v5351
    %v6199 = vunpack.c.h.b16 %v5351
    %v6200 = vunpack.c.l.b16 %v5352
    %v6201 = vunpack.c.h.b16 %v5352
    %v6202 = vunpack.c.l.b16 %v5353
    %v6203 = vunpack.c.h.b16 %v5353
    %v6204 = vunpack.c.l.b16 %v5354
    %v6205 = vunpack.c.h.b16 %v5354
    %v6206 = vunpack.c.l.b16 %v5355
    %v6207 = vunpack.c.h.b16 %v5355
    %v6208 = vunpack.c.l.b16 %v5356
    %v6209 = vunpack.c.h.b16 %v5356
    %v6210 = vunpack.c.l.b16 %v5357
    %v6211 = vunpack.c.h.b16 %v5357
    %v6212 = vunpack.c.l.b16 %v5358
    %v6213 = vunpack.c.h.b16 %v5358
    %v6214 = vunpack.c.l.b16 %v5359
    %v6215 = vunpack.c.h.b16 %v5359
    %v6216 = vunpack.c.l.b16 %v5360
    %v6217 = vunpack.c.h.b16 %v5360
    %v6218 = vunpack.c.l.b16 %v5361
    %v6219 = vunpack.c.h.b16 %v5361
    %v6220 = vunpack.c.l.b16 %v5362
    %v6221 = vunpack.c.h.b16 %v5362
    %v6222 = vunpack.c.l.b16 %v5363
    %v6223 = vunpack.c.h.b16 %v5363
    %v6224 = vunpack.c.l.b16 %v5364
    %v6225 = vunpack.c.h.b16 %v5364
    %v6226 = vunpack.c.l.b16 %v5365
    %v6227 = vunpack.c.h.b16 %v5365
    %v6228 = vunpack.c.l.b16 %v5366
    %v6229 = vunpack.c.h.b16 %v5366
    %v6230 = vunpack.c.l.b16 %v5367
    %v6231 = vunpack.c.h.b16 %v5367
    %v6232 = vpack.c.b16 %v5662, %v5656
    %v6233 = vpack.c.b16 %v5663, %v5657
    %v6234 = vpack.c.b16 %v5664, %v5658
    %v6235 = vpack.c.b16 %v5665, %v5659
    %v6236 = vpack.c.b16 %v5666, %v5660
    %v6237 = vpack.c.b16 %v5667, %v5661
    %v6238 = vpack.c.b16 %v5674, %v5668
    %v6239 = vpack.c.b16 %v5675, %v5669
    %v6240 = vpack.c.b16 %v5676, %v5670
    %v6241 = vpack.c.b16 %v5677, %v5671
    %v6242 = vpack.c.b16 %v5678, %v5672
    %v6243 = vpack.c.b16 %v5679, %v5673
    %v6244 = vpack.c.b16 %v5686, %v5680
    %v6245 = vpack.c.b16 %v5687, %v5681
    %v6246 = vpack.c.b16 %v5688, %v5682
    %v6247 = vpack.c.b16 %v5689, %v5683
    %v6248 = vpack.c.b16 %v5690, %v5684
    %v6249 = vpack.c.b16 %v5691, %v5685
    %v6250 = vpack.c.b16 %v5698, %v5692
    %v6251 = vpack.c.b16 %v5699, %v5693
    %v6252 = vpack.c.b16 %v5700, %v5694
    %v6253 = vpack.c.b16 %v5701, %v5695
    %v6254 = vpack.c.b16 %v5702, %v5696
    %v6255 = vpack.c.b16 %v5703, %v5697
    %v6256 = vpack.c.b16 %v5710, %v5704
    %v6257 = vpack.c.b16 %v5711, %v5705
    %v6258 = vpack.c.b16 %v5712, %v5706
    %v6259 = vpack.c.b16 %v5713, %v5707
    %v6260 = vpack.c.b16 %v5714, %v5708
    %v6261 = vpack.c.b16 %v5715, %v5709
    %v6262 = vpack.c.b16 %v5722, %v5716
    %v6263 = vpack.c.b16 %v5723, %v5717
    %v6264 = vpack.c.b16 %v5724, %v5718
    %v6265 = vpack.c.b16 %v5725, %v5719
    %v6266 = vpack.c.b16 %v5726, %v5720
    %v6267 = vpack.c.b16 %v5727, %v5721
    %v6268 = vpack.c.b16 %v5734, %v5728
    %v6269 = vpack.c.b16 %v5735, %v5729
    %v6270 = vpack.c.b16 %v5736, %v5730
    %v6271 = vpack.c.b16 %v5737, %v5731
    %v6272 = vpack.c.b16 %v5738, %v5732
    %v6273 = vpack.c.b16 %v5739, %v5733
    %v6274 = vpack.c.b16 %v5746, %v5740
    %v6275 = vpack.c.b16 %v5747, %v5741
    %v6276 = vpack.c.b16 %v5748, %v5742
    %v6277 = vpack.c.b16 %v5749, %v5743
    %v6278 = vpack.c.b16 %v5750, %v5744
    %v6279 = vpack.c.b16 %v5751, %v5745
    %v6280 = vpack.c.b16 %v5758, %v5752
    %v6281 = vpack.c.b16 %v5759, %v5753
    %v6282 = vpack.c.b16 %v5760, %v5754
    %v6283 = vpack.c.b16 %v5761, %v5755
    %v6284 = vpack.c.b16 %v5762, %v5756
    %v6285 = vpack.c.b16 %v5763, %v5757
    %v6286 = vpack.c.b16 %v5770, %v5764
    %v6287 = vpack.c.b16 %v5771, %v5765
    %v6288 = vpack.c.b16 %v5772, %v5766
    %v6289 = vpack.c.b16 %v5773, %v5767
    %v6290 = vpack.c.b16 %v5774, %v5768
    %v6291 = vpack.c.b16 %v5775, %v5769
    %v6292 = vpack.c.b16 %v5782, %v5776
    %v6293 = vpack.c.b16 %v5783, %v5777
    %v6294 = vpack.c.b16 %v5784, %v5778
    %v6295 = vpack.c.b16 %v5785, %v5779
    %v6296 = vpack.c.b16 %v5786, %v5780
    %v6297 = vpack.c.b16 %v5787, %v5781
    %v6298 = vpack.c.b16 %v5794, %v5788
    %v6299 = vpack.c.b16 %v5795, %v5789
    %v6300 = vpack.c.b16 %v5796, %v5790
    %v6301 = vpack.c.b16 %v5797, %v5791
    %v6302 = vpack.c.b16 %v5798, %v5792
    %v6303 = vpack.c.b16 %v5799, %v5793
    %v6304 = vpack.c.b16 %v5806, %v5800
    %v6305 = vpack.c.b16 %v5807, %v5801
    %v6306 = vpack.c.b16 %v5808, %v5802
    %v6307 = vpack.c.b16 %v5809, %v5803
    %v6308 = vpack.c.b16 %v5810, %v5804
    %v6309 = vpack.c.b16 %v5811, %v5805
    %v6310 = vpack.c.b16 %v5818, %v5812
    %v6311 = vpack.c.b16 %v5819, %v5813
    %v6312 = vpack.c.b16 %v5820, %v5814
    %v6313 = vpack.c.b16 %v5821, %v5815
    %v6314 = vpack.c.b16 %v5822, %v5816
    %v6315 = vpack.c.b16 %v5823, %v5817
    %v6316 = vpack.c.b16 %v5830, %v5824
    %v6317 = vpack.c.b16 %v5831, %v5825
    %v6318 = vpack.c.b16 %v5832, %v5826
    %v6319 = vpack.c.b16 %v5833, %v5827
    %v6320 = vpack.c.b16 %v5834, %v5828
    %v6321 = vpack.c.b16 %v5835, %v5829
    %v6322 = vpack.c.b16 %v5842, %v5836
    %v6323 = vpack.c.b16 %v5843, %v5837
    %v6324 = vpack.c.b16 %v5844, %v5838
    %v6325 = vpack.c.b16 %v5845, %v5839
    %v6326 = vpack.c.b16 %v5846, %v5840
    %v6327 = vpack.c.b16 %v5847, %v5841
    %v6328 = vpack.c.b16 %v5854, %v5848
    %v6329 = vpack.c.b16 %v5855, %v5849
    %v6330 = vpack.c.b16 %v5856, %v5850
    %v6331 = vpack.c.b16 %v5857, %v5851
    %v6332 = vpack.c.b16 %v5858, %v5852
    %v6333 = vpack.c.b16 %v5859, %v5853
    %v6334 = vpack.c.b16 %v5866, %v5860
    %v6335 = vpack.c.b16 %v5867, %v5861
    %v6336 = vpack.c.b16 %v5868, %v5862
    %v6337 = vpack.c.b16 %v5869, %v5863
    %v6338 = vpack.c.b16 %v5870, %v5864
    %v6339 = vpack.c.b16 %v5871, %v5865
    %v6340 = vpack.c.b16 %v5878, %v5872
    %v6341 = vpack.c.b16 %v5879, %v5873
    %v6342 = vpack.c.b16 %v5880, %v5874
    %v6343 = vpack.c.b16 %v5881, %v5875
    %v6344 = vpack.c.b16 %v5882, %v5876
    %v6345 = vpack.c.b16 %v5883, %v5877
    %v6346 = vpack.c.b16 %v5890, %v5884
    %v6347 = vpack.c.b16 %v5891, %v5885
    %v6348 = vpack.c.b16 %v5892, %v5886
    %v6349 = vpack.c.b16 %v5893, %v5887
    %v6350 = vpack.c.b16 %v5894, %v5888
    %v6351 = vpack.c.b16 %v5895, %v5889
    %v6352 = vpack.c.b16 %v5902, %v5896
    %v6353 = vpack.c.b16 %v5903, %v5897
    %v6354 = vpack.c.b16 %v5904, %v5898
    %v6355 = vpack.c.b16 %v5905, %v5899
    %v6356 = vpack.c.b16 %v5906, %v5900
    %v6357 = vpack.c.b16 %v5907, %v5901
    %v6358 = vpack.c.b16 %v5914, %v5908
    %v6359 = vpack.c.b16 %v5915, %v5909
    %v6360 = vpack.c.b16 %v5916, %v5910
    %v6361 = vpack.c.b16 %v5917, %v5911
    %v6362 = vpack.c.b16 %v5918, %v5912
    %v6363 = vpack.c.b16 %v5919, %v5913
    %v6364 = vpack.c.b16 %v5926, %v5920
    %v6365 = vpack.c.b16 %v5927, %v5921
    %v6366 = vpack.c.b16 %v5928, %v5922
    %v6367 = vpack.c.b16 %v5929, %v5923
    %v6368 = vpack.c.b16 %v5930, %v5924
    %v6369 = vpack.c.b16 %v5931, %v5925
    %v6370 = vpack.c.b16 %v5938, %v5932
    %v6371 = vpack.c.b16 %v5939, %v5933
    %v6372 = vpack.c.b16 %v5940, %v5934
    %v6373 = vpack.c.b16 %v5941, %v5935
    %v6374 = vpack.c.b16 %v5942, %v5936
    %v6375 = vpack.c.b16 %v5943, %v5937
    %v6376 = vpack.c.b16 %v5950, %v5944
    %v6377 = vpack.c.b16 %v5951, %v5945
    %v6378 = vpack.c.b16 %v5952, %v5946
    %v6379 = vpack.c.b16 %v5953, %v5947
    %v6380 = vpack.c.b16 %v5954, %v5948
    %v6381 = vpack.c.b16 %v5955, %v5949
    %v6382 = vpack.c.b16 %v5962, %v5956
    %v6383 = vpack.c.b16 %v5963, %v5957
    %v6384 = vpack.c.b16 %v5964, %v5958
    %v6385 = vpack.c.b16 %v5965, %v5959
    %v6386 = vpack.c.b16 %v5966, %v5960
    %v6387 = vpack.c.b16 %v5967, %v5961
    %v6388 = vpack.c.b16 %v5974, %v5968
    %v6389 = vpack.c.b16 %v5975, %v5969
    %v6390 = vpack.c.b16 %v5976, %v5970
    %v6391 = vpack.c.b16 %v5977, %v5971
    %v6392 = vpack.c.b16 %v5978, %v5972
    %v6393 = vpack.c.b16 %v5979, %v5973
    %v6394 = vpack.c.b16 %v5986, %v5980
    %v6395 = vpack.c.b16 %v5987, %v5981
    %v6396 = vpack.c.b16 %v5988, %v5982
    %v6397 = vpack.c.b16 %v5989, %v5983
    %v6398 = vpack.c.b16 %v5990, %v5984
    %v6399 = vpack.c.b16 %v5991, %v5985
    %v6400 = vpack.c.b16 %v5998, %v5992
    %v6401 = vpack.c.b16 %v5999, %v5993
    %v6402 = vpack.c.b16 %v6000, %v5994
    %v6403 = vpack.c.b16 %v6001, %v5995
    %v6404 = vpack.c.b16 %v6002, %v5996
    %v6405 = vpack.c.b16 %v6003, %v5997
    %v6406 = vpack.c.b16 %v6010, %v6004
    %v6407 = vpack.c.b16 %v6011, %v6005
    %v6408 = vpack.c.b16 %v6012, %v6006
    %v6409 = vpack.c.b16 %v6013, %v6007
    %v6410 = vpack.c.b16 %v6014, %v6008
    %v6411 = vpack.c.b16 %v6015, %v6009
    %v6412 = vpack.c.b16 %v6022, %v6016
    %v6413 = vpack.c.b16 %v6023, %v6017
    %v6414 = vpack.c.b16 %v6024, %v6018
    %v6415 = vpack.c.b16 %v6025, %v6019
    %v6416 = vpack.c.b16 %v6026, %v6020
    %v6417 = vpack.c.b16 %v6027, %v6021
    %v6418 = vpack.c.b16 %v6034, %v6028
    %v6419 = vpack.c.b16 %v6035, %v6029
    %v6420 = vpack.c.b16 %v6036, %v6030
    %v6421 = vpack.c.b16 %v6037, %v6031
    %v6422 = vpack.c.b16 %v6038, %v6032
    %v6423 = vpack.c.b16 %v6039, %v6033
    %v6424 = vpack.c.b16 %v6046, %v6040
    %v6425 = vpack.c.b16 %v6047, %v6041
    %v6426 = vpack.c.b16 %v6048, %v6042
    %v6427 = vpack.c.b16 %v6049, %v6043
    %v6428 = vpack.c.b16 %v6050, %v6044
    %v6429 = vpack.c.b16 %v6051, %v6045
    %v6430 = vpack.c.b16 %v6058, %v6052
    %v6431 = vpack.c.b16 %v6059, %v6053
    %v6432 = vpack.c.b16 %v6060, %v6054
    %v6433 = vpack.c.b16 %v6061, %v6055
    %v6434 = vpack.c.b16 %v6062, %v6056
    %v6435 = vpack.c.b16 %v6063, %v6057
    %v6436 = vpack.c.b16 %v6070, %v6064
    %v6437 = vpack.c.b16 %v6071, %v6065
    %v6438 = vpack.c.b16 %v6072, %v6066
    %v6439 = vpack.c.b16 %v6073, %v6067
    %v6440 = vpack.c.b16 %v6074, %v6068
    %v6441 = vpack.c.b16 %v6075, %v6069
    %v6442 = vpack.c.b16 %v6082, %v6076
    %v6443 = vpack.c.b16 %v6083, %v6077
    %v6444 = vpack.c.b16 %v6084, %v6078
    %v6445 = vpack.c.b16 %v6085, %v6079
    %v6446 = vpack.c.b16 %v6086, %v6080
    %v6447 = vpack.c.b16 %v6087, %v6081
    %v6448 = vpack.c.b16 %v6094, %v6088
    %v6449 = vpack.c.b16 %v6095, %v6089
    %v6450 = vpack.c.b16 %v6096, %v6090
    %v6451 = vpack.c.b16 %v6097, %v6091
    %v6452 = vpack.c.b16 %v6098, %v6092
    %v6453 = vpack.c.b16 %v6099, %v6093
    %v6454 = vpack.c.b16 %v6106, %v6100
    %v6455 = vpack.c.b16 %v6107, %v6101
    %v6456 = vpack.c.b16 %v6108, %v6102
    %v6457 = vpack.c.b16 %v6109, %v6103
    %v6458 = vpack.c.b16 %v6110, %v6104
    %v6459 = vpack.c.b16 %v6111, %v6105
    %v6460 = vpack.c.b16 %v6118, %v6112
    %v6461 = vpack.c.b16 %v6119, %v6113
    %v6462 = vpack.c.b16 %v6120, %v6114
    %v6463 = vpack.c.b16 %v6121, %v6115
    %v6464 = vpack.c.b16 %v6122, %v6116
    %v6465 = vpack.c.b16 %v6123, %v6117
    %v6466 = vpack.c.b16 %v6130, %v6124
    %v6467 = vpack.c.b16 %v6131, %v6125
    %v6468 = vpack.c.b16 %v6132, %v6126
    %v6469 = vpack.c.b16 %v6133, %v6127
    %v6470 = vpack.c.b16 %v6134, %v6128
    %v6471 = vpack.c.b16 %v6135, %v6129
    %v6472 = vpack.c.b16 %v6142, %v6136
    %v6473 = vpack.c.b16 %v6143, %v6137
    %v6474 = vpack.c.b16 %v6144, %v6138
    %v6475 = vpack.c.b16 %v6145, %v6139
    %v6476 = vpack.c.b16 %v6146, %v6140
    %v6477 = vpack.c.b16 %v6147, %v6141
    %v6478 = vpack.c.b16 %v6154, %v6148
    %v6479 = vpack.c.b16 %v6155, %v6149
    %v6480 = vpack.c.b16 %v6156, %v6150
    %v6481 = vpack.c.b16 %v6157, %v6151
    %v6482 = vpack.c.b16 %v6158, %v6152
    %v6483 = vpack.c.b16 %v6159, %v6153
    %v6484 = vpack.c.b16 %v6166, %v6160
    %v6485 = vpack.c.b16 %v6167, %v6161
    %v6486 = vpack.c.b16 %v6168, %v6162
    %v6487 = vpack.c.b16 %v6169, %v6163
    %v6488 = vpack.c.b16 %v6170, %v6164
    %v6489 = vpack.c.b16 %v6171, %v6165
    %v6490 = vpack.c.b16 %v6178, %v6172
    %v6491 = vpack.c.b16 %v6179, %v6173
    %v6492 = vpack.c.b16 %v6180, %v6174
    %v6493 = vpack.c.b16 %v6181, %v6175
    %v6494 = vpack.c.b16 %v6182, %v6176
    %v6495 = vpack.c.b16 %v6183, %v6177
    %v6496 = vpack.c.b16 %v6190, %v6184
    %v6497 = vpack.c.b16 %v6191, %v6185
    %v6498 = vpack.c.b16 %v6192, %v6186
    %v6499 = vpack.c.b16 %v6193, %v6187
    %v6500 = vpack.c.b16 %v6194, %v6188
    %v6501 = vpack.c.b16 %v6195, %v6189
    %v6502 = vpack.c.b16 %v6202, %v6196
    %v6503 = vpack.c.b16 %v6203, %v6197
    %v6504 = vpack.c.b16 %v6204, %v6198
    %v6505 = vpack.c.b16 %v6205, %v6199
    %v6506 = vpack.c.b16 %v6206, %v6200
    %v6507 = vpack.c.b16 %v6207, %v6201
    %v6508 = vpack.c.b16 %v6214, %v6208
    %v6509 = vpack.c.b16 %v6215, %v6209
    %v6510 = vpack.c.b16 %v6216, %v6210
    %v6511 = vpack.c.b16 %v6217, %v6211
    %v6512 = vpack.c.b16 %v6218, %v6212
    %v6513 = vpack.c.b16 %v6219, %v6213
    %v6514 = vpack.c.b16 %v6226, %v6220
    %v6515 = vpack.c.b16 %v6227, %v6221
    %v6516 = vpack.c.b16 %v6228, %v6222
    %v6517 = vpack.c.b16 %v6229, %v6223
    %v6518 = vpack.c.b16 %v6230, %v6224
    %v6519 = vpack.c.b16 %v6231, %v6225
    %6808 = vmatpush.bf16.msra.mxu0 %v6274
    %6809 = vmatpush.bf16.msra.mxu0 %v6268
    %6810 = vmatpush.bf16.msra.mxu0 %v6262
    %6811 = vmatpush.bf16.msra.mxu0 %v6256
    %6812 = vmatpush.bf16.msra.mxu0 %v6250
    %6813 = vmatpush.bf16.msra.mxu0 %v6244
    %6814 = vmatpush.bf16.msra.mxu0 %v6238
    %6815 = vmatpush.bf16.msra.mxu0 %v6232
    %6816 = vmatmul.bf16.gmra.mxu0 %v682
    %v6817 = vpop.f32.mrf.mxu0
    %v6818 = vadd.f32 0.0, %v6817
    %v6819 = vpop.f32.mrf.mxu0
    %6820 = vdwg.mxu0
    %6821 = vmatpush.bf16.msra.mxu0 %v6322
    %6822 = vmatpush.bf16.msra.mxu0 %v6316
    %6823 = vmatpush.bf16.msra.mxu0 %v6310
    %6824 = vmatpush.bf16.msra.mxu0 %v6304
    %6825 = vmatpush.bf16.msra.mxu0 %v6298
    %6826 = vmatpush.bf16.msra.mxu0 %v6292
    %6827 = vmatpush.bf16.msra.mxu0 %v6286
    %6828 = vmatpush.bf16.msra.mxu0 %v6280
    %6829 = vmatmul.bf16.gmra.mxu0 %v683
    %v6830 = vpop.f32.mrf.mxu0
    %v6831 = vadd.f32 %v6818, %v6830
    %v6832 = vpop.f32.mrf.mxu0
    %6833 = vdwg.mxu0
    %6834 = vmatpush.bf16.msra.mxu0 %v6370
    %6835 = vmatpush.bf16.msra.mxu0 %v6364
    %6836 = vmatpush.bf16.msra.mxu0 %v6358
    %6837 = vmatpush.bf16.msra.mxu0 %v6352
    %6838 = vmatpush.bf16.msra.mxu0 %v6346
    %6839 = vmatpush.bf16.msra.mxu0 %v6340
    %6840 = vmatpush.bf16.msra.mxu0 %v6334
    %6841 = vmatpush.bf16.msra.mxu0 %v6328
    %6842 = vmatmul.bf16.gmra.mxu0 %v684
    %v6843 = vpop.f32.mrf.mxu0
    %v6844 = vadd.f32 %v6831, %v6843
    %v6845 = vpop.f32.mrf.mxu0
    %6846 = vdwg.mxu0
    %6847 = vmatpush.bf16.msra.mxu0 %v6418
    %6848 = vmatpush.bf16.msra.mxu0 %v6412
    %6849 = vmatpush.bf16.msra.mxu0 %v6406
    %6850 = vmatpush.bf16.msra.mxu0 %v6400
    %6851 = vmatpush.bf16.msra.mxu0 %v6394
    %6852 = vmatpush.bf16.msra.mxu0 %v6388
    %6853 = vmatpush.bf16.msra.mxu0 %v6382
    %6854 = vmatpush.bf16.msra.mxu0 %v6376
    %6855 = vmatmul.bf16.gmra.mxu0 %v685
    %v6856 = vpop.f32.mrf.mxu0
    %v6857 = vadd.f32 %v6844, %v6856
    %v6858 = vpop.f32.mrf.mxu0
    %6859 = vdwg.mxu0
    %6860 = vmatpush.bf16.msra.mxu0 %v6466
    %6861 = vmatpush.bf16.msra.mxu0 %v6460
    %6862 = vmatpush.bf16.msra.mxu0 %v6454
    %6863 = vmatpush.bf16.msra.mxu0 %v6448
    %6864 = vmatpush.bf16.msra.mxu0 %v6442
    %6865 = vmatpush.bf16.msra.mxu0 %v6436
    %6866 = vmatpush.bf16.msra.mxu0 %v6430
    %6867 = vmatpush.bf16.msra.mxu0 %v6424
    %6868 = vmatmul.bf16.gmra.mxu0 %v686
    %v6869 = vpop.f32.mrf.mxu0
    %v6870 = vadd.f32 %v6857, %v6869
    %v6871 = vpop.f32.mrf.mxu0
    %6872 = vdwg.mxu0
    %6873 = vmatpush.bf16.msra.mxu0 %v6514
    %6874 = vmatpush.bf16.msra.mxu0 %v6508
    %6875 = vmatpush.bf16.msra.mxu0 %v6502
    %6876 = vmatpush.bf16.msra.mxu0 %v6496
    %6877 = vmatpush.bf16.msra.mxu0 %v6490
    %6878 = vmatpush.bf16.msra.mxu0 %v6484
    %6879 = vmatpush.bf16.msra.mxu0 %v6478
    %6880 = vmatpush.bf16.msra.mxu0 %v6472
    %6881 = vmatmul.bf16.gmra.mxu0 %v687
    %v6882 = vpop.f32.mrf.mxu0
    %v6883 = vadd.f32 %v6870, %v6882
    %v6884 = vpop.f32.mrf.mxu0
    %6885 = vdwg.mxu0
    %6886 = vmatpush.bf16.msra.mxu0 %v6275
    %6887 = vmatpush.bf16.msra.mxu0 %v6269
    %6888 = vmatpush.bf16.msra.mxu0 %v6263
    %6889 = vmatpush.bf16.msra.mxu0 %v6257
    %6890 = vmatpush.bf16.msra.mxu0 %v6251
    %6891 = vmatpush.bf16.msra.mxu0 %v6245
    %6892 = vmatpush.bf16.msra.mxu0 %v6239
    %6893 = vmatpush.bf16.msra.mxu0 %v6233
    %6894 = vmatmul.bf16.gmra.mxu0 %v682
    %v6895 = vpop.f32.mrf.mxu0
    %v6896 = vadd.f32 0.0, %v6895
    %v6897 = vpop.f32.mrf.mxu0
    %6898 = vdwg.mxu0
    %6899 = vmatpush.bf16.msra.mxu0 %v6323
    %6900 = vmatpush.bf16.msra.mxu0 %v6317
    %6901 = vmatpush.bf16.msra.mxu0 %v6311
    %6902 = vmatpush.bf16.msra.mxu0 %v6305
    %6903 = vmatpush.bf16.msra.mxu0 %v6299
    %6904 = vmatpush.bf16.msra.mxu0 %v6293
    %6905 = vmatpush.bf16.msra.mxu0 %v6287
    %6906 = vmatpush.bf16.msra.mxu0 %v6281
    %6907 = vmatmul.bf16.gmra.mxu0 %v683
    %v6908 = vpop.f32.mrf.mxu0
    %v6909 = vadd.f32 %v6896, %v6908
    %v6910 = vpop.f32.mrf.mxu0
    %6911 = vdwg.mxu0
    %6912 = vmatpush.bf16.msra.mxu0 %v6371
    %6913 = vmatpush.bf16.msra.mxu0 %v6365
    %6914 = vmatpush.bf16.msra.mxu0 %v6359
    %6915 = vmatpush.bf16.msra.mxu0 %v6353
    %6916 = vmatpush.bf16.msra.mxu0 %v6347
    %6917 = vmatpush.bf16.msra.mxu0 %v6341
    %6918 = vmatpush.bf16.msra.mxu0 %v6335
    %6919 = vmatpush.bf16.msra.mxu0 %v6329
    %6920 = vmatmul.bf16.gmra.mxu0 %v684
    %v6921 = vpop.f32.mrf.mxu0
    %v6922 = vadd.f32 %v6909, %v6921
    %v6923 = vpop.f32.mrf.mxu0
    %6924 = vdwg.mxu0
    %6925 = vmatpush.bf16.msra.mxu0 %v6419
    %6926 = vmatpush.bf16.msra.mxu0 %v6413
    %6927 = vmatpush.bf16.msra.mxu0 %v6407
    %6928 = vmatpush.bf16.msra.mxu0 %v6401
    %6929 = vmatpush.bf16.msra.mxu0 %v6395
    %6930 = vmatpush.bf16.msra.mxu0 %v6389
    %6931 = vmatpush.bf16.msra.mxu0 %v6383
    %6932 = vmatpush.bf16.msra.mxu0 %v6377
    %6933 = vmatmul.bf16.gmra.mxu0 %v685
    %v6934 = vpop.f32.mrf.mxu0
    %v6935 = vadd.f32 %v6922, %v6934
    %v6936 = vpop.f32.mrf.mxu0
    %6937 = vdwg.mxu0
    %6938 = vmatpush.bf16.msra.mxu0 %v6467
    %6939 = vmatpush.bf16.msra.mxu0 %v6461
    %6940 = vmatpush.bf16.msra.mxu0 %v6455
    %6941 = vmatpush.bf16.msra.mxu0 %v6449
    %6942 = vmatpush.bf16.msra.mxu0 %v6443
    %6943 = vmatpush.bf16.msra.mxu0 %v6437
    %6944 = vmatpush.bf16.msra.mxu0 %v6431
    %6945 = vmatpush.bf16.msra.mxu0 %v6425
    %6946 = vmatmul.bf16.gmra.mxu0 %v686
    %v6947 = vpop.f32.mrf.mxu0
    %v6948 = vadd.f32 %v6935, %v6947
    %v6949 = vpop.f32.mrf.mxu0
    %6950 = vdwg.mxu0
    %6951 = vmatpush.bf16.msra.mxu0 %v6515
    %6952 = vmatpush.bf16.msra.mxu0 %v6509
    %6953 = vmatpush.bf16.msra.mxu0 %v6503
    %6954 = vmatpush.bf16.msra.mxu0 %v6497
    %6955 = vmatpush.bf16.msra.mxu0 %v6491
    %6956 = vmatpush.bf16.msra.mxu0 %v6485
    %6957 = vmatpush.bf16.msra.mxu0 %v6479
    %6958 = vmatpush.bf16.msra.mxu0 %v6473
    %6959 = vmatmul.bf16.gmra.mxu0 %v687
    %v6960 = vpop.f32.mrf.mxu0
    %v6961 = vadd.f32 %v6948, %v6960
    %v6962 = vpop.f32.mrf.mxu0
    %6963 = vdwg.mxu0
    %6964 = vmatpush.bf16.msra.mxu0 %v6276
    %6965 = vmatpush.bf16.msra.mxu0 %v6270
    %6966 = vmatpush.bf16.msra.mxu0 %v6264
    %6967 = vmatpush.bf16.msra.mxu0 %v6258
    %6968 = vmatpush.bf16.msra.mxu0 %v6252
    %6969 = vmatpush.bf16.msra.mxu0 %v6246
    %6970 = vmatpush.bf16.msra.mxu0 %v6240
    %6971 = vmatpush.bf16.msra.mxu0 %v6234
    %6972 = vmatmul.bf16.gmra.mxu0 %v682
    %v6973 = vpop.f32.mrf.mxu0
    %v6974 = vadd.f32 0.0, %v6973
    %v6975 = vpop.f32.mrf.mxu0
    %6976 = vdwg.mxu0
    %6977 = vmatpush.bf16.msra.mxu0 %v6324
    %6978 = vmatpush.bf16.msra.mxu0 %v6318
    %6979 = vmatpush.bf16.msra.mxu0 %v6312
    %6980 = vmatpush.bf16.msra.mxu0 %v6306
    %6981 = vmatpush.bf16.msra.mxu0 %v6300
    %6982 = vmatpush.bf16.msra.mxu0 %v6294
    %6983 = vmatpush.bf16.msra.mxu0 %v6288
    %6984 = vmatpush.bf16.msra.mxu0 %v6282
    %6985 = vmatmul.bf16.gmra.mxu0 %v683
    %v6986 = vpop.f32.mrf.mxu0
    %v6987 = vadd.f32 %v6974, %v6986
    %v6988 = vpop.f32.mrf.mxu0
    %6989 = vdwg.mxu0
    %6990 = vmatpush.bf16.msra.mxu0 %v6372
    %6991 = vmatpush.bf16.msra.mxu0 %v6366
    %6992 = vmatpush.bf16.msra.mxu0 %v6360
    %6993 = vmatpush.bf16.msra.mxu0 %v6354
    %6994 = vmatpush.bf16.msra.mxu0 %v6348
    %6995 = vmatpush.bf16.msra.mxu0 %v6342
    %6996 = vmatpush.bf16.msra.mxu0 %v6336
    %6997 = vmatpush.bf16.msra.mxu0 %v6330
    %6998 = vmatmul.bf16.gmra.mxu0 %v684
    %v6999 = vpop.f32.mrf.mxu0
    %v7000 = vadd.f32 %v6987, %v6999
    %v7001 = vpop.f32.mrf.mxu0
    %7002 = vdwg.mxu0
    %7003 = vmatpush.bf16.msra.mxu0 %v6420
    %7004 = vmatpush.bf16.msra.mxu0 %v6414
    %7005 = vmatpush.bf16.msra.mxu0 %v6408
    %7006 = vmatpush.bf16.msra.mxu0 %v6402
    %7007 = vmatpush.bf16.msra.mxu0 %v6396
    %7008 = vmatpush.bf16.msra.mxu0 %v6390
    %7009 = vmatpush.bf16.msra.mxu0 %v6384
    %7010 = vmatpush.bf16.msra.mxu0 %v6378
    %7011 = vmatmul.bf16.gmra.mxu0 %v685
    %v7012 = vpop.f32.mrf.mxu0
    %v7013 = vadd.f32 %v7000, %v7012
    %v7014 = vpop.f32.mrf.mxu0
    %7015 = vdwg.mxu0
    %7016 = vmatpush.bf16.msra.mxu0 %v6468
    %7017 = vmatpush.bf16.msra.mxu0 %v6462
    %7018 = vmatpush.bf16.msra.mxu0 %v6456
    %7019 = vmatpush.bf16.msra.mxu0 %v6450
    %7020 = vmatpush.bf16.msra.mxu0 %v6444
    %7021 = vmatpush.bf16.msra.mxu0 %v6438
    %7022 = vmatpush.bf16.msra.mxu0 %v6432
    %7023 = vmatpush.bf16.msra.mxu0 %v6426
    %7024 = vmatmul.bf16.gmra.mxu0 %v686
    %v7025 = vpop.f32.mrf.mxu0
    %v7026 = vadd.f32 %v7013, %v7025
    %v7027 = vpop.f32.mrf.mxu0
    %7028 = vdwg.mxu0
    %7029 = vmatpush.bf16.msra.mxu0 %v6516
    %7030 = vmatpush.bf16.msra.mxu0 %v6510
    %7031 = vmatpush.bf16.msra.mxu0 %v6504
    %7032 = vmatpush.bf16.msra.mxu0 %v6498
    %7033 = vmatpush.bf16.msra.mxu0 %v6492
    %7034 = vmatpush.bf16.msra.mxu0 %v6486
    %7035 = vmatpush.bf16.msra.mxu0 %v6480
    %7036 = vmatpush.bf16.msra.mxu0 %v6474
    %7037 = vmatmul.bf16.gmra.mxu0 %v687
    %v7038 = vpop.f32.mrf.mxu0
    %v7039 = vadd.f32 %v7026, %v7038
    %v7040 = vpop.f32.mrf.mxu0
    %7041 = vdwg.mxu0
    %7042 = vmatpush.bf16.msra.mxu0 %v6277
    %7043 = vmatpush.bf16.msra.mxu0 %v6271
    %7044 = vmatpush.bf16.msra.mxu0 %v6265
    %7045 = vmatpush.bf16.msra.mxu0 %v6259
    %7046 = vmatpush.bf16.msra.mxu0 %v6253
    %7047 = vmatpush.bf16.msra.mxu0 %v6247
    %7048 = vmatpush.bf16.msra.mxu0 %v6241
    %7049 = vmatpush.bf16.msra.mxu0 %v6235
    %7050 = vmatmul.bf16.gmra.mxu0 %v682
    %v7051 = vpop.f32.mrf.mxu0
    %v7052 = vadd.f32 0.0, %v7051
    %v7053 = vpop.f32.mrf.mxu0
    %7054 = vdwg.mxu0
    %7055 = vmatpush.bf16.msra.mxu0 %v6325
    %7056 = vmatpush.bf16.msra.mxu0 %v6319
    %7057 = vmatpush.bf16.msra.mxu0 %v6313
    %7058 = vmatpush.bf16.msra.mxu0 %v6307
    %7059 = vmatpush.bf16.msra.mxu0 %v6301
    %7060 = vmatpush.bf16.msra.mxu0 %v6295
    %7061 = vmatpush.bf16.msra.mxu0 %v6289
    %7062 = vmatpush.bf16.msra.mxu0 %v6283
    %7063 = vmatmul.bf16.gmra.mxu0 %v683
    %v7064 = vpop.f32.mrf.mxu0
    %v7065 = vadd.f32 %v7052, %v7064
    %v7066 = vpop.f32.mrf.mxu0
    %7067 = vdwg.mxu0
    %7068 = vmatpush.bf16.msra.mxu0 %v6373
    %7069 = vmatpush.bf16.msra.mxu0 %v6367
    %7070 = vmatpush.bf16.msra.mxu0 %v6361
    %7071 = vmatpush.bf16.msra.mxu0 %v6355
    %7072 = vmatpush.bf16.msra.mxu0 %v6349
    %7073 = vmatpush.bf16.msra.mxu0 %v6343
    %7074 = vmatpush.bf16.msra.mxu0 %v6337
    %7075 = vmatpush.bf16.msra.mxu0 %v6331
    %7076 = vmatmul.bf16.gmra.mxu0 %v684
    %v7077 = vpop.f32.mrf.mxu0
    %v7078 = vadd.f32 %v7065, %v7077
    %v7079 = vpop.f32.mrf.mxu0
    %7080 = vdwg.mxu0
    %7081 = vmatpush.bf16.msra.mxu0 %v6421
    %7082 = vmatpush.bf16.msra.mxu0 %v6415
    %7083 = vmatpush.bf16.msra.mxu0 %v6409
    %7084 = vmatpush.bf16.msra.mxu0 %v6403
    %7085 = vmatpush.bf16.msra.mxu0 %v6397
    %7086 = vmatpush.bf16.msra.mxu0 %v6391
    %7087 = vmatpush.bf16.msra.mxu0 %v6385
    %7088 = vmatpush.bf16.msra.mxu0 %v6379
    %7089 = vmatmul.bf16.gmra.mxu0 %v685
    %v7090 = vpop.f32.mrf.mxu0
    %v7091 = vadd.f32 %v7078, %v7090
    %v7092 = vpop.f32.mrf.mxu0
    %7093 = vdwg.mxu0
    %7094 = vmatpush.bf16.msra.mxu0 %v6469
    %7095 = vmatpush.bf16.msra.mxu0 %v6463
    %7096 = vmatpush.bf16.msra.mxu0 %v6457
    %7097 = vmatpush.bf16.msra.mxu0 %v6451
    %7098 = vmatpush.bf16.msra.mxu0 %v6445
    %7099 = vmatpush.bf16.msra.mxu0 %v6439
    %7100 = vmatpush.bf16.msra.mxu0 %v6433
    %7101 = vmatpush.bf16.msra.mxu0 %v6427
    %7102 = vmatmul.bf16.gmra.mxu0 %v686
    %v7103 = vpop.f32.mrf.mxu0
    %v7104 = vadd.f32 %v7091, %v7103
    %v7105 = vpop.f32.mrf.mxu0
    %7106 = vdwg.mxu0
    %7107 = vmatpush.bf16.msra.mxu0 %v6517
    %7108 = vmatpush.bf16.msra.mxu0 %v6511
    %7109 = vmatpush.bf16.msra.mxu0 %v6505
    %7110 = vmatpush.bf16.msra.mxu0 %v6499
    %7111 = vmatpush.bf16.msra.mxu0 %v6493
    %7112 = vmatpush.bf16.msra.mxu0 %v6487
    %7113 = vmatpush.bf16.msra.mxu0 %v6481
    %7114 = vmatpush.bf16.msra.mxu0 %v6475
    %7115 = vmatmul.bf16.gmra.mxu0 %v687
    %v7116 = vpop.f32.mrf.mxu0
    %v7117 = vadd.f32 %v7104, %v7116
    %v7118 = vpop.f32.mrf.mxu0
    %7119 = vdwg.mxu0
    %7120 = vmatpush.bf16.msra.mxu0 %v6278
    %7121 = vmatpush.bf16.msra.mxu0 %v6272
    %7122 = vmatpush.bf16.msra.mxu0 %v6266
    %7123 = vmatpush.bf16.msra.mxu0 %v6260
    %7124 = vmatpush.bf16.msra.mxu0 %v6254
    %7125 = vmatpush.bf16.msra.mxu0 %v6248
    %7126 = vmatpush.bf16.msra.mxu0 %v6242
    %7127 = vmatpush.bf16.msra.mxu0 %v6236
    %7128 = vmatmul.bf16.gmra.mxu0 %v682
    %v7129 = vpop.f32.mrf.mxu0
    %v7130 = vadd.f32 0.0, %v7129
    %v7131 = vpop.f32.mrf.mxu0
    %7132 = vdwg.mxu0
    %7133 = vmatpush.bf16.msra.mxu0 %v6326
    %7134 = vmatpush.bf16.msra.mxu0 %v6320
    %7135 = vmatpush.bf16.msra.mxu0 %v6314
    %7136 = vmatpush.bf16.msra.mxu0 %v6308
    %7137 = vmatpush.bf16.msra.mxu0 %v6302
    %7138 = vmatpush.bf16.msra.mxu0 %v6296
    %7139 = vmatpush.bf16.msra.mxu0 %v6290
    %7140 = vmatpush.bf16.msra.mxu0 %v6284
    %7141 = vmatmul.bf16.gmra.mxu0 %v683
    %v7142 = vpop.f32.mrf.mxu0
    %v7143 = vadd.f32 %v7130, %v7142
    %v7144 = vpop.f32.mrf.mxu0
    %7145 = vdwg.mxu0
    %7146 = vmatpush.bf16.msra.mxu0 %v6374
    %7147 = vmatpush.bf16.msra.mxu0 %v6368
    %7148 = vmatpush.bf16.msra.mxu0 %v6362
    %7149 = vmatpush.bf16.msra.mxu0 %v6356
    %7150 = vmatpush.bf16.msra.mxu0 %v6350
    %7151 = vmatpush.bf16.msra.mxu0 %v6344
    %7152 = vmatpush.bf16.msra.mxu0 %v6338
    %7153 = vmatpush.bf16.msra.mxu0 %v6332
    %7154 = vmatmul.bf16.gmra.mxu0 %v684
    %v7155 = vpop.f32.mrf.mxu0
    %v7156 = vadd.f32 %v7143, %v7155
    %v7157 = vpop.f32.mrf.mxu0
    %7158 = vdwg.mxu0
    %7159 = vmatpush.bf16.msra.mxu0 %v6422
    %7160 = vmatpush.bf16.msra.mxu0 %v6416
    %7161 = vmatpush.bf16.msra.mxu0 %v6410
    %7162 = vmatpush.bf16.msra.mxu0 %v6404
    %7163 = vmatpush.bf16.msra.mxu0 %v6398
    %7164 = vmatpush.bf16.msra.mxu0 %v6392
    %7165 = vmatpush.bf16.msra.mxu0 %v6386
    %7166 = vmatpush.bf16.msra.mxu0 %v6380
    %7167 = vmatmul.bf16.gmra.mxu0 %v685
    %v7168 = vpop.f32.mrf.mxu0
    %v7169 = vadd.f32 %v7156, %v7168
    %v7170 = vpop.f32.mrf.mxu0
    %7171 = vdwg.mxu0
    %7172 = vmatpush.bf16.msra.mxu0 %v6470
    %7173 = vmatpush.bf16.msra.mxu0 %v6464
    %7174 = vmatpush.bf16.msra.mxu0 %v6458
    %7175 = vmatpush.bf16.msra.mxu0 %v6452
    %7176 = vmatpush.bf16.msra.mxu0 %v6446
    %7177 = vmatpush.bf16.msra.mxu0 %v6440
    %7178 = vmatpush.bf16.msra.mxu0 %v6434
    %7179 = vmatpush.bf16.msra.mxu0 %v6428
    %7180 = vmatmul.bf16.gmra.mxu0 %v686
    %v7181 = vpop.f32.mrf.mxu0
    %v7182 = vadd.f32 %v7169, %v7181
    %v7183 = vpop.f32.mrf.mxu0
    %7184 = vdwg.mxu0
    %7185 = vmatpush.bf16.msra.mxu0 %v6518
    %7186 = vmatpush.bf16.msra.mxu0 %v6512
    %7187 = vmatpush.bf16.msra.mxu0 %v6506
    %7188 = vmatpush.bf16.msra.mxu0 %v6500
    %7189 = vmatpush.bf16.msra.mxu0 %v6494
    %7190 = vmatpush.bf16.msra.mxu0 %v6488
    %7191 = vmatpush.bf16.msra.mxu0 %v6482
    %7192 = vmatpush.bf16.msra.mxu0 %v6476
    %7193 = vmatmul.bf16.gmra.mxu0 %v687
    %v7194 = vpop.f32.mrf.mxu0
    %v7195 = vadd.f32 %v7182, %v7194
    %v7196 = vpop.f32.mrf.mxu0
    %7197 = vdwg.mxu0
    %7198 = vmatpush.bf16.msra.mxu0 %v6279
    %7199 = vmatpush.bf16.msra.mxu0 %v6273
    %7200 = vmatpush.bf16.msra.mxu0 %v6267
    %7201 = vmatpush.bf16.msra.mxu0 %v6261
    %7202 = vmatpush.bf16.msra.mxu0 %v6255
    %7203 = vmatpush.bf16.msra.mxu0 %v6249
    %7204 = vmatpush.bf16.msra.mxu0 %v6243
    %7205 = vmatpush.bf16.msra.mxu0 %v6237
    %7206 = vmatmul.bf16.gmra.mxu0 %v682
    %v7207 = vpop.f32.mrf.mxu0
    %v7208 = vadd.f32 0.0, %v7207
    %v7209 = vpop.f32.mrf.mxu0
    %7210 = vdwg.mxu0
    %7211 = vmatpush.bf16.msra.mxu0 %v6327
    %7212 = vmatpush.bf16.msra.mxu0 %v6321
    %7213 = vmatpush.bf16.msra.mxu0 %v6315
    %7214 = vmatpush.bf16.msra.mxu0 %v6309
    %7215 = vmatpush.bf16.msra.mxu0 %v6303
    %7216 = vmatpush.bf16.msra.mxu0 %v6297
    %7217 = vmatpush.bf16.msra.mxu0 %v6291
    %7218 = vmatpush.bf16.msra.mxu0 %v6285
    %7219 = vmatmul.bf16.gmra.mxu0 %v683
    %v7220 = vpop.f32.mrf.mxu0
    %v7221 = vadd.f32 %v7208, %v7220
    %v7222 = vpop.f32.mrf.mxu0
    %7223 = vdwg.mxu0
    %7224 = vmatpush.bf16.msra.mxu0 %v6375
    %7225 = vmatpush.bf16.msra.mxu0 %v6369
    %7226 = vmatpush.bf16.msra.mxu0 %v6363
    %7227 = vmatpush.bf16.msra.mxu0 %v6357
    %7228 = vmatpush.bf16.msra.mxu0 %v6351
    %7229 = vmatpush.bf16.msra.mxu0 %v6345
    %7230 = vmatpush.bf16.msra.mxu0 %v6339
    %7231 = vmatpush.bf16.msra.mxu0 %v6333
    %7232 = vmatmul.bf16.gmra.mxu0 %v684
    %v7233 = vpop.f32.mrf.mxu0
    %v7234 = vadd.f32 %v7221, %v7233
    %v7235 = vpop.f32.mrf.mxu0
    %7236 = vdwg.mxu0
    %7237 = vmatpush.bf16.msra.mxu0 %v6423
    %7238 = vmatpush.bf16.msra.mxu0 %v6417
    %7239 = vmatpush.bf16.msra.mxu0 %v6411
    %7240 = vmatpush.bf16.msra.mxu0 %v6405
    %7241 = vmatpush.bf16.msra.mxu0 %v6399
    %7242 = vmatpush.bf16.msra.mxu0 %v6393
    %7243 = vmatpush.bf16.msra.mxu0 %v6387
    %7244 = vmatpush.bf16.msra.mxu0 %v6381
    %7245 = vmatmul.bf16.gmra.mxu0 %v685
    %v7246 = vpop.f32.mrf.mxu0
    %v7247 = vadd.f32 %v7234, %v7246
    %v7248 = vpop.f32.mrf.mxu0
    %7249 = vdwg.mxu0
    %7250 = vmatpush.bf16.msra.mxu0 %v6471
    %7251 = vmatpush.bf16.msra.mxu0 %v6465
    %7252 = vmatpush.bf16.msra.mxu0 %v6459
    %7253 = vmatpush.bf16.msra.mxu0 %v6453
    %7254 = vmatpush.bf16.msra.mxu0 %v6447
    %7255 = vmatpush.bf16.msra.mxu0 %v6441
    %7256 = vmatpush.bf16.msra.mxu0 %v6435
    %7257 = vmatpush.bf16.msra.mxu0 %v6429
    %7258 = vmatmul.bf16.gmra.mxu0 %v686
    %v7259 = vpop.f32.mrf.mxu0
    %v7260 = vadd.f32 %v7247, %v7259
    %v7261 = vpop.f32.mrf.mxu0
    %7262 = vdwg.mxu0
    %7263 = vmatpush.bf16.msra.mxu0 %v6519
    %7264 = vmatpush.bf16.msra.mxu0 %v6513
    %7265 = vmatpush.bf16.msra.mxu0 %v6507
    %7266 = vmatpush.bf16.msra.mxu0 %v6501
    %7267 = vmatpush.bf16.msra.mxu0 %v6495
    %7268 = vmatpush.bf16.msra.mxu0 %v6489
    %7269 = vmatpush.bf16.msra.mxu0 %v6483
    %7270 = vmatpush.bf16.msra.mxu0 %v6477
    %7271 = vmatmul.bf16.gmra.mxu0 %v687
    %v7272 = vpop.f32.mrf.mxu0
    %v7273 = vadd.f32 %v7260, %v7272
    %v7274 = vpop.f32.mrf.mxu0
    %7275 = vdwg.mxu0
    %v7276 = vadd.f32 %v4687, %v6883
    %v7277 = vadd.f32 %v4765, %v6961
    %v7278 = vadd.f32 %v4843, %v7039
    %v7279 = vadd.f32 %v4921, %v7117
    %v7280 = vadd.f32 %v4999, %v7195
    %v7281 = vadd.f32 %v5077, %v7273
    %v7282 = vld [vmem:[%s5] sm:$0x3f]
    %v7284 = vperm.slane %v7282, 0
    %v7285 = vperm.slane %v7282, 1
    %v7286 = vperm.slane %v7282, 2
    %v7287 = vperm.slane %v7282, 3
    %v7288 = vperm.slane %v7282, 4
    %v7289 = vperm.slane %v7282, 5
    %v7296 = vadd.f32 %v7276, %v7284
    %v7297 = vadd.f32 %v7277, %v7285
    %v7298 = vadd.f32 %v7278, %v7286
    %v7299 = vadd.f32 %v7279, %v7287
    %v7300 = vadd.f32 %v7280, %v7288
    %v7301 = vadd.f32 %v7281, %v7289
    %v7302 = vmax.f32 %v7296, 0.0
    %v7303 = vmax.f32 %v7297, 0.0
    %v7304 = vmax.f32 %v7298, 0.0
    %v7305 = vmax.f32 %v7299, 0.0
    %v7306 = vmax.f32 %v7300, 0.0
    %v7307 = vmax.f32 %v7301, 0.0
    %v7308 = vld [vmem:[%s6] sm:$0x3f]
    %v7310 = vperm.slane %v7308, 0
    %v7311 = vperm.slane %v7308, 1
    %v7312 = vperm.slane %v7308, 2
    %v7313 = vperm.slane %v7308, 3
    %v7314 = vperm.slane %v7308, 4
    %v7315 = vperm.slane %v7308, 5
    %v7322 = vmul.f32 %v7302, %v7310
    %v7323 = vmul.f32 %v7303, %v7311
    %v7324 = vmul.f32 %v7304, %v7312
    %v7325 = vmul.f32 %v7305, %v7313
    %v7326 = vmul.f32 %v7306, %v7314
    %v7327 = vmul.f32 %v7307, %v7315
    %v7328 = vadd.f32 %v7322, %v7323
    %v7329 = vadd.f32 %v7328, %v7324
    %v7330 = vadd.f32 %v7329, %v7325
    %v7331 = vadd.f32 %v7330, %v7326
    %v7332 = vadd.f32 %v7331, %v7327
    %7333 = vadd.xlane.f32.xlu0 %v7332
    %v7334 = vpop.xlane.xlu0 %7333
    %v7335 = vld [vmem:[#allocation3] sm:$0x1]
    %s7336 = vtos %v7335
    %v7337 = vstv %s7336
    %v7338 = vadd.f32 %v7334, %v7337
    %vm7339 = vcmask 7168
    %7340 = vst.msk [vmem:[%s8] sm:$0xff] %vm7339, %v7338
  $region41: #{coherence_scores.1} parent=0 // pred_fallthru
    _
  // Predicated region
  $region42: #{coherence_scores.1} parent=0 // pred_check
    _
  $region43: #{coherence_scores.1} parent=0 // pred_check_branch
    %7342 = sbr.rel (0) target = $region45
  $region44: #{coherence_scores.1} parent=0 // pred_region
    _
  $region45: #{coherence_scores.1} parent=0 // pred_fallthru
    _
  // Predicated region
  $region46: #{coherence_scores.1} parent=0 // pred_check
    _
  $region47: #{coherence_scores.1} parent=0 // pred_check_branch
    %7344 = sbr.rel (0) target = $region49
  $region48: #{coherence_scores.1} parent=0 // pred_region
    _
  $region49: #{coherence_scores.1} parent=0 // pred_fallthru
    _

</llo_original>
